<compile_context>
chip_gen: v7x
topology: tpu7x:2x2x1
jax: 0.10.0
libtpu: 0.0.40
codegen_flags: <defaults>
</compile_context>

<pallas_src>
import functools

import jax
import jax.numpy as jnp
from jax.experimental import pallas as pl
from jax.experimental.pallas import tpu as pltpu

LANE = 128


def _round_up(x, m):
    return ((x + m - 1) // m) * m


def _vmem_capacity_bytes():
    try:
        info = pltpu.get_tpu_info()
        cap = getattr(info, "vmem_capacity_bytes", None)
        if cap:
            return int(cap)
    except Exception:
        pass
    return 64 * 1024 * 1024  # conservative fallback (v7x per-TC VMEM)


# ----------------------------------------------------------------------------
# Phase 1: one wide projection matmul -> feat, (skip), s_src, s_tgt.
# ----------------------------------------------------------------------------
def _proj_kernel(x_ref, w_ref, *out_refs, hf, num_heads, has_skip, mxu_dtype):
    # Single wide MXU matmul: x @ [W_all | W_skip | A_fold]  (scores folded in).
    p = jnp.dot(x_ref[...].astype(mxu_dtype), w_ref[...],
                preferred_element_type=jnp.float32)            # (TQ, C) f32
    if has_skip:
        feat_ref, skip_ref, ssrc_ref, stgt_ref = out_refs
        skip_ref[...] = p[:, hf:2 * hf]
        sbase = 2 * hf
    else:
        feat_ref, ssrc_ref, stgt_ref = out_refs
        sbase = hf
    feat_ref[...] = p[:, :hf].astype(feat_ref.dtype)           # bf16 handoff slab
    ssrc_ref[...] = p[:, sbase:sbase + num_heads]
    stgt_ref[...] = p[:, sbase + num_heads:sbase + 2 * num_heads]


# ----------------------------------------------------------------------------
# Phase 2: row-tiled masked softmax attention + aggregation + skip/bias/ELU.
# ----------------------------------------------------------------------------
def _attn_kernel(s_src_ref, s_tgt_ref, adj_ref, feat_ref, skip_ref, bias_ref,
                 out_ref, *, num_heads, f_out, skip_is_per_head, mxu_dtype,
                 negative_slope=0.2):
    s_src = s_src_ref[...]                               # (TQ, H)     f32
    s_tgt = s_tgt_ref[...]                               # (H, Npad)   f32, row layout
    edge = adj_ref[...] != 0                             # (TQ, Npad)  from int8

    for h in range(num_heads):                           # tiny head loop, unrolled
        sc = s_src[:, h:h + 1] + s_tgt[h:h + 1, :]                    # (TQ, Npad)
        sc = jnp.where(sc >= 0.0, sc, negative_slope * sc)            # LeakyReLU(0.2)
        logits = jnp.where(edge, sc, jnp.float32(-1e9))               # int8 mask direct
        m = jnp.max(logits, axis=-1, keepdims=True)
        e = jnp.exp(logits - m)                                       # unnormalized
        denom = jnp.sum(e, axis=-1, keepdims=True)                    # (TQ, 1)
        # Aggregate first, normalize after (exact divide on the small result).
        agg = jnp.dot(e.astype(mxu_dtype),
                      feat_ref[:, h * f_out:(h + 1) * f_out],
                      preferred_element_type=jnp.float32)             # (TQ, F_out)
        agg = agg / denom
        if skip_is_per_head:
            agg = agg + skip_ref[...]                                  # identity skip
        else:
            agg = agg + skip_ref[:, h * f_out:(h + 1) * f_out]         # projected skip
        agg = agg + bias_ref[:, h * f_out:(h + 1) * f_out]
        # ELU(alpha=1); clamp the exp argument so the discarded branch stays finite.
        out_ref[:, h * f_out:(h + 1) * f_out] = jnp.where(
            agg > 0.0, agg, jnp.exp(jnp.minimum(agg, 0.0)) - 1.0)


# ----------------------------------------------------------------------------
# Wrapper
# ----------------------------------------------------------------------------
def gat_layer_forward(x, connectivity_mask, params, *, tile_q=512,
                      add_skip=True, mxu_dtype=jnp.bfloat16):
    proj = params["proj_param"]             # (H, F_in, F_out)
    a_src = params["scoring_fn_source"]     # (H, F_out, 1)  (torch layout)
    a_tgt = params["scoring_fn_target"]     # (H, F_out, 1)
    bias = params.get("bias")               # (H*F_out,) or None
    w_skip = params.get("skip_proj_weight")  # (H*F_out, F_in) torch nn.Linear layout

    H, F_in, F_out = proj.shape
    N = x.shape[0]
    HF = H * F_out
    identity_skip = add_skip and (F_out == F_in)
    proj_skip = add_skip and (not identity_skip) and (w_skip is not None)

    itemsize = jnp.dtype(mxu_dtype).itemsize
    vmem_cap = _vmem_capacity_bytes()
    budget = int(0.75 * vmem_cap)            # ~48 MiB on v7x, ~96 MiB on v5e/v6e
    vmem_hi = int(0.9 * vmem_cap)

    # ---- tile sizes / padding (everything kept 128-lane aligned) ----
    Npad = _round_up(N, LANE)
    tq = max(LANE, min(_round_up(tile_q, LANE), Npad))

    def phase2_vmem_bytes(tq_):
        # resident (assume double-buffered by the pipeline): feat (bf16), s_tgt, bias
        resident = 2 * Npad * HF * itemsize + 2 * H * Npad * 4 + 2 * 4 * HF
        if identity_skip:
            tiled_skip = tq_ * F_out * 4
        elif proj_skip:
            tiled_skip = tq_ * HF * 4
        else:
            tiled_skip = 0
        tiled = 2 * (tq_ * H * 4 + tq_ * Npad * 1 + tq_ * HF * 4 + tiled_skip)
        temps = 4 * tq_ * Npad * 4           # sc / logits / e / edge live tiles
        return resident + tiled + temps + (2 << 20)

    while tq > LANE and phase2_vmem_bytes(tq) > budget:
        tq = max(LANE, ((tq // 2) // LANE) * LANE)
    Npad = _round_up(Npad, tq)
    n_tiles = Npad // tq

    # ---- parameter folding (done once at trace time, f32/highest) ----
    hi = jax.lax.Precision.HIGHEST
    w_all = jnp.transpose(proj, (1, 0, 2)).reshape(F_in, HF)          # (F_in, HF)
    a_fold = jnp.concatenate(
        [jnp.einsum("hio,ho->ih", proj, a_src[:, :, 0], precision=hi),
         jnp.einsum("hio,ho->ih", proj, a_tgt[:, :, 0], precision=hi)],
        axis=1)                                                       # (F_in, 2H)
    pieces = [w_all]
    if proj_skip:
        pieces.append(w_skip.T)                                       # (F_in, HF)
    pieces.append(a_fold)
    w_comb = jnp.concatenate(pieces, axis=1).astype(mxu_dtype)        # (F_in, C)
    C = w_comb.shape[1]

    bias_row = (bias if bias is not None
                else jnp.zeros((HF,), jnp.float32)).astype(jnp.float32).reshape(1, HF)

    # ---- pad activations / binarized int8 adjacency ----
    x_pad = jnp.pad(x.astype(jnp.float32), ((0, Npad - N), (0, 0)))
    adj_i8 = (connectivity_mask > -1e8).astype(jnp.int8)
    adj_pad = jnp.pad(adj_i8, ((0, Npad - N), (0, Npad - N)))         # pad = non-edge

    # ---- Phase 1: projection (+skip) + folded attention scores ----
    est1 = (2 * (tq * F_in * 4 + tq * HF * itemsize
                 + (tq * HF * 4 if proj_skip else 0) + 2 * tq * H * 4)
            + 2 * F_in * C * itemsize + tq * C * 4 + (2 << 20))
    vmem1 = int(min(vmem_hi, max(2 * est1, 32 << 20)))

    p1_out_shape = [jax.ShapeDtypeStruct((Npad, HF), mxu_dtype)]
    p1_out_specs = [pl.BlockSpec((tq, HF), lambda i: (i, 0))]
    if proj_skip:
        p1_out_shape.append(jax.ShapeDtypeStruct((Npad, HF), jnp.float32))
        p1_out_specs.append(pl.BlockSpec((tq, HF), lambda i: (i, 0)))
    p1_out_shape += [jax.ShapeDtypeStruct((Npad, H), jnp.float32),
                     jax.ShapeDtypeStruct((Npad, H), jnp.float32)]
    p1_out_specs += [pl.BlockSpec((tq, H), lambda i: (i, 0)),
                     pl.BlockSpec((tq, H), lambda i: (i, 0))]

    p1_results = pl.pallas_call(
        functools.partial(_proj_kernel, hf=HF, num_heads=H,
                          has_skip=proj_skip, mxu_dtype=mxu_dtype),
        out_shape=tuple(p1_out_shape),
        grid_spec=pltpu.PrefetchScalarGridSpec(
            num_scalar_prefetch=0,
            grid=(n_tiles,),
            in_specs=[
                pl.BlockSpec((tq, F_in), lambda i: (i, 0)),   # x row tile
                pl.BlockSpec((F_in, C), lambda i: (0, 0)),    # [W_all|W_skip|A_fold]
            ],
            out_specs=p1_out_specs,
        ),
        compiler_params=pltpu.CompilerParams(
            dimension_semantics=("parallel",),
            vmem_limit_bytes=vmem1,
        ),
        cost_estimate=pl.CostEstimate(
            flops=int(2 * Npad * F_in * C),
            transcendentals=0,
            bytes_accessed=int(4 * Npad * F_in + itemsize * F_in * C
                               + Npad * (HF * itemsize
                                         + (HF * 4 if proj_skip else 0) + 8 * H)),
        ),
    )(x_pad, w_comb)

    if proj_skip:
        feat, skip_full, s_src, s_tgt = p1_results
    else:
        feat, s_src, s_tgt = p1_results
        skip_full = None
    s_tgt_t = s_tgt.T                                   # (H, Npad) — tiny layout copy

    # ---- Phase 2 skip operand ----
    if identity_skip:
        skip_arr = x_pad                                # (Npad, F_out), added per head
        skip_spec = pl.BlockSpec((tq, F_out), lambda i: (i, 0))
        skip_per_head = True
    elif proj_skip:
        skip_arr = skip_full                            # (Npad, HF) projected skip
        skip_spec = pl.BlockSpec((tq, HF), lambda i: (i, 0))
        skip_per_head = False
    else:
        skip_arr = jnp.zeros((1, HF), jnp.float32)      # no skip connection
        skip_spec = pl.BlockSpec((1, HF), lambda i: (0, 0))
        skip_per_head = False

    est2 = phase2_vmem_bytes(tq)
    vmem2 = int(min(vmem_hi, max(int(1.5 * est2), 32 << 20)))

    # NOTE: on v7x the resident feat/s_tgt/bias blocks could additionally be pinned
    # to a single buffer with pipeline_mode=pl.Buffered(1); left at defaults here.
    out_pad = pl.pallas_call(
        functools.partial(_attn_kernel, num_heads=H, f_out=F_out,
                          skip_is_per_head=skip_per_head, mxu_dtype=mxu_dtype),
        out_shape=jax.ShapeDtypeStruct((Npad, HF), jnp.float32),
        grid_spec=pltpu.PrefetchScalarGridSpec(
            num_scalar_prefetch=0,
            grid=(n_tiles,),
            in_specs=[
                pl.BlockSpec((tq, H), lambda i: (i, 0)),      # s_src query tile
                pl.BlockSpec((H, Npad), lambda i: (0, 0)),    # s_tgt (all keys)
                pl.BlockSpec((tq, Npad), lambda i: (i, 0)),   # int8 adjacency tile
                pl.BlockSpec((Npad, HF), lambda i: (0, 0)),   # feat (all keys, bf16)
                skip_spec,                                    # skip operand
                pl.BlockSpec((1, HF), lambda i: (0, 0)),      # bias row
            ],
            out_specs=pl.BlockSpec((tq, HF), lambda i: (i, 0)),  # lane-dense output
        ),
        compiler_params=pltpu.CompilerParams(
            dimension_semantics=("parallel",),
            vmem_limit_bytes=vmem2,
        ),
        cost_estimate=pl.CostEstimate(
            flops=int(2 * H * Npad * Npad * F_out + 8 * H * Npad * Npad),
            transcendentals=int(H * Npad * Npad),
            bytes_accessed=int(Npad * Npad + Npad * HF * (itemsize + 8)
                               + 12 * Npad * H + 8 * HF),
        ),
    )(s_src, s_tgt_t, adj_pad, feat, skip_arr, bias_row)

    return out_pad[:N], connectivity_mask


# ----------------------------------------------------------------------------
# Pure-JAX reference of the PyTorch forward (eval mode, high-precision matmuls)
# ----------------------------------------------------------------------------
def gat_reference(x, connectivity_mask, params):
    proj = params["proj_param"]
    a_src = params["scoring_fn_source"]
    a_tgt = params["scoring_fn_target"]
    w_skip = params.get("skip_proj_weight")
    bias = params["bias"]
    H, F_in, F_out = proj.shape
    N = x.shape[0]
    hi = jax.lax.Precision.HIGHEST

    feat = jnp.einsum("nf,hfo->hno", x, proj, precision=hi)          # (H, N, F_out)
    s_src = jnp.einsum("hno,hol->hnl", feat, a_src, precision=hi)    # (H, N, 1)
    s_tgt = jnp.einsum("hno,hol->hnl", feat, a_tgt, precision=hi)    # (H, N, 1)
    scores = s_src + jnp.transpose(s_tgt, (0, 2, 1))                 # (H, N, N)
    scores = jnp.where(scores >= 0, scores, 0.2 * scores)
    attn = jax.nn.softmax(scores + connectivity_mask[None], axis=-1)
    out = jnp.einsum("hij,hjo->hio", attn, feat, precision=hi)       # (H, N, F_out)
    out = jnp.transpose(out, (1, 0, 2))                              # (N, H, F_out)
    if F_out == F_in:
        out = out + x[:, None, :]
    else:
        out = out + jnp.einsum("nf,kf->nk", x, w_skip,
                               precision=hi).reshape(N, H, F_out)
    out = out.reshape(N, H * F_out) + bias
    return jnp.where(out > 0, out, jnp.exp(out) - 1.0), connectivity_mask


if __name__ == "__main__":
    key = jax.random.PRNGKey(0)

    def xavier(k, shape, fan_in, fan_out):
        limit = (6.0 / (fan_in + fan_out)) ** 0.5
        return jax.random.uniform(k, shape, jnp.float32, -limit, limit)

    def make_case(k, N, F_in, F_out, H, with_skip_proj):
        ks = jax.random.split(k, 7)
        x = jax.random.normal(ks[0], (N, F_in), dtype=jnp.float32)
        adj = jax.random.bernoulli(ks[1], 0.35, (N, N)) | jnp.eye(N, dtype=bool)
        mask = jnp.where(adj, 0.0, -1e9).astype(jnp.float32)
        params = {
            "proj_param": xavier(ks[2], (H, F_in, F_out), F_in, F_out),
            "scoring_fn_source": xavier(ks[3], (H, F_out, 1), F_out, 1),
            "scoring_fn_target": xavier(ks[4], (H, F_out, 1), F_out, 1),
            "bias": 0.1 * jax.random.normal(ks[5], (H * F_out,), dtype=jnp.float32),
        }
        if with_skip_proj:
            params["skip_proj_weight"] = xavier(ks[6], (H * F_out, F_in),
                                                F_in, H * F_out)
        return x, mask, params

    # bf16 MXU inputs (per the performance review) -> looser tolerance.
    # mxu_dtype=jnp.float32 reproduces the reference to ~1e-5.
    TOL = 5e-2
    fwd = jax.jit(gat_layer_forward)
    k1, k2 = jax.random.split(key)

    # Case 1: projected skip connection (F_out != F_in), 4 heads.
    x, mask, params = make_case(k1, N=64, F_in=16, F_out=8, H=4, with_skip_proj=True)
    out, _ = fwd(x, mask, params)
    out = jax.block_until_ready(out)
    ref, _ = gat_reference(x, mask, params)
    assert out.shape == (64, 32)
    err1 = float(jnp.max(jnp.abs(out - ref)))
    assert jnp.allclose(out, ref, atol=TOL, rtol=TOL), f"case1 mismatch: {err1}"

    # Case 2: identity skip (F_out == F_in), 3 heads, N not a multiple of the pad unit.
    x2, mask2, params2 = make_case(k2, N=40, F_in=8, F_out=8, H=3, with_skip_proj=False)
    out2, _ = fwd(x2, mask2, params2)
    out2 = jax.block_until_ready(out2)
    ref2, _ = gat_reference(x2, mask2, params2)
    assert out2.shape == (40, 24)
    err2 = float(jnp.max(jnp.abs(out2 - ref2)))
    assert jnp.allclose(out2, ref2, atol=TOL, rtol=TOL), f"case2 mismatch: {err2}"

    print("KERNEL_OK")
</pallas_src>

<mosaic_0001>
module attributes {stable_mosaic.version = 11 : i64} {
  func.func @_proj_kernel(%arg0: i32, %arg1: memref<128x16xf32, #tpu.memory_space<vmem>>, %arg2: memref<16x72xbf16, #tpu.memory_space<vmem>>, %arg3: memref<128x32xbf16, #tpu.memory_space<vmem>>, %arg4: memref<128x32xf32, #tpu.memory_space<vmem>>, %arg5: memref<128x4xf32, #tpu.memory_space<vmem>>, %arg6: memref<128x4xf32, #tpu.memory_space<vmem>>) attributes {dimension_semantics = [#tpu.dimension_semantics<parallel>], iteration_bounds = array<i64: 1>, scalar_prefetch = 0 : i64, scratch_operands = 0 : i64, tpu.core_type = #tpu.core_type<tc>, window_params = [{transform_indices = @transform_0, window_bounds = array<i64: 128, 16>}, {pipeline_mode = #tpu.pipeline_mode<synchronous>, transform_indices = @transform_1, window_bounds = array<i64: 16, 72>}, {transform_indices = @transform_2, window_bounds = array<i64: 128, 32>}, {transform_indices = @transform_3, window_bounds = array<i64: 128, 32>}, {transform_indices = @transform_4, window_bounds = array<i64: 128, 4>}, {transform_indices = @transform_5, window_bounds = array<i64: 128, 4>}]} {
    %c0 = arith.constant 0 : index
    %c0_0 = arith.constant 0 : index
    %0 = vector.load %arg1[%c0, %c0_0] : memref<128x16xf32, #tpu.memory_space<vmem>>, vector<128x16xf32>
    %1 = arith.truncf %0 : vector<128x16xf32> to vector<128x16xbf16>
    %c0_1 = arith.constant 0 : index
    %c0_2 = arith.constant 0 : index
    %2 = vector.load %arg2[%c0_1, %c0_2] : memref<16x72xbf16, #tpu.memory_space<vmem>>, vector<16x72xbf16>
    %cst = arith.constant dense<0.000000e+00> : vector<128x72xf32>
    %3 = tpu.matmul %1, %2, %cst {dimension_numbers = #tpu.dot_dimension_numbers<[1], [0], [0], [1], [0, 0, 1, 1], [], []>} : vector<128x16xbf16>, vector<16x72xbf16>, vector<128x72xf32> -> vector<128x72xf32>
    %4 = vector.extract_strided_slice %3 {offsets = [0, 32], sizes = [128, 32], strides = [1, 1]} : vector<128x72xf32> to vector<128x32xf32>
    %c0_3 = arith.constant 0 : index
    %c0_4 = arith.constant 0 : index
    %5 = vector.load %arg4[%c0_3, %c0_4] : memref<128x32xf32, #tpu.memory_space<vmem>>, vector<128x32xf32>
    tpu.vector_store %arg4[%c0_3, %c0_4], %4 {strides = array<i32>} : memref<128x32xf32, #tpu.memory_space<vmem>>, vector<128x32xf32>,
    %6 = vector.extract_strided_slice %3 {offsets = [0, 0], sizes = [128, 32], strides = [1, 1]} : vector<128x72xf32> to vector<128x32xf32>
    %7 = arith.truncf %6 : vector<128x32xf32> to vector<128x32xbf16>
    %c0_5 = arith.constant 0 : index
    %c0_6 = arith.constant 0 : index
    %8 = vector.load %arg3[%c0_5, %c0_6] : memref<128x32xbf16, #tpu.memory_space<vmem>>, vector<128x32xbf16>
    tpu.vector_store %arg3[%c0_5, %c0_6], %7 {strides = array<i32>} : memref<128x32xbf16, #tpu.memory_space<vmem>>, vector<128x32xbf16>,
    %9 = vector.extract_strided_slice %3 {offsets = [0, 64], sizes = [128, 4], strides = [1, 1]} : vector<128x72xf32> to vector<128x4xf32>
    %c0_7 = arith.constant 0 : index
    %c0_8 = arith.constant 0 : index
    %10 = vector.load %arg5[%c0_7, %c0_8] : memref<128x4xf32, #tpu.memory_space<vmem>>, vector<128x4xf32>
    tpu.vector_store %arg5[%c0_7, %c0_8], %9 {strides = array<i32>} : memref<128x4xf32, #tpu.memory_space<vmem>>, vector<128x4xf32>,
    %11 = vector.extract_strided_slice %3 {offsets = [0, 68], sizes = [128, 4], strides = [1, 1]} : vector<128x72xf32> to vector<128x4xf32>
    %c0_9 = arith.constant 0 : index
    %c0_10 = arith.constant 0 : index
    %12 = vector.load %arg6[%c0_9, %c0_10] : memref<128x4xf32, #tpu.memory_space<vmem>>, vector<128x4xf32>
    tpu.vector_store %arg6[%c0_9, %c0_10], %11 {strides = array<i32>} : memref<128x4xf32, #tpu.memory_space<vmem>>, vector<128x4xf32>,
    return
  }
  func.func @transform_0(%arg0: i32) -> (i32, i32) {
    %c0_i32 = arith.constant 0 : i32
    %c0_i32_0 = arith.constant 0 : i32
    return %arg0, %c0_i32 : i32, i32
  }
  func.func @transform_1(%arg0: i32) -> (i32, i32) {
    %c0_i32 = arith.constant 0 : i32
    %c0_i32_0 = arith.constant 0 : i32
    %c0_i32_1 = arith.constant 0 : i32
    return %c0_i32, %c0_i32_0 : i32, i32
  }
  func.func @transform_2(%arg0: i32) -> (i32, i32) {
    %c0_i32 = arith.constant 0 : i32
    %c0_i32_0 = arith.constant 0 : i32
    return %arg0, %c0_i32 : i32, i32
  }
  func.func @transform_3(%arg0: i32) -> (i32, i32) {
    %c0_i32 = arith.constant 0 : i32
    %c0_i32_0 = arith.constant 0 : i32
    return %arg0, %c0_i32 : i32, i32
  }
  func.func @transform_4(%arg0: i32) -> (i32, i32) {
    %c0_i32 = arith.constant 0 : i32
    %c0_i32_0 = arith.constant 0 : i32
    return %arg0, %c0_i32 : i32, i32
  }
  func.func @transform_5(%arg0: i32) -> (i32, i32) {
    %c0_i32 = arith.constant 0 : i32
    %c0_i32_0 = arith.constant 0 : i32
    return %arg0, %c0_i32 : i32, i32
  }
}

module attributes {stable_mosaic.version = 11 : i64} {
  func.func @_attn_kernel(%arg0: i32, %arg1: memref<128x4xf32, #tpu.memory_space<vmem>>, %arg2: memref<4x128xf32, #tpu.memory_space<vmem>>, %arg3: memref<128x128xi8, #tpu.memory_space<vmem>>, %arg4: memref<128x32xbf16, #tpu.memory_space<vmem>>, %arg5: memref<128x32xf32, #tpu.memory_space<vmem>>, %arg6: memref<1x32xf32, #tpu.memory_space<vmem>>, %arg7: memref<128x32xf32, #tpu.memory_space<vmem>>) attributes {dimension_semantics = [#tpu.dimension_semantics<parallel>], iteration_bounds = array<i64: 1>, scalar_prefetch = 0 : i64, scratch_operands = 0 : i64, tpu.core_type = #tpu.core_type<tc>, window_params = [{transform_indices = @transform_0, window_bounds = array<i64: 128, 4>}, {pipeline_mode = #tpu.pipeline_mode<synchronous>, transform_indices = @transform_1, window_bounds = array<i64: 4, 128>}, {transform_indices = @transform_2, window_bounds = array<i64: 128, 128>}, {pipeline_mode = #tpu.pipeline_mode<synchronous>, transform_indices = @transform_3, window_bounds = array<i64: 128, 32>}, {transform_indices = @transform_4, window_bounds = array<i64: 128, 32>}, {pipeline_mode = #tpu.pipeline_mode<synchronous>, transform_indices = @transform_5, window_bounds = array<i64: 1, 32>}, {transform_indices = @transform_6, window_bounds = array<i64: 128, 32>}]} {
    %c0 = arith.constant 0 : index
    %c0_0 = arith.constant 0 : index
    %0 = vector.load %arg1[%c0, %c0_0] : memref<128x4xf32, #tpu.memory_space<vmem>>, vector<128x4xf32>
    %c0_1 = arith.constant 0 : index
    %c0_2 = arith.constant 0 : index
    %1 = vector.load %arg2[%c0_1, %c0_2] : memref<4x128xf32, #tpu.memory_space<vmem>>, vector<4x128xf32>
    %c0_3 = arith.constant 0 : index
    %c0_4 = arith.constant 0 : index
    %2 = vector.load %arg3[%c0_3, %c0_4] : memref<128x128xi8, #tpu.memory_space<vmem>>, vector<128x128xi8>
    %c0_i8 = arith.constant 0 : i8
    %3 = vector.broadcast %c0_i8 : i8 to vector<128x128xi8>
    %4 = arith.cmpi ne, %2, %3 : vector<128x128xi8>
    %5 = vector.extract_strided_slice %0 {offsets = [0, 0], sizes = [128, 1], strides = [1, 1]} : vector<128x4xf32> to vector<128x1xf32>
    %6 = vector.extract_strided_slice %1 {offsets = [0, 0], sizes = [1, 128], strides = [1, 1]} : vector<4x128xf32> to vector<1x128xf32>
    %7 = vector.broadcast %5 : vector<128x1xf32> to vector<128x128xf32>
    %8 = vector.broadcast %6 : vector<1x128xf32> to vector<128x128xf32>
    %9 = arith.addf %7, %8 : vector<128x128xf32>
    %cst = arith.constant 0.000000e+00 : f32
    %10 = vector.broadcast %cst : f32 to vector<128x128xf32>
    %11 = arith.cmpf oge, %9, %10 : vector<128x128xf32>
    %cst_5 = arith.constant 2.000000e-01 : f32
    %12 = vector.broadcast %cst_5 : f32 to vector<128x128xf32>
    %13 = arith.mulf %12, %9 : vector<128x128xf32>
    %14 = arith.select %11, %9, %13 : vector<128x128xi1>, vector<128x128xf32>
    %cst_6 = arith.constant -1.000000e+09 : f32
    %15 = vector.broadcast %cst_6 : f32 to vector<128x128xf32>
    %16 = arith.select %4, %14, %15 : vector<128x128xi1>, vector<128x128xf32>
    %cst_7 = arith.constant dense<0xFF800000> : vector<128xf32>
    %17 = vector.multi_reduction <maximumf>, %16, %cst_7 [1] : vector<128x128xf32> to vector<128xf32>
    %18 = vector.shape_cast %17 : vector<128xf32> to vector<128x1xf32>
    %19 = vector.broadcast %18 : vector<128x1xf32> to vector<128x128xf32>
    %20 = arith.subf %16, %19 : vector<128x128xf32>
    %21 = math.exp %20 : vector<128x128xf32>
    %cst_8 = arith.constant dense<0.000000e+00> : vector<128xf32>
    %22 = vector.multi_reduction <add>, %21, %cst_8 [1] : vector<128x128xf32> to vector<128xf32>
    %23 = vector.shape_cast %22 : vector<128xf32> to vector<128x1xf32>
    %24 = arith.truncf %21 : vector<128x128xf32> to vector<128x128xbf16>
    %c0_9 = arith.constant 0 : index
    %c0_10 = arith.constant 0 : index
    %25 = vector.load %arg4[%c0_9, %c0_10] : memref<128x32xbf16, #tpu.memory_space<vmem>>, vector<128x8xbf16>
    %cst_11 = arith.constant dense<0.000000e+00> : vector<128x8xf32>
    %26 = tpu.matmul %24, %25, %cst_11 {dimension_numbers = #tpu.dot_dimension_numbers<[1], [0], [0], [1], [0, 0, 1, 1], [], []>} : vector<128x128xbf16>, vector<128x8xbf16>, vector<128x8xf32> -> vector<128x8xf32>
    %27 = vector.broadcast %23 : vector<128x1xf32> to vector<128x8xf32>
    %28 = arith.divf %26, %27 : vector<128x8xf32>
    %c0_12 = arith.constant 0 : index
    %c0_13 = arith.constant 0 : index
    %29 = vector.load %arg5[%c0_12, %c0_13] : memref<128x32xf32, #tpu.memory_space<vmem>>, vector<128x8xf32>
    %30 = arith.addf %28, %29 : vector<128x8xf32>
    %c0_14 = arith.constant 0 : index
    %c0_15 = arith.constant 0 : index
    %31 = vector.load %arg6[%c0_14, %c0_15] : memref<1x32xf32, #tpu.memory_space<vmem>>, vector<1x8xf32>
    %32 = vector.broadcast %31 : vector<1x8xf32> to vector<128x8xf32>
    %33 = arith.addf %30, %32 : vector<128x8xf32>
    %cst_16 = arith.constant 0.000000e+00 : f32
    %34 = vector.broadcast %cst_16 : f32 to vector<128x8xf32>
    %35 = arith.cmpf ogt, %33, %34 : vector<128x8xf32>
    %cst_17 = arith.constant 0.000000e+00 : f32
    %36 = vector.broadcast %cst_17 : f32 to vector<128x8xf32>
    %37 = arith.minimumf %33, %36 : vector<128x8xf32>
    %38 = math.exp %37 : vector<128x8xf32>
    %cst_18 = arith.constant 1.000000e+00 : f32
    %39 = vector.broadcast %cst_18 : f32 to vector<128x8xf32>
    %40 = arith.subf %38, %39 : vector<128x8xf32>
    %41 = arith.select %35, %33, %40 : vector<128x8xi1>, vector<128x8xf32>
    %c0_19 = arith.constant 0 : index
    %c0_20 = arith.constant 0 : index
    %42 = vector.load %arg7[%c0_19, %c0_20] : memref<128x32xf32, #tpu.memory_space<vmem>>, vector<128x8xf32>
    tpu.vector_store %arg7[%c0_19, %c0_20], %41 {strides = array<i32>} : memref<128x32xf32, #tpu.memory_space<vmem>>, vector<128x8xf32>,
    %43 = vector.extract_strided_slice %0 {offsets = [0, 1], sizes = [128, 1], strides = [1, 1]} : vector<128x4xf32> to vector<128x1xf32>
    %44 = vector.extract_strided_slice %1 {offsets = [1, 0], sizes = [1, 128], strides = [1, 1]} : vector<4x128xf32> to vector<1x128xf32>
    %45 = vector.broadcast %43 : vector<128x1xf32> to vector<128x128xf32>
    %46 = vector.broadcast %44 : vector<1x128xf32> to vector<128x128xf32>
    %47 = arith.addf %45, %46 : vector<128x128xf32>
    %cst_21 = arith.constant 0.000000e+00 : f32
    %48 = vector.broadcast %cst_21 : f32 to vector<128x128xf32>
    %49 = arith.cmpf oge, %47, %48 : vector<128x128xf32>
    %cst_22 = arith.constant 2.000000e-01 : f32
    %50 = vector.broadcast %cst_22 : f32 to vector<128x128xf32>
    %51 = arith.mulf %50, %47 : vector<128x128xf32>
    %52 = arith.select %49, %47, %51 : vector<128x128xi1>, vector<128x128xf32>
    %cst_23 = arith.constant -1.000000e+09 : f32
    %53 = vector.broadcast %cst_23 : f32 to vector<128x128xf32>
    %54 = arith.select %4, %52, %53 : vector<128x128xi1>, vector<128x128xf32>
    %cst_24 = arith.constant dense<0xFF800000> : vector<128xf32>
    %55 = vector.multi_reduction <maximumf>, %54, %cst_24 [1] : vector<128x128xf32> to vector<128xf32>
    %56 = vector.shape_cast %55 : vector<128xf32> to vector<128x1xf32>
    %57 = vector.broadcast %56 : vector<128x1xf32> to vector<128x128xf32>
    %58 = arith.subf %54, %57 : vector<128x128xf32>
    %59 = math.exp %58 : vector<128x128xf32>
    %cst_25 = arith.constant dense<0.000000e+00> : vector<128xf32>
    %60 = vector.multi_reduction <add>, %59, %cst_25 [1] : vector<128x128xf32> to vector<128xf32>
    %61 = vector.shape_cast %60 : vector<128xf32> to vector<128x1xf32>
    %62 = arith.truncf %59 : vector<128x128xf32> to vector<128x128xbf16>
    %c0_26 = arith.constant 0 : index
    %c8 = arith.constant 8 : index
    %63 = vector.load %arg4[%c0_26, %c8] : memref<128x32xbf16, #tpu.memory_space<vmem>>, vector<128x8xbf16>
    %cst_27 = arith.constant dense<0.000000e+00> : vector<128x8xf32>
    %64 = tpu.matmul %62, %63, %cst_27 {dimension_numbers = #tpu.dot_dimension_numbers<[1], [0], [0], [1], [0, 0, 1, 1], [], []>} : vector<128x128xbf16>, vector<128x8xbf16>, vector<128x8xf32> -> vector<128x8xf32>
    %65 = vector.broadcast %61 : vector<128x1xf32> to vector<128x8xf32>
    %66 = arith.divf %64, %65 : vector<128x8xf32>
    %c0_28 = arith.constant 0 : index
    %c8_29 = arith.constant 8 : index
    %67 = vector.load %arg5[%c0_28, %c8_29] : memref<128x32xf32, #tpu.memory_space<vmem>>, vector<128x8xf32>
    %68 = arith.addf %66, %67 : vector<128x8xf32>
    %c0_30 = arith.constant 0 : index
    %c8_31 = arith.constant 8 : index
    %69 = vector.load %arg6[%c0_30, %c8_31] : memref<1x32xf32, #tpu.memory_space<vmem>>, vector<1x8xf32>
    %70 = vector.broadcast %69 : vector<1x8xf32> to vector<128x8xf32>
    %71 = arith.addf %68, %70 : vector<128x8xf32>
    %cst_32 = arith.constant 0.000000e+00 : f32
    %72 = vector.broadcast %cst_32 : f32 to vector<128x8xf32>
    %73 = arith.cmpf ogt, %71, %72 : vector<128x8xf32>
    %cst_33 = arith.constant 0.000000e+00 : f32
    %74 = vector.broadcast %cst_33 : f32 to vector<128x8xf32>
    %75 = arith.minimumf %71, %74 : vector<128x8xf32>
    %76 = math.exp %75 : vector<128x8xf32>
    %cst_34 = arith.constant 1.000000e+00 : f32
    %77 = vector.broadcast %cst_34 : f32 to vector<128x8xf32>
    %78 = arith.subf %76, %77 : vector<128x8xf32>
    %79 = arith.select %73, %71, %78 : vector<128x8xi1>, vector<128x8xf32>
    %c0_35 = arith.constant 0 : index
    %c8_36 = arith.constant 8 : index
    %80 = vector.load %arg7[%c0_35, %c8_36] : memref<128x32xf32, #tpu.memory_space<vmem>>, vector<128x8xf32>
    tpu.vector_store %arg7[%c0_35, %c8_36], %79 {strides = array<i32>} : memref<128x32xf32, #tpu.memory_space<vmem>>, vector<128x8xf32>,
    %81 = vector.extract_strided_slice %0 {offsets = [0, 2], sizes = [128, 1], strides = [1, 1]} : vector<128x4xf32> to vector<128x1xf32>
    %82 = vector.extract_strided_slice %1 {offsets = [2, 0], sizes = [1, 128], strides = [1, 1]} : vector<4x128xf32> to vector<1x128xf32>
    %83 = vector.broadcast %81 : vector<128x1xf32> to vector<128x128xf32>
    %84 = vector.broadcast %82 : vector<1x128xf32> to vector<128x128xf32>
    %85 = arith.addf %83, %84 : vector<128x128xf32>
    %cst_37 = arith.constant 0.000000e+00 : f32
    %86 = vector.broadcast %cst_37 : f32 to vector<128x128xf32>
    %87 = arith.cmpf oge, %85, %86 : vector<128x128xf32>
    %cst_38 = arith.constant 2.000000e-01 : f32
    %88 = vector.broadcast %cst_38 : f32 to vector<128x128xf32>
    %89 = arith.mulf %88, %85 : vector<128x128xf32>
    %90 = arith.select %87, %85, %89 : vector<128x128xi1>, vector<128x128xf32>
    %cst_39 = arith.constant -1.000000e+09 : f32
    %91 = vector.broadcast %cst_39 : f32 to vector<128x128xf32>
    %92 = arith.select %4, %90, %91 : vector<128x128xi1>, vector<128x128xf32>
    %cst_40 = arith.constant dense<0xFF800000> : vector<128xf32>
    %93 = vector.multi_reduction <maximumf>, %92, %cst_40 [1] : vector<128x128xf32> to vector<128xf32>
    %94 = vector.shape_cast %93 : vector<128xf32> to vector<128x1xf32>
    %95 = vector.broadcast %94 : vector<128x1xf32> to vector<128x128xf32>
    %96 = arith.subf %92, %95 : vector<128x128xf32>
    %97 = math.exp %96 : vector<128x128xf32>
    %cst_41 = arith.constant dense<0.000000e+00> : vector<128xf32>
    %98 = vector.multi_reduction <add>, %97, %cst_41 [1] : vector<128x128xf32> to vector<128xf32>
    %99 = vector.shape_cast %98 : vector<128xf32> to vector<128x1xf32>
    %100 = arith.truncf %97 : vector<128x128xf32> to vector<128x128xbf16>
    %c0_42 = arith.constant 0 : index
    %c16 = arith.constant 16 : index
    %101 = vector.load %arg4[%c0_42, %c16] : memref<128x32xbf16, #tpu.memory_space<vmem>>, vector<128x8xbf16>
    %cst_43 = arith.constant dense<0.000000e+00> : vector<128x8xf32>
    %102 = tpu.matmul %100, %101, %cst_43 {dimension_numbers = #tpu.dot_dimension_numbers<[1], [0], [0], [1], [0, 0, 1, 1], [], []>} : vector<128x128xbf16>, vector<128x8xbf16>, vector<128x8xf32> -> vector<128x8xf32>
    %103 = vector.broadcast %99 : vector<128x1xf32> to vector<128x8xf32>
    %104 = arith.divf %102, %103 : vector<128x8xf32>
    %c0_44 = arith.constant 0 : index
    %c16_45 = arith.constant 16 : index
    %105 = vector.load %arg5[%c0_44, %c16_45] : memref<128x32xf32, #tpu.memory_space<vmem>>, vector<128x8xf32>
    %106 = arith.addf %104, %105 : vector<128x8xf32>
    %c0_46 = arith.constant 0 : index
    %c16_47 = arith.constant 16 : index
    %107 = vector.load %arg6[%c0_46, %c16_47] : memref<1x32xf32, #tpu.memory_space<vmem>>, vector<1x8xf32>
    %108 = vector.broadcast %107 : vector<1x8xf32> to vector<128x8xf32>
    %109 = arith.addf %106, %108 : vector<128x8xf32>
    %cst_48 = arith.constant 0.000000e+00 : f32
    %110 = vector.broadcast %cst_48 : f32 to vector<128x8xf32>
    %111 = arith.cmpf ogt, %109, %110 : vector<128x8xf32>
    %cst_49 = arith.constant 0.000000e+00 : f32
    %112 = vector.broadcast %cst_49 : f32 to vector<128x8xf32>
    %113 = arith.minimumf %109, %112 : vector<128x8xf32>
    %114 = math.exp %113 : vector<128x8xf32>
    %cst_50 = arith.constant 1.000000e+00 : f32
    %115 = vector.broadcast %cst_50 : f32 to vector<128x8xf32>
    %116 = arith.subf %114, %115 : vector<128x8xf32>
    %117 = arith.select %111, %109, %116 : vector<128x8xi1>, vector<128x8xf32>
    %c0_51 = arith.constant 0 : index
    %c16_52 = arith.constant 16 : index
    %118 = vector.load %arg7[%c0_51, %c16_52] : memref<128x32xf32, #tpu.memory_space<vmem>>, vector<128x8xf32>
    tpu.vector_store %arg7[%c0_51, %c16_52], %117 {strides = array<i32>} : memref<128x32xf32, #tpu.memory_space<vmem>>, vector<128x8xf32>,
    %119 = vector.extract_strided_slice %0 {offsets = [0, 3], sizes = [128, 1], strides = [1, 1]} : vector<128x4xf32> to vector<128x1xf32>
    %120 = vector.extract_strided_slice %1 {offsets = [3, 0], sizes = [1, 128], strides = [1, 1]} : vector<4x128xf32> to vector<1x128xf32>
    %121 = vector.broadcast %119 : vector<128x1xf32> to vector<128x128xf32>
    %122 = vector.broadcast %120 : vector<1x128xf32> to vector<128x128xf32>
    %123 = arith.addf %121, %122 : vector<128x128xf32>
    %cst_53 = arith.constant 0.000000e+00 : f32
    %124 = vector.broadcast %cst_53 : f32 to vector<128x128xf32>
    %125 = arith.cmpf oge, %123, %124 : vector<128x128xf32>
    %cst_54 = arith.constant 2.000000e-01 : f32
    %126 = vector.broadcast %cst_54 : f32 to vector<128x128xf32>
    %127 = arith.mulf %126, %123 : vector<128x128xf32>
    %128 = arith.select %125, %123, %127 : vector<128x128xi1>, vector<128x128xf32>
    %cst_55 = arith.constant -1.000000e+09 : f32
    %129 = vector.broadcast %cst_55 : f32 to vector<128x128xf32>
    %130 = arith.select %4, %128, %129 : vector<128x128xi1>, vector<128x128xf32>
    %cst_56 = arith.constant dense<0xFF800000> : vector<128xf32>
    %131 = vector.multi_reduction <maximumf>, %130, %cst_56 [1] : vector<128x128xf32> to vector<128xf32>
    %132 = vector.shape_cast %131 : vector<128xf32> to vector<128x1xf32>
    %133 = vector.broadcast %132 : vector<128x1xf32> to vector<128x128xf32>
    %134 = arith.subf %130, %133 : vector<128x128xf32>
    %135 = math.exp %134 : vector<128x128xf32>
    %cst_57 = arith.constant dense<0.000000e+00> : vector<128xf32>
    %136 = vector.multi_reduction <add>, %135, %cst_57 [1] : vector<128x128xf32> to vector<128xf32>
    %137 = vector.shape_cast %136 : vector<128xf32> to vector<128x1xf32>
    %138 = arith.truncf %135 : vector<128x128xf32> to vector<128x128xbf16>
    %c0_58 = arith.constant 0 : index
    %c24 = arith.constant 24 : index
    %139 = vector.load %arg4[%c0_58, %c24] : memref<128x32xbf16, #tpu.memory_space<vmem>>, vector<128x8xbf16>
    %cst_59 = arith.constant dense<0.000000e+00> : vector<128x8xf32>
    %140 = tpu.matmul %138, %139, %cst_59 {dimension_numbers = #tpu.dot_dimension_numbers<[1], [0], [0], [1], [0, 0, 1, 1], [], []>} : vector<128x128xbf16>, vector<128x8xbf16>, vector<128x8xf32> -> vector<128x8xf32>
    %141 = vector.broadcast %137 : vector<128x1xf32> to vector<128x8xf32>
    %142 = arith.divf %140, %141 : vector<128x8xf32>
    %c0_60 = arith.constant 0 : index
    %c24_61 = arith.constant 24 : index
    %143 = vector.load %arg5[%c0_60, %c24_61] : memref<128x32xf32, #tpu.memory_space<vmem>>, vector<128x8xf32>
    %144 = arith.addf %142, %143 : vector<128x8xf32>
    %c0_62 = arith.constant 0 : index
    %c24_63 = arith.constant 24 : index
    %145 = vector.load %arg6[%c0_62, %c24_63] : memref<1x32xf32, #tpu.memory_space<vmem>>, vector<1x8xf32>
    %146 = vector.broadcast %145 : vector<1x8xf32> to vector<128x8xf32>
    %147 = arith.addf %144, %146 : vector<128x8xf32>
    %cst_64 = arith.constant 0.000000e+00 : f32
    %148 = vector.broadcast %cst_64 : f32 to vector<128x8xf32>
    %149 = arith.cmpf ogt, %147, %148 : vector<128x8xf32>
    %cst_65 = arith.constant 0.000000e+00 : f32
    %150 = vector.broadcast %cst_65 : f32 to vector<128x8xf32>
    %151 = arith.minimumf %147, %150 : vector<128x8xf32>
    %152 = math.exp %151 : vector<128x8xf32>
    %cst_66 = arith.constant 1.000000e+00 : f32
    %153 = vector.broadcast %cst_66 : f32 to vector<128x8xf32>
    %154 = arith.subf %152, %153 : vector<128x8xf32>
    %155 = arith.select %149, %147, %154 : vector<128x8xi1>, vector<128x8xf32>
    %c0_67 = arith.constant 0 : index
    %c24_68 = arith.constant 24 : index
    %156 = vector.load %arg7[%c0_67, %c24_68] : memref<128x32xf32, #tpu.memory_space<vmem>>, vector<128x8xf32>
    tpu.vector_store %arg7[%c0_67, %c24_68], %155 {strides = array<i32>} : memref<128x32xf32, #tpu.memory_space<vmem>>, vector<128x8xf32>,
    return
  }
  func.func @transform_0(%arg0: i32) -> (i32, i32) {
    %c0_i32 = arith.constant 0 : i32
    %c0_i32_0 = arith.constant 0 : i32
    return %arg0, %c0_i32 : i32, i32
  }
  func.func @transform_1(%arg0: i32) -> (i32, i32) {
    %c0_i32 = arith.constant 0 : i32
    %c0_i32_0 = arith.constant 0 : i32
    %c0_i32_1 = arith.constant 0 : i32
    return %c0_i32, %c0_i32_0 : i32, i32
  }
  func.func @transform_2(%arg0: i32) -> (i32, i32) {
    %c0_i32 = arith.constant 0 : i32
    %c0_i32_0 = arith.constant 0 : i32
    return %arg0, %c0_i32 : i32, i32
  }
  func.func @transform_3(%arg0: i32) -> (i32, i32) {
    %c0_i32 = arith.constant 0 : i32
    %c0_i32_0 = arith.constant 0 : i32
    %c0_i32_1 = arith.constant 0 : i32
    return %c0_i32, %c0_i32_0 : i32, i32
  }
  func.func @transform_4(%arg0: i32) -> (i32, i32) {
    %c0_i32 = arith.constant 0 : i32
    %c0_i32_0 = arith.constant 0 : i32
    return %arg0, %c0_i32 : i32, i32
  }
  func.func @transform_5(%arg0: i32) -> (i32, i32) {
    %c0_i32 = arith.constant 0 : i32
    %c0_i32_0 = arith.constant 0 : i32
    %c0_i32_1 = arith.constant 0 : i32
    return %c0_i32, %c0_i32_0 : i32, i32
  }
  func.func @transform_6(%arg0: i32) -> (i32, i32) {
    %c0_i32 = arith.constant 0 : i32
    %c0_i32_0 = arith.constant 0 : i32
    return %arg0, %c0_i32 : i32, i32
  }
}

</mosaic_0001>

<llo_original>
// kernel: gat_layer_forward.2
$region0: #{gat_layer_forward.2}
  #allocation0 [shape = 'u32[]', space=smem, size = 0x4, offset = 0x4, fixed_abs, tag = 'smem constant byte address 0x4 - core index']
  #allocation1 [shape = 'u32[144,128]{1,0:T(1,128)}', space=vmem, size = 0x12000, scoped, tag = 'internal scratch']
  %s0 = inlined_call_operand.vmem [shape: f32[128,16], index: 0, kind: input, shape index: {}]
  %s1 = inlined_call_operand.vmem [shape: bf16[16,72], index: 1, kind: input, shape index: {}]
  %s2 = inlined_call_operand.vmem [shape: bf16[128,32], index: 2, kind: output, shape index: {0}]
  %s3 = inlined_call_operand.vmem [shape: f32[128,32], index: 3, kind: output, shape index: {1}]
  %s4 = inlined_call_operand.vmem [shape: f32[128,4], index: 4, kind: output, shape index: {2}]
  %s5 = inlined_call_operand.vmem [shape: f32[128,4], index: 5, kind: output, shape index: {3}]
  %6 = xla_tuple %s2, %s3, %s4, %s5
  %s7 = sld [smem:[#allocation0]]
  $region42: #{gat_layer_forward.2} parent=0
    _
  %s9 = ssub.s32 1, %s7
  %s10 = scalar_select 0, %s9, %s7
  // Predicated region
  $region2: #{gat_layer_forward.2} parent=0 // pred_check
    _
  $region3: #{gat_layer_forward.2} parent=0 // pred_check_branch
    %12 = sbr.rel (0) target = $region5
  $region4: #{gat_layer_forward.2} parent=0 // pred_region
    _
  $region5: #{gat_layer_forward.2} parent=0 // pred_fallthru
    _
  // Predicated region
  $region6: #{gat_layer_forward.2} parent=0 // pred_check
    _
  $region7: #{gat_layer_forward.2} parent=0 // pred_check_branch
    %14 = sbr.rel (0) target = $region9
  $region8: #{gat_layer_forward.2} parent=0 // pred_region
    _
  $region9: #{gat_layer_forward.2} parent=0 // pred_fallthru
    _
  %v16 = vld [vmem:[%s0] sm:$0xff]
  %v17 = vld [vmem:[%s0 + $0x8] sm:$0xff]
  %v18 = vld [vmem:[%s0 + $0x10] sm:$0xff]
  %v19 = vld [vmem:[%s0 + $0x18] sm:$0xff]
  %v20 = vld [vmem:[%s0 + $0x20] sm:$0xff]
  %v21 = vld [vmem:[%s0 + $0x28] sm:$0xff]
  %v22 = vld [vmem:[%s0 + $0x30] sm:$0xff]
  %v23 = vld [vmem:[%s0 + $0x38] sm:$0xff]
  %v24 = vld [vmem:[%s0 + $0x40] sm:$0xff]
  %v25 = vld [vmem:[%s0 + $0x48] sm:$0xff]
  %v26 = vld [vmem:[%s0 + $0x50] sm:$0xff]
  %v27 = vld [vmem:[%s0 + $0x58] sm:$0xff]
  %v28 = vld [vmem:[%s0 + $0x60] sm:$0xff]
  %v29 = vld [vmem:[%s0 + $0x68] sm:$0xff]
  %v30 = vld [vmem:[%s0 + $0x70] sm:$0xff]
  %v31 = vld [vmem:[%s0 + $0x78] sm:$0xff]
  %v32 = vpack.c.bf16 %v17, %v16
  %v33 = vpack.c.bf16 %v19, %v18
  %v34 = vpack.c.bf16 %v21, %v20
  %v35 = vpack.c.bf16 %v23, %v22
  %v36 = vpack.c.bf16 %v25, %v24
  %v37 = vpack.c.bf16 %v27, %v26
  %v38 = vpack.c.bf16 %v29, %v28
  %v39 = vpack.c.bf16 %v31, %v30
  %v40 = vld [vmem:[%s1] sm:$0xf]
  %v41 = vld [vmem:[%s1 + $0x4] sm:$0xf]
  %v44 = vunpack.c.l.b16 %v40
  %v45 = vunpack.c.l.b16 %v41
  %v46 = vpack.c.b16 %v45, %v44
  %vm48 = vcmask 130048
  %v50 = vsel %vm48, %v32, 0
  %v53 = vsel %vm48, %v33, 0
  %v56 = vsel %vm48, %v34, 0
  %v59 = vsel %vm48, %v35, 0
  %v62 = vsel %vm48, %v36, 0
  %v65 = vsel %vm48, %v37, 0
  %v68 = vsel %vm48, %v38, 0
  %v71 = vsel %vm48, %v39, 0
  %73 = vmatprep.subr.bf16.mxu0 0
  %74 = vmatpush1.bf16.msra.mxu0 %v46
  %75 = vmatprep.subr.bf16.mxu0 0
  %76 = vmatpush1.bf16.msra.mxu0 0
  %77 = vmatprep.subr.bf16.mxu0 0
  %78 = vmatpush1.bf16.msra.mxu0 0
  %79 = vmatprep.subr.bf16.mxu0 0
  %80 = vmatpush1.bf16.msra.mxu0 0
  %81 = vmatprep.subr.bf16.mxu0 0
  %82 = vmatpush1.bf16.msra.mxu0 0
  %83 = vmatprep.subr.bf16.mxu0 0
  %84 = vmatpush1.bf16.msra.mxu0 0
  %85 = vmatprep.subr.bf16.mxu0 0
  %86 = vmatpush1.bf16.msra.mxu0 0
  %87 = vmatprep.subr.bf16.mxu0 0
  %88 = vmatpush1.bf16.msra.mxu0 0
  %89 = vmatprep.subr.bf16.mxu0 0
  %90 = vmatpush1.bf16.msra.mxu0 0
  %91 = vmatprep.subr.bf16.mxu0 0
  %92 = vmatpush1.bf16.msra.mxu0 0
  %93 = vmatprep.subr.bf16.mxu0 0
  %94 = vmatpush1.bf16.msra.mxu0 0
  %95 = vmatprep.subr.bf16.mxu0 0
  %96 = vmatpush1.bf16.msra.mxu0 0
  %97 = vmatprep.subr.bf16.mxu0 0
  %98 = vmatpush1.bf16.msra.mxu0 0
  %99 = vmatprep.subr.bf16.mxu0 0
  %100 = vmatpush1.bf16.msra.mxu0 0
  %101 = vmatprep.subr.bf16.mxu0 0
  %102 = vmatpush1.bf16.msra.mxu0 0
  %103 = vmatprep.subr.bf16.mxu0 0
  %104 = vmatpush1.bf16.msra.mxu0 0
  %105 = vmatprep.mubr.bf16.mxu0 0
  %106 = vmatmul.mubr.bf16.gmra.mrb[0].mxu0 %v50
  %v107 = vpop.f32.mrb[0].mxu0
  %v108 = vadd.f32 0.0, %v107
  %v109 = vpop.f32.mrb[0].mxu0
  %v110 = vpop.f32.mrb[0].mxu0
  %v111 = vadd.f32 0.0, %v110
  %v112 = vpop.f32.mrb[0].mxu0
  %113 = vmatprep.mubr.bf16.mxu0 0
  %114 = vmatmul.mubr.bf16.gmra.mrb[0].mxu0 %v53
  %v115 = vpop.f32.mrb[0].mxu0
  %v116 = vadd.f32 0.0, %v115
  %v117 = vpop.f32.mrb[0].mxu0
  %v118 = vpop.f32.mrb[0].mxu0
  %v119 = vadd.f32 0.0, %v118
  %v120 = vpop.f32.mrb[0].mxu0
  %121 = vmatprep.mubr.bf16.mxu0 0
  %122 = vmatmul.mubr.bf16.gmra.mrb[0].mxu0 %v56
  %v123 = vpop.f32.mrb[0].mxu0
  %v124 = vadd.f32 0.0, %v123
  %v125 = vpop.f32.mrb[0].mxu0
  %v126 = vpop.f32.mrb[0].mxu0
  %v127 = vadd.f32 0.0, %v126
  %v128 = vpop.f32.mrb[0].mxu0
  %129 = vmatprep.mubr.bf16.mxu0 0
  %130 = vmatmul.mubr.bf16.gmra.mrb[0].mxu0 %v59
  %v131 = vpop.f32.mrb[0].mxu0
  %v132 = vadd.f32 0.0, %v131
  %v133 = vpop.f32.mrb[0].mxu0
  %v134 = vpop.f32.mrb[0].mxu0
  %v135 = vadd.f32 0.0, %v134
  %v136 = vpop.f32.mrb[0].mxu0
  %137 = vmatprep.mubr.bf16.mxu0 0
  %138 = vmatmul.mubr.bf16.gmra.mrb[0].mxu0 %v62
  %v139 = vpop.f32.mrb[0].mxu0
  %v140 = vadd.f32 0.0, %v139
  %v141 = vpop.f32.mrb[0].mxu0
  %v142 = vpop.f32.mrb[0].mxu0
  %v143 = vadd.f32 0.0, %v142
  %v144 = vpop.f32.mrb[0].mxu0
  %145 = vmatprep.mubr.bf16.mxu0 0
  %146 = vmatmul.mubr.bf16.gmra.mrb[0].mxu0 %v65
  %v147 = vpop.f32.mrb[0].mxu0
  %v148 = vadd.f32 0.0, %v147
  %v149 = vpop.f32.mrb[0].mxu0
  %v150 = vpop.f32.mrb[0].mxu0
  %v151 = vadd.f32 0.0, %v150
  %v152 = vpop.f32.mrb[0].mxu0
  %153 = vmatprep.mubr.bf16.mxu0 0
  %154 = vmatmul.mubr.bf16.gmra.mrb[0].mxu0 %v68
  %v155 = vpop.f32.mrb[0].mxu0
  %v156 = vadd.f32 0.0, %v155
  %v157 = vpop.f32.mrb[0].mxu0
  %v158 = vpop.f32.mrb[0].mxu0
  %v159 = vadd.f32 0.0, %v158
  %v160 = vpop.f32.mrb[0].mxu0
  %161 = vmatprep.mubr.bf16.mxu0 0
  %162 = vmatmul.mubr.bf16.gmra.mrb[0].mxu0 %v71
  %v163 = vpop.f32.mrb[0].mxu0
  %v164 = vadd.f32 0.0, %v163
  %v165 = vpop.f32.mrb[0].mxu0
  %v166 = vpop.f32.mrb[0].mxu0
  %v167 = vadd.f32 0.0, %v166
  %v168 = vpop.f32.mrb[0].mxu0
  %169 = vdwg.mxu0
  %186 = vrot.lane.b32.xlu0 %v108, 96
  %v187 = vpop.permute.xlu0 %186
  %188 = vrot.lane.b32.xlu0 %v111, 96
  %v189 = vpop.permute.xlu0 %188
  %190 = vrot.lane.b32.xlu0 %v116, 96
  %v191 = vpop.permute.xlu0 %190
  %192 = vrot.lane.b32.xlu0 %v119, 96
  %v193 = vpop.permute.xlu0 %192
  %194 = vrot.lane.b32.xlu0 %v124, 96
  %v195 = vpop.permute.xlu0 %194
  %196 = vrot.lane.b32.xlu0 %v127, 96
  %v197 = vpop.permute.xlu0 %196
  %198 = vrot.lane.b32.xlu0 %v132, 96
  %v199 = vpop.permute.xlu0 %198
  %200 = vrot.lane.b32.xlu0 %v135, 96
  %v201 = vpop.permute.xlu0 %200
  %202 = vrot.lane.b32.xlu0 %v140, 96
  %v203 = vpop.permute.xlu0 %202
  %204 = vrot.lane.b32.xlu0 %v143, 96
  %v205 = vpop.permute.xlu0 %204
  %206 = vrot.lane.b32.xlu0 %v148, 96
  %v207 = vpop.permute.xlu0 %206
  %208 = vrot.lane.b32.xlu0 %v151, 96
  %v209 = vpop.permute.xlu0 %208
  %210 = vrot.lane.b32.xlu0 %v156, 96
  %v211 = vpop.permute.xlu0 %210
  %212 = vrot.lane.b32.xlu0 %v159, 96
  %v213 = vpop.permute.xlu0 %212
  %214 = vrot.lane.b32.xlu0 %v164, 96
  %v215 = vpop.permute.xlu0 %214
  %216 = vrot.lane.b32.xlu0 %v167, 96
  %v217 = vpop.permute.xlu0 %216
  %vm234 = vcmask 261120
  %235 = vst.msk [vmem:[%s3] sm:$0xff] %vm234, %v187
  %236 = vst.msk [vmem:[%s3 + $0x8] sm:$0xff] %vm234, %v189
  %237 = vst.msk [vmem:[%s3 + $0x10] sm:$0xff] %vm234, %v191
  %238 = vst.msk [vmem:[%s3 + $0x18] sm:$0xff] %vm234, %v193
  %239 = vst.msk [vmem:[%s3 + $0x20] sm:$0xff] %vm234, %v195
  %240 = vst.msk [vmem:[%s3 + $0x28] sm:$0xff] %vm234, %v197
  %241 = vst.msk [vmem:[%s3 + $0x30] sm:$0xff] %vm234, %v199
  %242 = vst.msk [vmem:[%s3 + $0x38] sm:$0xff] %vm234, %v201
  %243 = vst.msk [vmem:[%s3 + $0x40] sm:$0xff] %vm234, %v203
  %244 = vst.msk [vmem:[%s3 + $0x48] sm:$0xff] %vm234, %v205
  %245 = vst.msk [vmem:[%s3 + $0x50] sm:$0xff] %vm234, %v207
  %246 = vst.msk [vmem:[%s3 + $0x58] sm:$0xff] %vm234, %v209
  %247 = vst.msk [vmem:[%s3 + $0x60] sm:$0xff] %vm234, %v211
  %248 = vst.msk [vmem:[%s3 + $0x68] sm:$0xff] %vm234, %v213
  %249 = vst.msk [vmem:[%s3 + $0x70] sm:$0xff] %vm234, %v215
  %250 = vst.msk [vmem:[%s3 + $0x78] sm:$0xff] %vm234, %v217
  %v251 = vpack.c.bf16 %v111, %v108
  %v252 = vpack.c.bf16 %v119, %v116
  %v253 = vpack.c.bf16 %v127, %v124
  %v254 = vpack.c.bf16 %v135, %v132
  %v255 = vpack.c.bf16 %v143, %v140
  %v256 = vpack.c.bf16 %v151, %v148
  %v257 = vpack.c.bf16 %v159, %v156
  %v258 = vpack.c.bf16 %v167, %v164
  %v267 = vunpack.c.l.b16 %v251
  %v268 = vunpack.c.h.b16 %v251
  %v269 = vunpack.c.l.b16 %v252
  %v270 = vunpack.c.h.b16 %v252
  %v271 = vunpack.c.l.b16 %v253
  %v272 = vunpack.c.h.b16 %v253
  %v273 = vunpack.c.l.b16 %v254
  %v274 = vunpack.c.h.b16 %v254
  %v275 = vunpack.c.l.b16 %v255
  %v276 = vunpack.c.h.b16 %v255
  %v277 = vunpack.c.l.b16 %v256
  %v278 = vunpack.c.h.b16 %v256
  %v279 = vunpack.c.l.b16 %v257
  %v280 = vunpack.c.h.b16 %v257
  %v281 = vunpack.c.l.b16 %v258
  %v282 = vunpack.c.h.b16 %v258
  %v283 = vpack.c.b16 %v267, %v267
  %v284 = vpack.c.b16 %v268, %v268
  %v285 = vpack.c.b16 %v269, %v269
  %v286 = vpack.c.b16 %v270, %v270
  %v287 = vpack.c.b16 %v271, %v271
  %v288 = vpack.c.b16 %v272, %v272
  %v289 = vpack.c.b16 %v273, %v273
  %v290 = vpack.c.b16 %v274, %v274
  %v291 = vpack.c.b16 %v275, %v275
  %v292 = vpack.c.b16 %v276, %v276
  %v293 = vpack.c.b16 %v277, %v277
  %v294 = vpack.c.b16 %v278, %v278
  %v295 = vpack.c.b16 %v279, %v279
  %v296 = vpack.c.b16 %v280, %v280
  %v297 = vpack.c.b16 %v281, %v281
  %v298 = vpack.c.b16 %v282, %v282
  %vm315 = vcmask 257024
  %316 = vst.msk [vmem:[%s2] sm:$0xf] %vm315, %v283
  %317 = vst.msk [vmem:[%s2 + $0x4] sm:$0xf] %vm315, %v284
  %318 = vst.msk [vmem:[%s2 + $0x8] sm:$0xf] %vm315, %v285
  %319 = vst.msk [vmem:[%s2 + $0xc] sm:$0xf] %vm315, %v286
  %320 = vst.msk [vmem:[%s2 + $0x10] sm:$0xf] %vm315, %v287
  %321 = vst.msk [vmem:[%s2 + $0x14] sm:$0xf] %vm315, %v288
  %322 = vst.msk [vmem:[%s2 + $0x18] sm:$0xf] %vm315, %v289
  %323 = vst.msk [vmem:[%s2 + $0x1c] sm:$0xf] %vm315, %v290
  %324 = vst.msk [vmem:[%s2 + $0x20] sm:$0xf] %vm315, %v291
  %325 = vst.msk [vmem:[%s2 + $0x24] sm:$0xf] %vm315, %v292
  %326 = vst.msk [vmem:[%s2 + $0x28] sm:$0xf] %vm315, %v293
  %327 = vst.msk [vmem:[%s2 + $0x2c] sm:$0xf] %vm315, %v294
  %328 = vst.msk [vmem:[%s2 + $0x30] sm:$0xf] %vm315, %v295
  %329 = vst.msk [vmem:[%s2 + $0x34] sm:$0xf] %vm315, %v296
  %330 = vst.msk [vmem:[%s2 + $0x38] sm:$0xf] %vm315, %v297
  %331 = vst.msk [vmem:[%s2 + $0x3c] sm:$0xf] %vm315, %v298
  %332 = vrot.lane.b32.xlu0 %v108, 64
  %v333 = vpop.permute.xlu0 %332
  %334 = vrot.lane.b32.xlu0 %v111, 64
  %v335 = vpop.permute.xlu0 %334
  %336 = vrot.lane.b32.xlu0 %v116, 64
  %v337 = vpop.permute.xlu0 %336
  %338 = vrot.lane.b32.xlu0 %v119, 64
  %v339 = vpop.permute.xlu0 %338
  %340 = vrot.lane.b32.xlu0 %v124, 64
  %v341 = vpop.permute.xlu0 %340
  %342 = vrot.lane.b32.xlu0 %v127, 64
  %v343 = vpop.permute.xlu0 %342
  %344 = vrot.lane.b32.xlu0 %v132, 64
  %v345 = vpop.permute.xlu0 %344
  %346 = vrot.lane.b32.xlu0 %v135, 64
  %v347 = vpop.permute.xlu0 %346
  %348 = vrot.lane.b32.xlu0 %v140, 64
  %v349 = vpop.permute.xlu0 %348
  %350 = vrot.lane.b32.xlu0 %v143, 64
  %v351 = vpop.permute.xlu0 %350
  %352 = vrot.lane.b32.xlu0 %v148, 64
  %v353 = vpop.permute.xlu0 %352
  %354 = vrot.lane.b32.xlu0 %v151, 64
  %v355 = vpop.permute.xlu0 %354
  %356 = vrot.lane.b32.xlu0 %v156, 64
  %v357 = vpop.permute.xlu0 %356
  %358 = vrot.lane.b32.xlu0 %v159, 64
  %v359 = vpop.permute.xlu0 %358
  %360 = vrot.lane.b32.xlu0 %v164, 64
  %v361 = vpop.permute.xlu0 %360
  %362 = vrot.lane.b32.xlu0 %v167, 64
  %v363 = vpop.permute.xlu0 %362
  %vm380 = vcmask 31744
  %381 = vst.msk [vmem:[%s4] sm:$0xff] %vm380, %v333
  %382 = vst.msk [vmem:[%s4 + $0x8] sm:$0xff] %vm380, %v335
  %383 = vst.msk [vmem:[%s4 + $0x10] sm:$0xff] %vm380, %v337
  %384 = vst.msk [vmem:[%s4 + $0x18] sm:$0xff] %vm380, %v339
  %385 = vst.msk [vmem:[%s4 + $0x20] sm:$0xff] %vm380, %v341
  %386 = vst.msk [vmem:[%s4 + $0x28] sm:$0xff] %vm380, %v343
  %387 = vst.msk [vmem:[%s4 + $0x30] sm:$0xff] %vm380, %v345
  %388 = vst.msk [vmem:[%s4 + $0x38] sm:$0xff] %vm380, %v347
  %389 = vst.msk [vmem:[%s4 + $0x40] sm:$0xff] %vm380, %v349
  %390 = vst.msk [vmem:[%s4 + $0x48] sm:$0xff] %vm380, %v351
  %391 = vst.msk [vmem:[%s4 + $0x50] sm:$0xff] %vm380, %v353
  %392 = vst.msk [vmem:[%s4 + $0x58] sm:$0xff] %vm380, %v355
  %393 = vst.msk [vmem:[%s4 + $0x60] sm:$0xff] %vm380, %v357
  %394 = vst.msk [vmem:[%s4 + $0x68] sm:$0xff] %vm380, %v359
  %395 = vst.msk [vmem:[%s4 + $0x70] sm:$0xff] %vm380, %v361
  %396 = vst.msk [vmem:[%s4 + $0x78] sm:$0xff] %vm380, %v363
  %397 = vrot.lane.b32.xlu0 %v108, 60
  %v398 = vpop.permute.xlu0 %397
  %399 = vrot.lane.b32.xlu0 %v111, 60
  %v400 = vpop.permute.xlu0 %399
  %401 = vrot.lane.b32.xlu0 %v116, 60
  %v402 = vpop.permute.xlu0 %401
  %403 = vrot.lane.b32.xlu0 %v119, 60
  %v404 = vpop.permute.xlu0 %403
  %405 = vrot.lane.b32.xlu0 %v124, 60
  %v406 = vpop.permute.xlu0 %405
  %407 = vrot.lane.b32.xlu0 %v127, 60
  %v408 = vpop.permute.xlu0 %407
  %409 = vrot.lane.b32.xlu0 %v132, 60
  %v410 = vpop.permute.xlu0 %409
  %411 = vrot.lane.b32.xlu0 %v135, 60
  %v412 = vpop.permute.xlu0 %411
  %413 = vrot.lane.b32.xlu0 %v140, 60
  %v414 = vpop.permute.xlu0 %413
  %415 = vrot.lane.b32.xlu0 %v143, 60
  %v416 = vpop.permute.xlu0 %415
  %417 = vrot.lane.b32.xlu0 %v148, 60
  %v418 = vpop.permute.xlu0 %417
  %419 = vrot.lane.b32.xlu0 %v151, 60
  %v420 = vpop.permute.xlu0 %419
  %421 = vrot.lane.b32.xlu0 %v156, 60
  %v422 = vpop.permute.xlu0 %421
  %423 = vrot.lane.b32.xlu0 %v159, 60
  %v424 = vpop.permute.xlu0 %423
  %425 = vrot.lane.b32.xlu0 %v164, 60
  %v426 = vpop.permute.xlu0 %425
  %427 = vrot.lane.b32.xlu0 %v167, 60
  %v428 = vpop.permute.xlu0 %427
  %445 = vst.msk [vmem:[%s5] sm:$0xff] %vm380, %v398
  %446 = vst.msk [vmem:[%s5 + $0x8] sm:$0xff] %vm380, %v400
  %447 = vst.msk [vmem:[%s5 + $0x10] sm:$0xff] %vm380, %v402
  %448 = vst.msk [vmem:[%s5 + $0x18] sm:$0xff] %vm380, %v404
  %449 = vst.msk [vmem:[%s5 + $0x20] sm:$0xff] %vm380, %v406
  %450 = vst.msk [vmem:[%s5 + $0x28] sm:$0xff] %vm380, %v408
  %451 = vst.msk [vmem:[%s5 + $0x30] sm:$0xff] %vm380, %v410
  %452 = vst.msk [vmem:[%s5 + $0x38] sm:$0xff] %vm380, %v412
  %453 = vst.msk [vmem:[%s5 + $0x40] sm:$0xff] %vm380, %v414
  %454 = vst.msk [vmem:[%s5 + $0x48] sm:$0xff] %vm380, %v416
  %455 = vst.msk [vmem:[%s5 + $0x50] sm:$0xff] %vm380, %v418
  %456 = vst.msk [vmem:[%s5 + $0x58] sm:$0xff] %vm380, %v420
  %457 = vst.msk [vmem:[%s5 + $0x60] sm:$0xff] %vm380, %v422
  %458 = vst.msk [vmem:[%s5 + $0x68] sm:$0xff] %vm380, %v424
  %459 = vst.msk [vmem:[%s5 + $0x70] sm:$0xff] %vm380, %v426
  %460 = vst.msk [vmem:[%s5 + $0x78] sm:$0xff] %vm380, %v428
  // Predicated region
  $region10: #{gat_layer_forward.2} parent=0 // pred_check
    _
  $region11: #{gat_layer_forward.2} parent=0 // pred_check_branch
    %462 = sbr.rel (0) target = $region13
  $region12: #{gat_layer_forward.2} parent=0 // pred_region
    _
  $region13: #{gat_layer_forward.2} parent=0 // pred_fallthru
    _
  // Predicated region
  $region14: #{gat_layer_forward.2} parent=0 // pred_check
    _
  $region15: #{gat_layer_forward.2} parent=0 // pred_check_branch
    %464 = sbr.rel (0) target = $region17
  $region16: #{gat_layer_forward.2} parent=0 // pred_region
    _
  $region17: #{gat_layer_forward.2} parent=0 // pred_fallthru
    _
  // Predicated region
  $region18: #{gat_layer_forward.2} parent=0 // pred_check
    _
  $region19: #{gat_layer_forward.2} parent=0 // pred_check_branch
    %466 = sbr.rel (0) target = $region21
  $region20: #{gat_layer_forward.2} parent=0 // pred_region
    _
  $region21: #{gat_layer_forward.2} parent=0 // pred_fallthru
    _
  // Predicated region
  $region22: #{gat_layer_forward.2} parent=0 // pred_check
    _
  $region23: #{gat_layer_forward.2} parent=0 // pred_check_branch
    %468 = sbr.rel (0) target = $region25
  $region24: #{gat_layer_forward.2} parent=0 // pred_region
    _
  $region25: #{gat_layer_forward.2} parent=0 // pred_fallthru
    _
  // Predicated region
  $region26: #{gat_layer_forward.2} parent=0 // pred_check
    _
  $region27: #{gat_layer_forward.2} parent=0 // pred_check_branch
    %470 = sbr.rel (0) target = $region29
  $region28: #{gat_layer_forward.2} parent=0 // pred_region
    _
  $region29: #{gat_layer_forward.2} parent=0 // pred_fallthru
    _
  // Predicated region
  $region30: #{gat_layer_forward.2} parent=0 // pred_check
    _
  $region31: #{gat_layer_forward.2} parent=0 // pred_check_branch
    %472 = sbr.rel (0) target = $region33
  $region32: #{gat_layer_forward.2} parent=0 // pred_region
    _
  $region33: #{gat_layer_forward.2} parent=0 // pred_fallthru
    _
  // Predicated region
  $region34: #{gat_layer_forward.2} parent=0 // pred_check
    _
  $region35: #{gat_layer_forward.2} parent=0 // pred_check_branch
    %474 = sbr.rel (0) target = $region37
  $region36: #{gat_layer_forward.2} parent=0 // pred_region
    _
  $region37: #{gat_layer_forward.2} parent=0 // pred_fallthru
    _
  // Predicated region
  $region38: #{gat_layer_forward.2} parent=0 // pred_check
    _
  $region39: #{gat_layer_forward.2} parent=0 // pred_check_branch
    %476 = sbr.rel (0) target = $region41
  $region40: #{gat_layer_forward.2} parent=0 // pred_region
    _
  $region41: #{gat_layer_forward.2} parent=0 // pred_fallthru
    _

// kernel: gat_layer_forward.3
$region0: #{gat_layer_forward.3}
  #allocation0 [shape = 'u32[]', space=smem, size = 0x4, offset = 0x4, fixed_abs, tag = 'smem constant byte address 0x4 - core index']
  #allocation1 [shape = 'u32[144,128]{1,0:T(1,128)}', space=vmem, size = 0x12000, scoped, tag = 'internal scratch']
  %s0 = inlined_call_operand.vmem [shape: f32[128,4], index: 0, kind: input, shape index: {}]
  %s1 = inlined_call_operand.vmem [shape: f32[4,128], index: 1, kind: input, shape index: {}]
  %s2 = inlined_call_operand.vmem [shape: s8[128,128], index: 2, kind: input, shape index: {}]
  %s3 = inlined_call_operand.vmem [shape: bf16[128,32], index: 3, kind: input, shape index: {}]
  %s4 = inlined_call_operand.vmem [shape: f32[128,32], index: 4, kind: input, shape index: {}]
  %s5 = inlined_call_operand.vmem [shape: f32[1,32], index: 5, kind: input, shape index: {}]
  %s6 = inlined_call_operand.vmem [shape: f32[128,32], index: 6, kind: output, shape index: {}]
  %s7 = sld [smem:[#allocation0]]
  $region34: #{gat_layer_forward.3} parent=0
    _
  %s9 = ssub.s32 1, %s7
  %s10 = scalar_select 0, %s9, %s7
  // Predicated region
  $region2: #{gat_layer_forward.3} parent=0 // pred_check
    _
  $region3: #{gat_layer_forward.3} parent=0 // pred_check_branch
    %12 = sbr.rel (0) target = $region5
  $region4: #{gat_layer_forward.3} parent=0 // pred_region
    _
  $region5: #{gat_layer_forward.3} parent=0 // pred_fallthru
    _
  // Predicated region
  $region6: #{gat_layer_forward.3} parent=0 // pred_check
    _
  $region7: #{gat_layer_forward.3} parent=0 // pred_check_branch
    %14 = sbr.rel (0) target = $region9
  $region8: #{gat_layer_forward.3} parent=0 // pred_region
    _
  $region9: #{gat_layer_forward.3} parent=0 // pred_fallthru
    _
  // Predicated region
  $region10: #{gat_layer_forward.3} parent=0 // pred_check
    _
  $region11: #{gat_layer_forward.3} parent=0 // pred_check_branch
    %16 = sbr.rel (0) target = $region13
  $region12: #{gat_layer_forward.3} parent=0 // pred_region
    _
  $region13: #{gat_layer_forward.3} parent=0 // pred_fallthru
    _
  // Predicated region
  $region14: #{gat_layer_forward.3} parent=0 // pred_check
    _
  $region15: #{gat_layer_forward.3} parent=0 // pred_check_branch
    %18 = sbr.rel (0) target = $region17
  $region16: #{gat_layer_forward.3} parent=0 // pred_region
    _
  $region17: #{gat_layer_forward.3} parent=0 // pred_fallthru
    _
  // Predicated region
  $region18: #{gat_layer_forward.3} parent=0 // pred_check
    _
  $region19: #{gat_layer_forward.3} parent=0 // pred_check_branch
    %20 = sbr.rel (0) target = $region21
  $region20: #{gat_layer_forward.3} parent=0 // pred_region
    _
  $region21: #{gat_layer_forward.3} parent=0 // pred_fallthru
    _
  // Predicated region
  $region22: #{gat_layer_forward.3} parent=0 // pred_check
    _
  $region23: #{gat_layer_forward.3} parent=0 // pred_check_branch
    %22 = sbr.rel (0) target = $region25
  $region24: #{gat_layer_forward.3} parent=0 // pred_region
    _
  $region25: #{gat_layer_forward.3} parent=0 // pred_fallthru
    _
  %v26 = vld [vmem:[%s0] sm:$0xff]
  %v27 = vld [vmem:[%s0 + $0x8] sm:$0xff]
  %v28 = vld [vmem:[%s0 + $0x10] sm:$0xff]
  %v29 = vld [vmem:[%s0 + $0x18] sm:$0xff]
  %v30 = vld [vmem:[%s0 + $0x20] sm:$0xff]
  %v31 = vld [vmem:[%s0 + $0x28] sm:$0xff]
  %v32 = vld [vmem:[%s0 + $0x30] sm:$0xff]
  %v33 = vld [vmem:[%s0 + $0x38] sm:$0xff]
  %v34 = vld [vmem:[%s0 + $0x40] sm:$0xff]
  %v35 = vld [vmem:[%s0 + $0x48] sm:$0xff]
  %v36 = vld [vmem:[%s0 + $0x50] sm:$0xff]
  %v37 = vld [vmem:[%s0 + $0x58] sm:$0xff]
  %v38 = vld [vmem:[%s0 + $0x60] sm:$0xff]
  %v39 = vld [vmem:[%s0 + $0x68] sm:$0xff]
  %v40 = vld [vmem:[%s0 + $0x70] sm:$0xff]
  %v41 = vld [vmem:[%s0 + $0x78] sm:$0xff]
  %v42 = vld [vmem:[%s1] sm:$0xf]
  %v43 = vld [vmem:[%s2] sm:$0xff]
  %v44 = vld [vmem:[%s2 + $0x8] sm:$0xff]
  %v45 = vld [vmem:[%s2 + $0x10] sm:$0xff]
  %v46 = vld [vmem:[%s2 + $0x18] sm:$0xff]
  %vm47 = vnez %v43
  %vm48 = vnez %v44
  %vm49 = vnez %v45
  %vm50 = vnez %v46
  %52 = vset.pattern.permute.xlu0 0
  %53 = vperm.xlu0 %52, %v26
  %v54 = vpop.permute.xlu0 %53
  %57 = vset.pattern.permute.xlu0 0
  %58 = vperm.xlu0 %57, %v27
  %v59 = vpop.permute.xlu0 %58
  %62 = vset.pattern.permute.xlu0 0
  %63 = vperm.xlu0 %62, %v28
  %v64 = vpop.permute.xlu0 %63
  %67 = vset.pattern.permute.xlu0 0
  %68 = vperm.xlu0 %67, %v29
  %v69 = vpop.permute.xlu0 %68
  %72 = vset.pattern.permute.xlu0 0
  %73 = vperm.xlu0 %72, %v30
  %v74 = vpop.permute.xlu0 %73
  %77 = vset.pattern.permute.xlu0 0
  %78 = vperm.xlu0 %77, %v31
  %v79 = vpop.permute.xlu0 %78
  %82 = vset.pattern.permute.xlu0 0
  %83 = vperm.xlu0 %82, %v32
  %v84 = vpop.permute.xlu0 %83
  %87 = vset.pattern.permute.xlu0 0
  %88 = vperm.xlu0 %87, %v33
  %v89 = vpop.permute.xlu0 %88
  %92 = vset.pattern.permute.xlu0 0
  %93 = vperm.xlu0 %92, %v34
  %v94 = vpop.permute.xlu0 %93
  %97 = vset.pattern.permute.xlu0 0
  %98 = vperm.xlu0 %97, %v35
  %v99 = vpop.permute.xlu0 %98
  %102 = vset.pattern.permute.xlu0 0
  %103 = vperm.xlu0 %102, %v36
  %v104 = vpop.permute.xlu0 %103
  %107 = vset.pattern.permute.xlu0 0
  %108 = vperm.xlu0 %107, %v37
  %v109 = vpop.permute.xlu0 %108
  %112 = vset.pattern.permute.xlu0 0
  %113 = vperm.xlu0 %112, %v38
  %v114 = vpop.permute.xlu0 %113
  %117 = vset.pattern.permute.xlu0 0
  %118 = vperm.xlu0 %117, %v39
  %v119 = vpop.permute.xlu0 %118
  %122 = vset.pattern.permute.xlu0 0
  %123 = vperm.xlu0 %122, %v40
  %v124 = vpop.permute.xlu0 %123
  %127 = vset.pattern.permute.xlu0 0
  %128 = vperm.xlu0 %127, %v41
  %v129 = vpop.permute.xlu0 %128
  %v131 = vlaneseq
  %v132 = vshrl.u32 %v131, 7
  %v133 = vsub.s32 0, %v132
  %v134 = vrot.slane %v42, %v133
  %v135 = vadd.f32 %v54, %v134
  %v136 = vadd.f32 %v59, %v134
  %v137 = vadd.f32 %v64, %v134
  %v138 = vadd.f32 %v69, %v134
  %v139 = vadd.f32 %v74, %v134
  %v140 = vadd.f32 %v79, %v134
  %v141 = vadd.f32 %v84, %v134
  %v142 = vadd.f32 %v89, %v134
  %v143 = vadd.f32 %v94, %v134
  %v144 = vadd.f32 %v99, %v134
  %v145 = vadd.f32 %v104, %v134
  %v146 = vadd.f32 %v109, %v134
  %v147 = vadd.f32 %v114, %v134
  %v148 = vadd.f32 %v119, %v134
  %v149 = vadd.f32 %v124, %v134
  %v150 = vadd.f32 %v129, %v134
  %vm151 = vcmp.ge.f32.partialorder %v135, 0.0
  %vm152 = vcmp.ge.f32.partialorder %v136, 0.0
  %vm153 = vcmp.ge.f32.partialorder %v137, 0.0
  %vm154 = vcmp.ge.f32.partialorder %v138, 0.0
  %vm155 = vcmp.ge.f32.partialorder %v139, 0.0
  %vm156 = vcmp.ge.f32.partialorder %v140, 0.0
  %vm157 = vcmp.ge.f32.partialorder %v141, 0.0
  %vm158 = vcmp.ge.f32.partialorder %v142, 0.0
  %vm159 = vcmp.ge.f32.partialorder %v143, 0.0
  %vm160 = vcmp.ge.f32.partialorder %v144, 0.0
  %vm161 = vcmp.ge.f32.partialorder %v145, 0.0
  %vm162 = vcmp.ge.f32.partialorder %v146, 0.0
  %vm163 = vcmp.ge.f32.partialorder %v147, 0.0
  %vm164 = vcmp.ge.f32.partialorder %v148, 0.0
  %vm165 = vcmp.ge.f32.partialorder %v149, 0.0
  %vm166 = vcmp.ge.f32.partialorder %v150, 0.0
  %v167 = vmul.f32 %v135, 0.2
  %v168 = vmul.f32 %v136, 0.2
  %v169 = vmul.f32 %v137, 0.2
  %v170 = vmul.f32 %v138, 0.2
  %v171 = vmul.f32 %v139, 0.2
  %v172 = vmul.f32 %v140, 0.2
  %v173 = vmul.f32 %v141, 0.2
  %v174 = vmul.f32 %v142, 0.2
  %v175 = vmul.f32 %v143, 0.2
  %v176 = vmul.f32 %v144, 0.2
  %v177 = vmul.f32 %v145, 0.2
  %v178 = vmul.f32 %v146, 0.2
  %v179 = vmul.f32 %v147, 0.2
  %v180 = vmul.f32 %v148, 0.2
  %v181 = vmul.f32 %v149, 0.2
  %v182 = vmul.f32 %v150, 0.2
  %v183 = vsel %vm151, %v135, %v167
  %v184 = vsel %vm152, %v136, %v168
  %v185 = vsel %vm153, %v137, %v169
  %v186 = vsel %vm154, %v138, %v170
  %v187 = vsel %vm155, %v139, %v171
  %v188 = vsel %vm156, %v140, %v172
  %v189 = vsel %vm157, %v141, %v173
  %v190 = vsel %vm158, %v142, %v174
  %v191 = vsel %vm159, %v143, %v175
  %v192 = vsel %vm160, %v144, %v176
  %v193 = vsel %vm161, %v145, %v177
  %v194 = vsel %vm162, %v146, %v178
  %v195 = vsel %vm163, %v147, %v179
  %v196 = vsel %vm164, %v148, %v180
  %v197 = vsel %vm165, %v149, %v181
  %v198 = vsel %vm166, %v150, %v182
  %v199 = vsel %vm47, 16843009, 0
  %v200 = vsel %vm48, 16843009, 0
  %v201 = vsel %vm49, 16843009, 0
  %v202 = vsel %vm50, 16843009, 0
  %v203 = vunpack.c.0.s8 %v199
  %v204 = vunpack.c.1.s8 %v199
  %v205 = vunpack.c.2.s8 %v199
  %v206 = vunpack.c.3.s8 %v199
  %v207 = vunpack.c.0.s8 %v200
  %v208 = vunpack.c.1.s8 %v200
  %v209 = vunpack.c.2.s8 %v200
  %v210 = vunpack.c.3.s8 %v200
  %v211 = vunpack.c.0.s8 %v201
  %v212 = vunpack.c.1.s8 %v201
  %v213 = vunpack.c.2.s8 %v201
  %v214 = vunpack.c.3.s8 %v201
  %v215 = vunpack.c.0.s8 %v202
  %v216 = vunpack.c.1.s8 %v202
  %v217 = vunpack.c.2.s8 %v202
  %v218 = vunpack.c.3.s8 %v202
  %v219 = vpack.c.b16 %v203, %v203
  %v220 = vpack.c.b8 %v219, %v219
  %v221 = vpack.c.b16 %v204, %v204
  %v222 = vpack.c.b8 %v221, %v221
  %v223 = vpack.c.b16 %v205, %v205
  %v224 = vpack.c.b8 %v223, %v223
  %v225 = vpack.c.b16 %v206, %v206
  %v226 = vpack.c.b8 %v225, %v225
  %v227 = vpack.c.b16 %v207, %v207
  %v228 = vpack.c.b8 %v227, %v227
  %v229 = vpack.c.b16 %v208, %v208
  %v230 = vpack.c.b8 %v229, %v229
  %v231 = vpack.c.b16 %v209, %v209
  %v232 = vpack.c.b8 %v231, %v231
  %v233 = vpack.c.b16 %v210, %v210
  %v234 = vpack.c.b8 %v233, %v233
  %v235 = vpack.c.b16 %v211, %v211
  %v236 = vpack.c.b8 %v235, %v235
  %v237 = vpack.c.b16 %v212, %v212
  %v238 = vpack.c.b8 %v237, %v237
  %v239 = vpack.c.b16 %v213, %v213
  %v240 = vpack.c.b8 %v239, %v239
  %v241 = vpack.c.b16 %v214, %v214
  %v242 = vpack.c.b8 %v241, %v241
  %v243 = vpack.c.b16 %v215, %v215
  %v244 = vpack.c.b8 %v243, %v243
  %v245 = vpack.c.b16 %v216, %v216
  %v246 = vpack.c.b8 %v245, %v245
  %v247 = vpack.c.b16 %v217, %v217
  %v248 = vpack.c.b8 %v247, %v247
  %v249 = vpack.c.b16 %v218, %v218
  %v250 = vpack.c.b8 %v249, %v249
  %vm251 = vnez %v220
  %vm252 = vnez %v222
  %vm253 = vnez %v224
  %vm254 = vnez %v226
  %vm255 = vnez %v228
  %vm256 = vnez %v230
  %vm257 = vnez %v232
  %vm258 = vnez %v234
  %vm259 = vnez %v236
  %vm260 = vnez %v238
  %vm261 = vnez %v240
  %vm262 = vnez %v242
  %vm263 = vnez %v244
  %vm264 = vnez %v246
  %vm265 = vnez %v248
  %vm266 = vnez %v250
  %v267 = vsel %vm251, 16843009, 0
  %v268 = vsel %vm252, 16843009, 0
  %v269 = vsel %vm253, 16843009, 0
  %v270 = vsel %vm254, 16843009, 0
  %v271 = vsel %vm255, 16843009, 0
  %v272 = vsel %vm256, 16843009, 0
  %v273 = vsel %vm257, 16843009, 0
  %v274 = vsel %vm258, 16843009, 0
  %v275 = vsel %vm259, 16843009, 0
  %v276 = vsel %vm260, 16843009, 0
  %v277 = vsel %vm261, 16843009, 0
  %v278 = vsel %vm262, 16843009, 0
  %v279 = vsel %vm263, 16843009, 0
  %v280 = vsel %vm264, 16843009, 0
  %v281 = vsel %vm265, 16843009, 0
  %v282 = vsel %vm266, 16843009, 0
  %v283 = vunpack.c.0.s8 %v267
  %v284 = vunpack.c.0.s8 %v268
  %v285 = vunpack.c.0.s8 %v269
  %v286 = vunpack.c.0.s8 %v270
  %v287 = vunpack.c.0.s8 %v271
  %v288 = vunpack.c.0.s8 %v272
  %v289 = vunpack.c.0.s8 %v273
  %v290 = vunpack.c.0.s8 %v274
  %v291 = vunpack.c.0.s8 %v275
  %v292 = vunpack.c.0.s8 %v276
  %v293 = vunpack.c.0.s8 %v277
  %v294 = vunpack.c.0.s8 %v278
  %v295 = vunpack.c.0.s8 %v279
  %v296 = vunpack.c.0.s8 %v280
  %v297 = vunpack.c.0.s8 %v281
  %v298 = vunpack.c.0.s8 %v282
  %vm299 = vcmp.ne.s32.totalorder %v283, 0
  %vm300 = vcmp.ne.s32.totalorder %v284, 0
  %vm301 = vcmp.ne.s32.totalorder %v285, 0
  %vm302 = vcmp.ne.s32.totalorder %v286, 0
  %vm303 = vcmp.ne.s32.totalorder %v287, 0
  %vm304 = vcmp.ne.s32.totalorder %v288, 0
  %vm305 = vcmp.ne.s32.totalorder %v289, 0
  %vm306 = vcmp.ne.s32.totalorder %v290, 0
  %vm307 = vcmp.ne.s32.totalorder %v291, 0
  %vm308 = vcmp.ne.s32.totalorder %v292, 0
  %vm309 = vcmp.ne.s32.totalorder %v293, 0
  %vm310 = vcmp.ne.s32.totalorder %v294, 0
  %vm311 = vcmp.ne.s32.totalorder %v295, 0
  %vm312 = vcmp.ne.s32.totalorder %v296, 0
  %vm313 = vcmp.ne.s32.totalorder %v297, 0
  %vm314 = vcmp.ne.s32.totalorder %v298, 0
  %v315 = vsel %vm299, %v183, -1e+09
  %v316 = vsel %vm300, %v184, -1e+09
  %v317 = vsel %vm301, %v185, -1e+09
  %v318 = vsel %vm302, %v186, -1e+09
  %v319 = vsel %vm303, %v187, -1e+09
  %v320 = vsel %vm304, %v188, -1e+09
  %v321 = vsel %vm305, %v189, -1e+09
  %v322 = vsel %vm306, %v190, -1e+09
  %v323 = vsel %vm307, %v191, -1e+09
  %v324 = vsel %vm308, %v192, -1e+09
  %v325 = vsel %vm309, %v193, -1e+09
  %v326 = vsel %vm310, %v194, -1e+09
  %v327 = vsel %vm311, %v195, -1e+09
  %v328 = vsel %vm312, %v196, -1e+09
  %v329 = vsel %vm313, %v197, -1e+09
  %v330 = vsel %vm314, %v198, -1e+09
  %331 = vmax.xlane.f32.xlu0 %v315
  %v332 = vpop.xlane.xlu0 %331
  %333 = vmax.xlane.f32.xlu0 %v316
  %v334 = vpop.xlane.xlu0 %333
  %335 = vmax.xlane.f32.xlu0 %v317
  %v336 = vpop.xlane.xlu0 %335
  %337 = vmax.xlane.f32.xlu0 %v318
  %v338 = vpop.xlane.xlu0 %337
  %339 = vmax.xlane.f32.xlu0 %v319
  %v340 = vpop.xlane.xlu0 %339
  %341 = vmax.xlane.f32.xlu0 %v320
  %v342 = vpop.xlane.xlu0 %341
  %343 = vmax.xlane.f32.xlu0 %v321
  %v344 = vpop.xlane.xlu0 %343
  %345 = vmax.xlane.f32.xlu0 %v322
  %v346 = vpop.xlane.xlu0 %345
  %347 = vmax.xlane.f32.xlu0 %v323
  %v348 = vpop.xlane.xlu0 %347
  %349 = vmax.xlane.f32.xlu0 %v324
  %v350 = vpop.xlane.xlu0 %349
  %351 = vmax.xlane.f32.xlu0 %v325
  %v352 = vpop.xlane.xlu0 %351
  %353 = vmax.xlane.f32.xlu0 %v326
  %v354 = vpop.xlane.xlu0 %353
  %355 = vmax.xlane.f32.xlu0 %v327
  %v356 = vpop.xlane.xlu0 %355
  %357 = vmax.xlane.f32.xlu0 %v328
  %v358 = vpop.xlane.xlu0 %357
  %359 = vmax.xlane.f32.xlu0 %v329
  %v360 = vpop.xlane.xlu0 %359
  %361 = vmax.xlane.f32.xlu0 %v330
  %v362 = vpop.xlane.xlu0 %361
  %v363 = vsub.f32 %v315, %v332
  %v364 = vsub.f32 %v316, %v334
  %v365 = vsub.f32 %v317, %v336
  %v366 = vsub.f32 %v318, %v338
  %v367 = vsub.f32 %v319, %v340
  %v368 = vsub.f32 %v320, %v342
  %v369 = vsub.f32 %v321, %v344
  %v370 = vsub.f32 %v322, %v346
  %v371 = vsub.f32 %v323, %v348
  %v372 = vsub.f32 %v324, %v350
  %v373 = vsub.f32 %v325, %v352
  %v374 = vsub.f32 %v326, %v354
  %v375 = vsub.f32 %v327, %v356
  %v376 = vsub.f32 %v328, %v358
  %v377 = vsub.f32 %v329, %v360
  %v378 = vsub.f32 %v330, %v362
  %v379 = vmul.f32 %v363, 1.442695
  %v380 = vpow.pop %v379
  %v381 = vmul.f32 %v364, 1.442695
  %v382 = vpow.pop %v381
  %v383 = vmul.f32 %v365, 1.442695
  %v384 = vpow.pop %v383
  %v385 = vmul.f32 %v366, 1.442695
  %v386 = vpow.pop %v385
  %v387 = vmul.f32 %v367, 1.442695
  %v388 = vpow.pop %v387
  %v389 = vmul.f32 %v368, 1.442695
  %v390 = vpow.pop %v389
  %v391 = vmul.f32 %v369, 1.442695
  %v392 = vpow.pop %v391
  %v393 = vmul.f32 %v370, 1.442695
  %v394 = vpow.pop %v393
  %v395 = vmul.f32 %v371, 1.442695
  %v396 = vpow.pop %v395
  %v397 = vmul.f32 %v372, 1.442695
  %v398 = vpow.pop %v397
  %v399 = vmul.f32 %v373, 1.442695
  %v400 = vpow.pop %v399
  %v401 = vmul.f32 %v374, 1.442695
  %v402 = vpow.pop %v401
  %v403 = vmul.f32 %v375, 1.442695
  %v404 = vpow.pop %v403
  %v405 = vmul.f32 %v376, 1.442695
  %v406 = vpow.pop %v405
  %v407 = vmul.f32 %v377, 1.442695
  %v408 = vpow.pop %v407
  %v409 = vmul.f32 %v378, 1.442695
  %v410 = vpow.pop %v409
  %411 = vadd.xlane.f32.xlu0 %v380
  %v412 = vpop.xlane.xlu0 %411
  %413 = vadd.xlane.f32.xlu0 %v382
  %v414 = vpop.xlane.xlu0 %413
  %415 = vadd.xlane.f32.xlu0 %v384
  %v416 = vpop.xlane.xlu0 %415
  %417 = vadd.xlane.f32.xlu0 %v386
  %v418 = vpop.xlane.xlu0 %417
  %419 = vadd.xlane.f32.xlu0 %v388
  %v420 = vpop.xlane.xlu0 %419
  %421 = vadd.xlane.f32.xlu0 %v390
  %v422 = vpop.xlane.xlu0 %421
  %423 = vadd.xlane.f32.xlu0 %v392
  %v424 = vpop.xlane.xlu0 %423
  %425 = vadd.xlane.f32.xlu0 %v394
  %v426 = vpop.xlane.xlu0 %425
  %427 = vadd.xlane.f32.xlu0 %v396
  %v428 = vpop.xlane.xlu0 %427
  %429 = vadd.xlane.f32.xlu0 %v398
  %v430 = vpop.xlane.xlu0 %429
  %431 = vadd.xlane.f32.xlu0 %v400
  %v432 = vpop.xlane.xlu0 %431
  %433 = vadd.xlane.f32.xlu0 %v402
  %v434 = vpop.xlane.xlu0 %433
  %435 = vadd.xlane.f32.xlu0 %v404
  %v436 = vpop.xlane.xlu0 %435
  %437 = vadd.xlane.f32.xlu0 %v406
  %v438 = vpop.xlane.xlu0 %437
  %439 = vadd.xlane.f32.xlu0 %v408
  %v440 = vpop.xlane.xlu0 %439
  %441 = vadd.xlane.f32.xlu0 %v410
  %v442 = vpop.xlane.xlu0 %441
  %v443 = vpack.c.bf16 %v382, %v380
  %v444 = vpack.c.bf16 %v386, %v384
  %v445 = vpack.c.bf16 %v390, %v388
  %v446 = vpack.c.bf16 %v394, %v392
  %v447 = vpack.c.bf16 %v398, %v396
  %v448 = vpack.c.bf16 %v402, %v400
  %v449 = vpack.c.bf16 %v406, %v404
  %v450 = vpack.c.bf16 %v410, %v408
  %v451 = vld [vmem:[%s3] sm:$0xf]
  %v452 = vld [vmem:[%s3 + $0x4] sm:$0xf]
  %v453 = vld [vmem:[%s3 + $0x8] sm:$0xf]
  %v454 = vld [vmem:[%s3 + $0xc] sm:$0xf]
  %v455 = vld [vmem:[%s3 + $0x10] sm:$0xf]
  %v456 = vld [vmem:[%s3 + $0x14] sm:$0xf]
  %v457 = vld [vmem:[%s3 + $0x18] sm:$0xf]
  %v458 = vld [vmem:[%s3 + $0x1c] sm:$0xf]
  %v459 = vld [vmem:[%s3 + $0x20] sm:$0xf]
  %v460 = vld [vmem:[%s3 + $0x24] sm:$0xf]
  %v461 = vld [vmem:[%s3 + $0x28] sm:$0xf]
  %v462 = vld [vmem:[%s3 + $0x2c] sm:$0xf]
  %v463 = vld [vmem:[%s3 + $0x30] sm:$0xf]
  %v464 = vld [vmem:[%s3 + $0x34] sm:$0xf]
  %v465 = vld [vmem:[%s3 + $0x38] sm:$0xf]
  %v466 = vld [vmem:[%s3 + $0x3c] sm:$0xf]
  %v483 = vunpack.c.l.b16 %v451
  %v484 = vunpack.c.l.b16 %v452
  %v485 = vunpack.c.l.b16 %v453
  %v486 = vunpack.c.l.b16 %v454
  %v487 = vunpack.c.l.b16 %v455
  %v488 = vunpack.c.l.b16 %v456
  %v489 = vunpack.c.l.b16 %v457
  %v490 = vunpack.c.l.b16 %v458
  %v491 = vunpack.c.l.b16 %v459
  %v492 = vunpack.c.l.b16 %v460
  %v493 = vunpack.c.l.b16 %v461
  %v494 = vunpack.c.l.b16 %v462
  %v495 = vunpack.c.l.b16 %v463
  %v496 = vunpack.c.l.b16 %v464
  %v497 = vunpack.c.l.b16 %v465
  %v498 = vunpack.c.l.b16 %v466
  %v499 = vpack.c.b16 %v484, %v483
  %v500 = vpack.c.b16 %v486, %v485
  %v501 = vpack.c.b16 %v488, %v487
  %v502 = vpack.c.b16 %v490, %v489
  %v503 = vpack.c.b16 %v492, %v491
  %v504 = vpack.c.b16 %v494, %v493
  %v505 = vpack.c.b16 %v496, %v495
  %v506 = vpack.c.b16 %v498, %v497
  %515 = vmatprep.subr.bf16.mxu0 0
  %516 = vmatpush1.bf16.msra.mxu0 %v499
  %517 = vmatprep.subr.bf16.mxu0 0
  %518 = vmatpush1.bf16.msra.mxu0 %v500
  %519 = vmatprep.subr.bf16.mxu0 0
  %520 = vmatpush1.bf16.msra.mxu0 %v501
  %521 = vmatprep.subr.bf16.mxu0 0
  %522 = vmatpush1.bf16.msra.mxu0 %v502
  %523 = vmatprep.subr.bf16.mxu0 0
  %524 = vmatpush1.bf16.msra.mxu0 %v503
  %525 = vmatprep.subr.bf16.mxu0 0
  %526 = vmatpush1.bf16.msra.mxu0 %v504
  %527 = vmatprep.subr.bf16.mxu0 0
  %528 = vmatpush1.bf16.msra.mxu0 %v505
  %529 = vmatprep.subr.bf16.mxu0 0
  %530 = vmatpush1.bf16.msra.mxu0 %v506
  %531 = vmatprep.subr.bf16.mxu0 0
  %532 = vmatpush1.bf16.msra.mxu0 0
  %533 = vmatprep.subr.bf16.mxu0 0
  %534 = vmatpush1.bf16.msra.mxu0 0
  %535 = vmatprep.subr.bf16.mxu0 0
  %536 = vmatpush1.bf16.msra.mxu0 0
  %537 = vmatprep.subr.bf16.mxu0 0
  %538 = vmatpush1.bf16.msra.mxu0 0
  %539 = vmatprep.subr.bf16.mxu0 0
  %540 = vmatpush1.bf16.msra.mxu0 0
  %541 = vmatprep.subr.bf16.mxu0 0
  %542 = vmatpush1.bf16.msra.mxu0 0
  %543 = vmatprep.subr.bf16.mxu0 0
  %544 = vmatpush1.bf16.msra.mxu0 0
  %545 = vmatprep.subr.bf16.mxu0 0
  %546 = vmatpush1.bf16.msra.mxu0 0
  %547 = vmatprep.mubr.bf16.mxu0 0
  %548 = vmatmul.mubr.bf16.gmra.mrb[0].mxu0 %v443
  %v549 = vpop.f32.mrb[0].mxu0
  %v550 = vadd.f32 0.0, %v549
  %v551 = vpop.f32.mrb[0].mxu0
  %v552 = vpop.f32.mrb[0].mxu0
  %v553 = vadd.f32 0.0, %v552
  %v554 = vpop.f32.mrb[0].mxu0
  %555 = vmatprep.mubr.bf16.mxu0 0
  %556 = vmatmul.mubr.bf16.gmra.mrb[0].mxu0 %v444
  %v557 = vpop.f32.mrb[0].mxu0
  %v558 = vadd.f32 0.0, %v557
  %v559 = vpop.f32.mrb[0].mxu0
  %v560 = vpop.f32.mrb[0].mxu0
  %v561 = vadd.f32 0.0, %v560
  %v562 = vpop.f32.mrb[0].mxu0
  %563 = vmatprep.mubr.bf16.mxu0 0
  %564 = vmatmul.mubr.bf16.gmra.mrb[0].mxu0 %v445
  %v565 = vpop.f32.mrb[0].mxu0
  %v566 = vadd.f32 0.0, %v565
  %v567 = vpop.f32.mrb[0].mxu0
  %v568 = vpop.f32.mrb[0].mxu0
  %v569 = vadd.f32 0.0, %v568
  %v570 = vpop.f32.mrb[0].mxu0
  %571 = vmatprep.mubr.bf16.mxu0 0
  %572 = vmatmul.mubr.bf16.gmra.mrb[0].mxu0 %v446
  %v573 = vpop.f32.mrb[0].mxu0
  %v574 = vadd.f32 0.0, %v573
  %v575 = vpop.f32.mrb[0].mxu0
  %v576 = vpop.f32.mrb[0].mxu0
  %v577 = vadd.f32 0.0, %v576
  %v578 = vpop.f32.mrb[0].mxu0
  %579 = vmatprep.mubr.bf16.mxu0 0
  %580 = vmatmul.mubr.bf16.gmra.mrb[0].mxu0 %v447
  %v581 = vpop.f32.mrb[0].mxu0
  %v582 = vadd.f32 0.0, %v581
  %v583 = vpop.f32.mrb[0].mxu0
  %v584 = vpop.f32.mrb[0].mxu0
  %v585 = vadd.f32 0.0, %v584
  %v586 = vpop.f32.mrb[0].mxu0
  %587 = vmatprep.mubr.bf16.mxu0 0
  %588 = vmatmul.mubr.bf16.gmra.mrb[0].mxu0 %v448
  %v589 = vpop.f32.mrb[0].mxu0
  %v590 = vadd.f32 0.0, %v589
  %v591 = vpop.f32.mrb[0].mxu0
  %v592 = vpop.f32.mrb[0].mxu0
  %v593 = vadd.f32 0.0, %v592
  %v594 = vpop.f32.mrb[0].mxu0
  %595 = vmatprep.mubr.bf16.mxu0 0
  %596 = vmatmul.mubr.bf16.gmra.mrb[0].mxu0 %v449
  %v597 = vpop.f32.mrb[0].mxu0
  %v598 = vadd.f32 0.0, %v597
  %v599 = vpop.f32.mrb[0].mxu0
  %v600 = vpop.f32.mrb[0].mxu0
  %v601 = vadd.f32 0.0, %v600
  %v602 = vpop.f32.mrb[0].mxu0
  %603 = vmatprep.mubr.bf16.mxu0 0
  %604 = vmatmul.mubr.bf16.gmra.mrb[0].mxu0 %v450
  %v605 = vpop.f32.mrb[0].mxu0
  %v606 = vadd.f32 0.0, %v605
  %v607 = vpop.f32.mrb[0].mxu0
  %v608 = vpop.f32.mrb[0].mxu0
  %v609 = vadd.f32 0.0, %v608
  %v610 = vpop.f32.mrb[0].mxu0
  %611 = vdwg.mxu0
  %v612 = vrcp.pop %v412
  %v613 = vmul.f32 %v550, %v612
  %v614 = vrcp.pop %v414
  %v615 = vmul.f32 %v553, %v614
  %v616 = vrcp.pop %v416
  %v617 = vmul.f32 %v558, %v616
  %v618 = vrcp.pop %v418
  %v619 = vmul.f32 %v561, %v618
  %v620 = vrcp.pop %v420
  %v621 = vmul.f32 %v566, %v620
  %v622 = vrcp.pop %v422
  %v623 = vmul.f32 %v569, %v622
  %v624 = vrcp.pop %v424
  %v625 = vmul.f32 %v574, %v624
  %v626 = vrcp.pop %v426
  %v627 = vmul.f32 %v577, %v626
  %v628 = vrcp.pop %v428
  %v629 = vmul.f32 %v582, %v628
  %v630 = vrcp.pop %v430
  %v631 = vmul.f32 %v585, %v630
  %v632 = vrcp.pop %v432
  %v633 = vmul.f32 %v590, %v632
  %v634 = vrcp.pop %v434
  %v635 = vmul.f32 %v593, %v634
  %v636 = vrcp.pop %v436
  %v637 = vmul.f32 %v598, %v636
  %v638 = vrcp.pop %v438
  %v639 = vmul.f32 %v601, %v638
  %v640 = vrcp.pop %v440
  %v641 = vmul.f32 %v606, %v640
  %v642 = vrcp.pop %v442
  %v643 = vmul.f32 %v609, %v642
  %v644 = vld [vmem:[%s4] sm:$0xff]
  %v645 = vld [vmem:[%s4 + $0x8] sm:$0xff]
  %v646 = vld [vmem:[%s4 + $0x10] sm:$0xff]
  %v647 = vld [vmem:[%s4 + $0x18] sm:$0xff]
  %v648 = vld [vmem:[%s4 + $0x20] sm:$0xff]
  %v649 = vld [vmem:[%s4 + $0x28] sm:$0xff]
  %v650 = vld [vmem:[%s4 + $0x30] sm:$0xff]
  %v651 = vld [vmem:[%s4 + $0x38] sm:$0xff]
  %v652 = vld [vmem:[%s4 + $0x40] sm:$0xff]
  %v653 = vld [vmem:[%s4 + $0x48] sm:$0xff]
  %v654 = vld [vmem:[%s4 + $0x50] sm:$0xff]
  %v655 = vld [vmem:[%s4 + $0x58] sm:$0xff]
  %v656 = vld [vmem:[%s4 + $0x60] sm:$0xff]
  %v657 = vld [vmem:[%s4 + $0x68] sm:$0xff]
  %v658 = vld [vmem:[%s4 + $0x70] sm:$0xff]
  %v659 = vld [vmem:[%s4 + $0x78] sm:$0xff]
  %v660 = vadd.f32 %v613, %v644
  %v661 = vadd.f32 %v615, %v645
  %v662 = vadd.f32 %v617, %v646
  %v663 = vadd.f32 %v619, %v647
  %v664 = vadd.f32 %v621, %v648
  %v665 = vadd.f32 %v623, %v649
  %v666 = vadd.f32 %v625, %v650
  %v667 = vadd.f32 %v627, %v651
  %v668 = vadd.f32 %v629, %v652
  %v669 = vadd.f32 %v631, %v653
  %v670 = vadd.f32 %v633, %v654
  %v671 = vadd.f32 %v635, %v655
  %v672 = vadd.f32 %v637, %v656
  %v673 = vadd.f32 %v639, %v657
  %v674 = vadd.f32 %v641, %v658
  %v675 = vadd.f32 %v643, %v659
  %v676 = vld [vmem:[%s5] sm:$0x1]
  %v678 = vlaneseq
  %v679 = vshrl.u32 %v678, 7
  %v680 = vsub.s32 0, %v679
  %v681 = vrot.slane %v676, %v680
  %v683 = vadd.f32 %v660, %v681
  %v684 = vadd.f32 %v661, %v681
  %v685 = vadd.f32 %v662, %v681
  %v686 = vadd.f32 %v663, %v681
  %v687 = vadd.f32 %v664, %v681
  %v688 = vadd.f32 %v665, %v681
  %v689 = vadd.f32 %v666, %v681
  %v690 = vadd.f32 %v667, %v681
  %v691 = vadd.f32 %v668, %v681
  %v692 = vadd.f32 %v669, %v681
  %v693 = vadd.f32 %v670, %v681
  %v694 = vadd.f32 %v671, %v681
  %v695 = vadd.f32 %v672, %v681
  %v696 = vadd.f32 %v673, %v681
  %v697 = vadd.f32 %v674, %v681
  %v698 = vadd.f32 %v675, %v681
  %vm699 = vcmp.gt.f32.partialorder %v683, 0.0
  %vm700 = vcmp.gt.f32.partialorder %v684, 0.0
  %vm701 = vcmp.gt.f32.partialorder %v685, 0.0
  %vm702 = vcmp.gt.f32.partialorder %v686, 0.0
  %vm703 = vcmp.gt.f32.partialorder %v687, 0.0
  %vm704 = vcmp.gt.f32.partialorder %v688, 0.0
  %vm705 = vcmp.gt.f32.partialorder %v689, 0.0
  %vm706 = vcmp.gt.f32.partialorder %v690, 0.0
  %vm707 = vcmp.gt.f32.partialorder %v691, 0.0
  %vm708 = vcmp.gt.f32.partialorder %v692, 0.0
  %vm709 = vcmp.gt.f32.partialorder %v693, 0.0
  %vm710 = vcmp.gt.f32.partialorder %v694, 0.0
  %vm711 = vcmp.gt.f32.partialorder %v695, 0.0
  %vm712 = vcmp.gt.f32.partialorder %v696, 0.0
  %vm713 = vcmp.gt.f32.partialorder %v697, 0.0
  %vm714 = vcmp.gt.f32.partialorder %v698, 0.0
  %v715 = vmin.f32 %v683, 0.0
  %v716 = vmin.f32 %v684, 0.0
  %v717 = vmin.f32 %v685, 0.0
  %v718 = vmin.f32 %v686, 0.0
  %v719 = vmin.f32 %v687, 0.0
  %v720 = vmin.f32 %v688, 0.0
  %v721 = vmin.f32 %v689, 0.0
  %v722 = vmin.f32 %v690, 0.0
  %v723 = vmin.f32 %v691, 0.0
  %v724 = vmin.f32 %v692, 0.0
  %v725 = vmin.f32 %v693, 0.0
  %v726 = vmin.f32 %v694, 0.0
  %v727 = vmin.f32 %v695, 0.0
  %v728 = vmin.f32 %v696, 0.0
  %v729 = vmin.f32 %v697, 0.0
  %v730 = vmin.f32 %v698, 0.0
  %v731 = vmul.f32 %v715, 1.442695
  %v732 = vpow.pop %v731
  %v733 = vmul.f32 %v716, 1.442695
  %v734 = vpow.pop %v733
  %v735 = vmul.f32 %v717, 1.442695
  %v736 = vpow.pop %v735
  %v737 = vmul.f32 %v718, 1.442695
  %v738 = vpow.pop %v737
  %v739 = vmul.f32 %v719, 1.442695
  %v740 = vpow.pop %v739
  %v741 = vmul.f32 %v720, 1.442695
  %v742 = vpow.pop %v741
  %v743 = vmul.f32 %v721, 1.442695
  %v744 = vpow.pop %v743
  %v745 = vmul.f32 %v722, 1.442695
  %v746 = vpow.pop %v745
  %v747 = vmul.f32 %v723, 1.442695
  %v748 = vpow.pop %v747
  %v749 = vmul.f32 %v724, 1.442695
  %v750 = vpow.pop %v749
  %v751 = vmul.f32 %v725, 1.442695
  %v752 = vpow.pop %v751
  %v753 = vmul.f32 %v726, 1.442695
  %v754 = vpow.pop %v753
  %v755 = vmul.f32 %v727, 1.442695
  %v756 = vpow.pop %v755
  %v757 = vmul.f32 %v728, 1.442695
  %v758 = vpow.pop %v757
  %v759 = vmul.f32 %v729, 1.442695
  %v760 = vpow.pop %v759
  %v761 = vmul.f32 %v730, 1.442695
  %v762 = vpow.pop %v761
  %v763 = vsub.f32 %v732, 1.0
  %v764 = vsub.f32 %v734, 1.0
  %v765 = vsub.f32 %v736, 1.0
  %v766 = vsub.f32 %v738, 1.0
  %v767 = vsub.f32 %v740, 1.0
  %v768 = vsub.f32 %v742, 1.0
  %v769 = vsub.f32 %v744, 1.0
  %v770 = vsub.f32 %v746, 1.0
  %v771 = vsub.f32 %v748, 1.0
  %v772 = vsub.f32 %v750, 1.0
  %v773 = vsub.f32 %v752, 1.0
  %v774 = vsub.f32 %v754, 1.0
  %v775 = vsub.f32 %v756, 1.0
  %v776 = vsub.f32 %v758, 1.0
  %v777 = vsub.f32 %v760, 1.0
  %v778 = vsub.f32 %v762, 1.0
  %v779 = vsel %vm699, %v683, %v763
  %v780 = vsel %vm700, %v684, %v764
  %v781 = vsel %vm701, %v685, %v765
  %v782 = vsel %vm702, %v686, %v766
  %v783 = vsel %vm703, %v687, %v767
  %v784 = vsel %vm704, %v688, %v768
  %v785 = vsel %vm705, %v689, %v769
  %v786 = vsel %vm706, %v690, %v770
  %v787 = vsel %vm707, %v691, %v771
  %v788 = vsel %vm708, %v692, %v772
  %v789 = vsel %vm709, %v693, %v773
  %v790 = vsel %vm710, %v694, %v774
  %v791 = vsel %vm711, %v695, %v775
  %v792 = vsel %vm712, %v696, %v776
  %v793 = vsel %vm713, %v697, %v777
  %v794 = vsel %vm714, %v698, %v778
  %vm795 = vcmask 64512
  %796 = vst.msk [vmem:[%s6] sm:$0xff] %vm795, %v779
  %797 = vst.msk [vmem:[%s6 + $0x8] sm:$0xff] %vm795, %v780
  %798 = vst.msk [vmem:[%s6 + $0x10] sm:$0xff] %vm795, %v781
  %799 = vst.msk [vmem:[%s6 + $0x18] sm:$0xff] %vm795, %v782
  %800 = vst.msk [vmem:[%s6 + $0x20] sm:$0xff] %vm795, %v783
  %801 = vst.msk [vmem:[%s6 + $0x28] sm:$0xff] %vm795, %v784
  %802 = vst.msk [vmem:[%s6 + $0x30] sm:$0xff] %vm795, %v785
  %803 = vst.msk [vmem:[%s6 + $0x38] sm:$0xff] %vm795, %v786
  %804 = vst.msk [vmem:[%s6 + $0x40] sm:$0xff] %vm795, %v787
  %805 = vst.msk [vmem:[%s6 + $0x48] sm:$0xff] %vm795, %v788
  %806 = vst.msk [vmem:[%s6 + $0x50] sm:$0xff] %vm795, %v789
  %807 = vst.msk [vmem:[%s6 + $0x58] sm:$0xff] %vm795, %v790
  %808 = vst.msk [vmem:[%s6 + $0x60] sm:$0xff] %vm795, %v791
  %809 = vst.msk [vmem:[%s6 + $0x68] sm:$0xff] %vm795, %v792
  %810 = vst.msk [vmem:[%s6 + $0x70] sm:$0xff] %vm795, %v793
  %811 = vst.msk [vmem:[%s6 + $0x78] sm:$0xff] %vm795, %v794
  %812 = vset.pattern.permute.xlu0 1
  %813 = vperm.xlu0 %812, %v26
  %v814 = vpop.permute.xlu0 %813
  %816 = vset.pattern.permute.xlu0 1
  %817 = vperm.xlu0 %816, %v27
  %v818 = vpop.permute.xlu0 %817
  %820 = vset.pattern.permute.xlu0 1
  %821 = vperm.xlu0 %820, %v28
  %v822 = vpop.permute.xlu0 %821
  %824 = vset.pattern.permute.xlu0 1
  %825 = vperm.xlu0 %824, %v29
  %v826 = vpop.permute.xlu0 %825
  %828 = vset.pattern.permute.xlu0 1
  %829 = vperm.xlu0 %828, %v30
  %v830 = vpop.permute.xlu0 %829
  %832 = vset.pattern.permute.xlu0 1
  %833 = vperm.xlu0 %832, %v31
  %v834 = vpop.permute.xlu0 %833
  %836 = vset.pattern.permute.xlu0 1
  %837 = vperm.xlu0 %836, %v32
  %v838 = vpop.permute.xlu0 %837
  %840 = vset.pattern.permute.xlu0 1
  %841 = vperm.xlu0 %840, %v33
  %v842 = vpop.permute.xlu0 %841
  %844 = vset.pattern.permute.xlu0 1
  %845 = vperm.xlu0 %844, %v34
  %v846 = vpop.permute.xlu0 %845
  %848 = vset.pattern.permute.xlu0 1
  %849 = vperm.xlu0 %848, %v35
  %v850 = vpop.permute.xlu0 %849
  %852 = vset.pattern.permute.xlu0 1
  %853 = vperm.xlu0 %852, %v36
  %v854 = vpop.permute.xlu0 %853
  %856 = vset.pattern.permute.xlu0 1
  %857 = vperm.xlu0 %856, %v37
  %v858 = vpop.permute.xlu0 %857
  %860 = vset.pattern.permute.xlu0 1
  %861 = vperm.xlu0 %860, %v38
  %v862 = vpop.permute.xlu0 %861
  %864 = vset.pattern.permute.xlu0 1
  %865 = vperm.xlu0 %864, %v39
  %v866 = vpop.permute.xlu0 %865
  %868 = vset.pattern.permute.xlu0 1
  %869 = vperm.xlu0 %868, %v40
  %v870 = vpop.permute.xlu0 %869
  %872 = vset.pattern.permute.xlu0 1
  %873 = vperm.xlu0 %872, %v41
  %v874 = vpop.permute.xlu0 %873
  %v876 = vlaneseq
  %v877 = vshrl.u32 %v876, 7
  %v878 = vsub.s32 1, %v877
  %v879 = vrot.slane %v42, %v878
  %v880 = vadd.f32 %v814, %v879
  %v881 = vadd.f32 %v818, %v879
  %v882 = vadd.f32 %v822, %v879
  %v883 = vadd.f32 %v826, %v879
  %v884 = vadd.f32 %v830, %v879
  %v885 = vadd.f32 %v834, %v879
  %v886 = vadd.f32 %v838, %v879
  %v887 = vadd.f32 %v842, %v879
  %v888 = vadd.f32 %v846, %v879
  %v889 = vadd.f32 %v850, %v879
  %v890 = vadd.f32 %v854, %v879
  %v891 = vadd.f32 %v858, %v879
  %v892 = vadd.f32 %v862, %v879
  %v893 = vadd.f32 %v866, %v879
  %v894 = vadd.f32 %v870, %v879
  %v895 = vadd.f32 %v874, %v879
  %vm896 = vcmp.ge.f32.partialorder %v880, 0.0
  %vm897 = vcmp.ge.f32.partialorder %v881, 0.0
  %vm898 = vcmp.ge.f32.partialorder %v882, 0.0
  %vm899 = vcmp.ge.f32.partialorder %v883, 0.0
  %vm900 = vcmp.ge.f32.partialorder %v884, 0.0
  %vm901 = vcmp.ge.f32.partialorder %v885, 0.0
  %vm902 = vcmp.ge.f32.partialorder %v886, 0.0
  %vm903 = vcmp.ge.f32.partialorder %v887, 0.0
  %vm904 = vcmp.ge.f32.partialorder %v888, 0.0
  %vm905 = vcmp.ge.f32.partialorder %v889, 0.0
  %vm906 = vcmp.ge.f32.partialorder %v890, 0.0
  %vm907 = vcmp.ge.f32.partialorder %v891, 0.0
  %vm908 = vcmp.ge.f32.partialorder %v892, 0.0
  %vm909 = vcmp.ge.f32.partialorder %v893, 0.0
  %vm910 = vcmp.ge.f32.partialorder %v894, 0.0
  %vm911 = vcmp.ge.f32.partialorder %v895, 0.0
  %v912 = vmul.f32 %v880, 0.2
  %v913 = vmul.f32 %v881, 0.2
  %v914 = vmul.f32 %v882, 0.2
  %v915 = vmul.f32 %v883, 0.2
  %v916 = vmul.f32 %v884, 0.2
  %v917 = vmul.f32 %v885, 0.2
  %v918 = vmul.f32 %v886, 0.2
  %v919 = vmul.f32 %v887, 0.2
  %v920 = vmul.f32 %v888, 0.2
  %v921 = vmul.f32 %v889, 0.2
  %v922 = vmul.f32 %v890, 0.2
  %v923 = vmul.f32 %v891, 0.2
  %v924 = vmul.f32 %v892, 0.2
  %v925 = vmul.f32 %v893, 0.2
  %v926 = vmul.f32 %v894, 0.2
  %v927 = vmul.f32 %v895, 0.2
  %v928 = vsel %vm896, %v880, %v912
  %v929 = vsel %vm897, %v881, %v913
  %v930 = vsel %vm898, %v882, %v914
  %v931 = vsel %vm899, %v883, %v915
  %v932 = vsel %vm900, %v884, %v916
  %v933 = vsel %vm901, %v885, %v917
  %v934 = vsel %vm902, %v886, %v918
  %v935 = vsel %vm903, %v887, %v919
  %v936 = vsel %vm904, %v888, %v920
  %v937 = vsel %vm905, %v889, %v921
  %v938 = vsel %vm906, %v890, %v922
  %v939 = vsel %vm907, %v891, %v923
  %v940 = vsel %vm908, %v892, %v924
  %v941 = vsel %vm909, %v893, %v925
  %v942 = vsel %vm910, %v894, %v926
  %v943 = vsel %vm911, %v895, %v927
  %v944 = vsel %vm299, %v928, -1e+09
  %v945 = vsel %vm300, %v929, -1e+09
  %v946 = vsel %vm301, %v930, -1e+09
  %v947 = vsel %vm302, %v931, -1e+09
  %v948 = vsel %vm303, %v932, -1e+09
  %v949 = vsel %vm304, %v933, -1e+09
  %v950 = vsel %vm305, %v934, -1e+09
  %v951 = vsel %vm306, %v935, -1e+09
  %v952 = vsel %vm307, %v936, -1e+09
  %v953 = vsel %vm308, %v937, -1e+09
  %v954 = vsel %vm309, %v938, -1e+09
  %v955 = vsel %vm310, %v939, -1e+09
  %v956 = vsel %vm311, %v940, -1e+09
  %v957 = vsel %vm312, %v941, -1e+09
  %v958 = vsel %vm313, %v942, -1e+09
  %v959 = vsel %vm314, %v943, -1e+09
  %960 = vmax.xlane.f32.xlu0 %v944
  %v961 = vpop.xlane.xlu0 %960
  %962 = vmax.xlane.f32.xlu0 %v945
  %v963 = vpop.xlane.xlu0 %962
  %964 = vmax.xlane.f32.xlu0 %v946
  %v965 = vpop.xlane.xlu0 %964
  %966 = vmax.xlane.f32.xlu0 %v947
  %v967 = vpop.xlane.xlu0 %966
  %968 = vmax.xlane.f32.xlu0 %v948
  %v969 = vpop.xlane.xlu0 %968
  %970 = vmax.xlane.f32.xlu0 %v949
  %v971 = vpop.xlane.xlu0 %970
  %972 = vmax.xlane.f32.xlu0 %v950
  %v973 = vpop.xlane.xlu0 %972
  %974 = vmax.xlane.f32.xlu0 %v951
  %v975 = vpop.xlane.xlu0 %974
  %976 = vmax.xlane.f32.xlu0 %v952
  %v977 = vpop.xlane.xlu0 %976
  %978 = vmax.xlane.f32.xlu0 %v953
  %v979 = vpop.xlane.xlu0 %978
  %980 = vmax.xlane.f32.xlu0 %v954
  %v981 = vpop.xlane.xlu0 %980
  %982 = vmax.xlane.f32.xlu0 %v955
  %v983 = vpop.xlane.xlu0 %982
  %984 = vmax.xlane.f32.xlu0 %v956
  %v985 = vpop.xlane.xlu0 %984
  %986 = vmax.xlane.f32.xlu0 %v957
  %v987 = vpop.xlane.xlu0 %986
  %988 = vmax.xlane.f32.xlu0 %v958
  %v989 = vpop.xlane.xlu0 %988
  %990 = vmax.xlane.f32.xlu0 %v959
  %v991 = vpop.xlane.xlu0 %990
  %v992 = vsub.f32 %v944, %v961
  %v993 = vsub.f32 %v945, %v963
  %v994 = vsub.f32 %v946, %v965
  %v995 = vsub.f32 %v947, %v967
  %v996 = vsub.f32 %v948, %v969
  %v997 = vsub.f32 %v949, %v971
  %v998 = vsub.f32 %v950, %v973
  %v999 = vsub.f32 %v951, %v975
  %v1000 = vsub.f32 %v952, %v977
  %v1001 = vsub.f32 %v953, %v979
  %v1002 = vsub.f32 %v954, %v981
  %v1003 = vsub.f32 %v955, %v983
  %v1004 = vsub.f32 %v956, %v985
  %v1005 = vsub.f32 %v957, %v987
  %v1006 = vsub.f32 %v958, %v989
  %v1007 = vsub.f32 %v959, %v991
  %v1008 = vmul.f32 %v992, 1.442695
  %v1009 = vpow.pop %v1008
  %v1010 = vmul.f32 %v993, 1.442695
  %v1011 = vpow.pop %v1010
  %v1012 = vmul.f32 %v994, 1.442695
  %v1013 = vpow.pop %v1012
  %v1014 = vmul.f32 %v995, 1.442695
  %v1015 = vpow.pop %v1014
  %v1016 = vmul.f32 %v996, 1.442695
  %v1017 = vpow.pop %v1016
  %v1018 = vmul.f32 %v997, 1.442695
  %v1019 = vpow.pop %v1018
  %v1020 = vmul.f32 %v998, 1.442695
  %v1021 = vpow.pop %v1020
  %v1022 = vmul.f32 %v999, 1.442695
  %v1023 = vpow.pop %v1022
  %v1024 = vmul.f32 %v1000, 1.442695
  %v1025 = vpow.pop %v1024
  %v1026 = vmul.f32 %v1001, 1.442695
  %v1027 = vpow.pop %v1026
  %v1028 = vmul.f32 %v1002, 1.442695
  %v1029 = vpow.pop %v1028
  %v1030 = vmul.f32 %v1003, 1.442695
  %v1031 = vpow.pop %v1030
  %v1032 = vmul.f32 %v1004, 1.442695
  %v1033 = vpow.pop %v1032
  %v1034 = vmul.f32 %v1005, 1.442695
  %v1035 = vpow.pop %v1034
  %v1036 = vmul.f32 %v1006, 1.442695
  %v1037 = vpow.pop %v1036
  %v1038 = vmul.f32 %v1007, 1.442695
  %v1039 = vpow.pop %v1038
  %1040 = vadd.xlane.f32.xlu0 %v1009
  %v1041 = vpop.xlane.xlu0 %1040
  %1042 = vadd.xlane.f32.xlu0 %v1011
  %v1043 = vpop.xlane.xlu0 %1042
  %1044 = vadd.xlane.f32.xlu0 %v1013
  %v1045 = vpop.xlane.xlu0 %1044
  %1046 = vadd.xlane.f32.xlu0 %v1015
  %v1047 = vpop.xlane.xlu0 %1046
  %1048 = vadd.xlane.f32.xlu0 %v1017
  %v1049 = vpop.xlane.xlu0 %1048
  %1050 = vadd.xlane.f32.xlu0 %v1019
  %v1051 = vpop.xlane.xlu0 %1050
  %1052 = vadd.xlane.f32.xlu0 %v1021
  %v1053 = vpop.xlane.xlu0 %1052
  %1054 = vadd.xlane.f32.xlu0 %v1023
  %v1055 = vpop.xlane.xlu0 %1054
  %1056 = vadd.xlane.f32.xlu0 %v1025
  %v1057 = vpop.xlane.xlu0 %1056
  %1058 = vadd.xlane.f32.xlu0 %v1027
  %v1059 = vpop.xlane.xlu0 %1058
  %1060 = vadd.xlane.f32.xlu0 %v1029
  %v1061 = vpop.xlane.xlu0 %1060
  %1062 = vadd.xlane.f32.xlu0 %v1031
  %v1063 = vpop.xlane.xlu0 %1062
  %1064 = vadd.xlane.f32.xlu0 %v1033
  %v1065 = vpop.xlane.xlu0 %1064
  %1066 = vadd.xlane.f32.xlu0 %v1035
  %v1067 = vpop.xlane.xlu0 %1066
  %1068 = vadd.xlane.f32.xlu0 %v1037
  %v1069 = vpop.xlane.xlu0 %1068
  %1070 = vadd.xlane.f32.xlu0 %v1039
  %v1071 = vpop.xlane.xlu0 %1070
  %v1072 = vpack.c.bf16 %v1011, %v1009
  %v1073 = vpack.c.bf16 %v1015, %v1013
  %v1074 = vpack.c.bf16 %v1019, %v1017
  %v1075 = vpack.c.bf16 %v1023, %v1021
  %v1076 = vpack.c.bf16 %v1027, %v1025
  %v1077 = vpack.c.bf16 %v1031, %v1029
  %v1078 = vpack.c.bf16 %v1035, %v1033
  %v1079 = vpack.c.bf16 %v1039, %v1037
  %v1080 = vld [vmem:[%s3] sm:$0xf]
  %v1081 = vld [vmem:[%s3 + $0x4] sm:$0xf]
  %v1082 = vld [vmem:[%s3 + $0x8] sm:$0xf]
  %v1083 = vld [vmem:[%s3 + $0xc] sm:$0xf]
  %v1084 = vld [vmem:[%s3 + $0x10] sm:$0xf]
  %v1085 = vld [vmem:[%s3 + $0x14] sm:$0xf]
  %v1086 = vld [vmem:[%s3 + $0x18] sm:$0xf]
  %v1087 = vld [vmem:[%s3 + $0x1c] sm:$0xf]
  %v1088 = vld [vmem:[%s3 + $0x20] sm:$0xf]
  %v1089 = vld [vmem:[%s3 + $0x24] sm:$0xf]
  %v1090 = vld [vmem:[%s3 + $0x28] sm:$0xf]
  %v1091 = vld [vmem:[%s3 + $0x2c] sm:$0xf]
  %v1092 = vld [vmem:[%s3 + $0x30] sm:$0xf]
  %v1093 = vld [vmem:[%s3 + $0x34] sm:$0xf]
  %v1094 = vld [vmem:[%s3 + $0x38] sm:$0xf]
  %v1095 = vld [vmem:[%s3 + $0x3c] sm:$0xf]
  %v1112 = vunpack.c.l.b16 %v1080
  %v1113 = vunpack.c.l.b16 %v1081
  %v1114 = vunpack.c.l.b16 %v1082
  %v1115 = vunpack.c.l.b16 %v1083
  %v1116 = vunpack.c.l.b16 %v1084
  %v1117 = vunpack.c.l.b16 %v1085
  %v1118 = vunpack.c.l.b16 %v1086
  %v1119 = vunpack.c.l.b16 %v1087
  %v1120 = vunpack.c.l.b16 %v1088
  %v1121 = vunpack.c.l.b16 %v1089
  %v1122 = vunpack.c.l.b16 %v1090
  %v1123 = vunpack.c.l.b16 %v1091
  %v1124 = vunpack.c.l.b16 %v1092
  %v1125 = vunpack.c.l.b16 %v1093
  %v1126 = vunpack.c.l.b16 %v1094
  %v1127 = vunpack.c.l.b16 %v1095
  %v1128 = vpack.c.b16 %v1113, %v1112
  %v1129 = vpack.c.b16 %v1115, %v1114
  %v1130 = vpack.c.b16 %v1117, %v1116
  %v1131 = vpack.c.b16 %v1119, %v1118
  %v1132 = vpack.c.b16 %v1121, %v1120
  %v1133 = vpack.c.b16 %v1123, %v1122
  %v1134 = vpack.c.b16 %v1125, %v1124
  %v1135 = vpack.c.b16 %v1127, %v1126
  %1136 = vrot.lane.b32.xlu0 %v1128, 120
  %v1137 = vpop.permute.xlu0 %1136
  %1138 = vrot.lane.b32.xlu0 %v1129, 120
  %v1139 = vpop.permute.xlu0 %1138
  %1140 = vrot.lane.b32.xlu0 %v1130, 120
  %v1141 = vpop.permute.xlu0 %1140
  %1142 = vrot.lane.b32.xlu0 %v1131, 120
  %v1143 = vpop.permute.xlu0 %1142
  %1144 = vrot.lane.b32.xlu0 %v1132, 120
  %v1145 = vpop.permute.xlu0 %1144
  %1146 = vrot.lane.b32.xlu0 %v1133, 120
  %v1147 = vpop.permute.xlu0 %1146
  %1148 = vrot.lane.b32.xlu0 %v1134, 120
  %v1149 = vpop.permute.xlu0 %1148
  %1150 = vrot.lane.b32.xlu0 %v1135, 120
  %v1151 = vpop.permute.xlu0 %1150
  %1160 = vmatprep.subr.bf16.mxu0 0
  %1161 = vmatpush1.bf16.msra.mxu0 %v1137
  %1162 = vmatprep.subr.bf16.mxu0 0
  %1163 = vmatpush1.bf16.msra.mxu0 %v1139
  %1164 = vmatprep.subr.bf16.mxu0 0
  %1165 = vmatpush1.bf16.msra.mxu0 %v1141
  %1166 = vmatprep.subr.bf16.mxu0 0
  %1167 = vmatpush1.bf16.msra.mxu0 %v1143
  %1168 = vmatprep.subr.bf16.mxu0 0
  %1169 = vmatpush1.bf16.msra.mxu0 %v1145
  %1170 = vmatprep.subr.bf16.mxu0 0
  %1171 = vmatpush1.bf16.msra.mxu0 %v1147
  %1172 = vmatprep.subr.bf16.mxu0 0
  %1173 = vmatpush1.bf16.msra.mxu0 %v1149
  %1174 = vmatprep.subr.bf16.mxu0 0
  %1175 = vmatpush1.bf16.msra.mxu0 %v1151
  %1176 = vmatprep.subr.bf16.mxu0 0
  %1177 = vmatpush1.bf16.msra.mxu0 0
  %1178 = vmatprep.subr.bf16.mxu0 0
  %1179 = vmatpush1.bf16.msra.mxu0 0
  %1180 = vmatprep.subr.bf16.mxu0 0
  %1181 = vmatpush1.bf16.msra.mxu0 0
  %1182 = vmatprep.subr.bf16.mxu0 0
  %1183 = vmatpush1.bf16.msra.mxu0 0
  %1184 = vmatprep.subr.bf16.mxu0 0
  %1185 = vmatpush1.bf16.msra.mxu0 0
  %1186 = vmatprep.subr.bf16.mxu0 0
  %1187 = vmatpush1.bf16.msra.mxu0 0
  %1188 = vmatprep.subr.bf16.mxu0 0
  %1189 = vmatpush1.bf16.msra.mxu0 0
  %1190 = vmatprep.subr.bf16.mxu0 0
  %1191 = vmatpush1.bf16.msra.mxu0 0
  %1192 = vmatprep.mubr.bf16.mxu0 0
  %1193 = vmatmul.mubr.bf16.gmra.mrb[0].mxu0 %v1072
  %v1194 = vpop.f32.mrb[0].mxu0
  %v1195 = vadd.f32 0.0, %v1194
  %v1196 = vpop.f32.mrb[0].mxu0
  %v1197 = vpop.f32.mrb[0].mxu0
  %v1198 = vadd.f32 0.0, %v1197
  %v1199 = vpop.f32.mrb[0].mxu0
  %1200 = vmatprep.mubr.bf16.mxu0 0
  %1201 = vmatmul.mubr.bf16.gmra.mrb[0].mxu0 %v1073
  %v1202 = vpop.f32.mrb[0].mxu0
  %v1203 = vadd.f32 0.0, %v1202
  %v1204 = vpop.f32.mrb[0].mxu0
  %v1205 = vpop.f32.mrb[0].mxu0
  %v1206 = vadd.f32 0.0, %v1205
  %v1207 = vpop.f32.mrb[0].mxu0
  %1208 = vmatprep.mubr.bf16.mxu0 0
  %1209 = vmatmul.mubr.bf16.gmra.mrb[0].mxu0 %v1074
  %v1210 = vpop.f32.mrb[0].mxu0
  %v1211 = vadd.f32 0.0, %v1210
  %v1212 = vpop.f32.mrb[0].mxu0
  %v1213 = vpop.f32.mrb[0].mxu0
  %v1214 = vadd.f32 0.0, %v1213
  %v1215 = vpop.f32.mrb[0].mxu0
  %1216 = vmatprep.mubr.bf16.mxu0 0
  %1217 = vmatmul.mubr.bf16.gmra.mrb[0].mxu0 %v1075
  %v1218 = vpop.f32.mrb[0].mxu0
  %v1219 = vadd.f32 0.0, %v1218
  %v1220 = vpop.f32.mrb[0].mxu0
  %v1221 = vpop.f32.mrb[0].mxu0
  %v1222 = vadd.f32 0.0, %v1221
  %v1223 = vpop.f32.mrb[0].mxu0
  %1224 = vmatprep.mubr.bf16.mxu0 0
  %1225 = vmatmul.mubr.bf16.gmra.mrb[0].mxu0 %v1076
  %v1226 = vpop.f32.mrb[0].mxu0
  %v1227 = vadd.f32 0.0, %v1226
  %v1228 = vpop.f32.mrb[0].mxu0
  %v1229 = vpop.f32.mrb[0].mxu0
  %v1230 = vadd.f32 0.0, %v1229
  %v1231 = vpop.f32.mrb[0].mxu0
  %1232 = vmatprep.mubr.bf16.mxu0 0
  %1233 = vmatmul.mubr.bf16.gmra.mrb[0].mxu0 %v1077
  %v1234 = vpop.f32.mrb[0].mxu0
  %v1235 = vadd.f32 0.0, %v1234
  %v1236 = vpop.f32.mrb[0].mxu0
  %v1237 = vpop.f32.mrb[0].mxu0
  %v1238 = vadd.f32 0.0, %v1237
  %v1239 = vpop.f32.mrb[0].mxu0
  %1240 = vmatprep.mubr.bf16.mxu0 0
  %1241 = vmatmul.mubr.bf16.gmra.mrb[0].mxu0 %v1078
  %v1242 = vpop.f32.mrb[0].mxu0
  %v1243 = vadd.f32 0.0, %v1242
  %v1244 = vpop.f32.mrb[0].mxu0
  %v1245 = vpop.f32.mrb[0].mxu0
  %v1246 = vadd.f32 0.0, %v1245
  %v1247 = vpop.f32.mrb[0].mxu0
  %1248 = vmatprep.mubr.bf16.mxu0 0
  %1249 = vmatmul.mubr.bf16.gmra.mrb[0].mxu0 %v1079
  %v1250 = vpop.f32.mrb[0].mxu0
  %v1251 = vadd.f32 0.0, %v1250
  %v1252 = vpop.f32.mrb[0].mxu0
  %v1253 = vpop.f32.mrb[0].mxu0
  %v1254 = vadd.f32 0.0, %v1253
  %v1255 = vpop.f32.mrb[0].mxu0
  %1256 = vdwg.mxu0
  %v1257 = vrcp.pop %v1041
  %v1258 = vmul.f32 %v1195, %v1257
  %v1259 = vrcp.pop %v1043
  %v1260 = vmul.f32 %v1198, %v1259
  %v1261 = vrcp.pop %v1045
  %v1262 = vmul.f32 %v1203, %v1261
  %v1263 = vrcp.pop %v1047
  %v1264 = vmul.f32 %v1206, %v1263
  %v1265 = vrcp.pop %v1049
  %v1266 = vmul.f32 %v1211, %v1265
  %v1267 = vrcp.pop %v1051
  %v1268 = vmul.f32 %v1214, %v1267
  %v1269 = vrcp.pop %v1053
  %v1270 = vmul.f32 %v1219, %v1269
  %v1271 = vrcp.pop %v1055
  %v1272 = vmul.f32 %v1222, %v1271
  %v1273 = vrcp.pop %v1057
  %v1274 = vmul.f32 %v1227, %v1273
  %v1275 = vrcp.pop %v1059
  %v1276 = vmul.f32 %v1230, %v1275
  %v1277 = vrcp.pop %v1061
  %v1278 = vmul.f32 %v1235, %v1277
  %v1279 = vrcp.pop %v1063
  %v1280 = vmul.f32 %v1238, %v1279
  %v1281 = vrcp.pop %v1065
  %v1282 = vmul.f32 %v1243, %v1281
  %v1283 = vrcp.pop %v1067
  %v1284 = vmul.f32 %v1246, %v1283
  %v1285 = vrcp.pop %v1069
  %v1286 = vmul.f32 %v1251, %v1285
  %v1287 = vrcp.pop %v1071
  %v1288 = vmul.f32 %v1254, %v1287
  %v1289 = vld [vmem:[%s4] sm:$0xff]
  %v1290 = vld [vmem:[%s4 + $0x8] sm:$0xff]
  %v1291 = vld [vmem:[%s4 + $0x10] sm:$0xff]
  %v1292 = vld [vmem:[%s4 + $0x18] sm:$0xff]
  %v1293 = vld [vmem:[%s4 + $0x20] sm:$0xff]
  %v1294 = vld [vmem:[%s4 + $0x28] sm:$0xff]
  %v1295 = vld [vmem:[%s4 + $0x30] sm:$0xff]
  %v1296 = vld [vmem:[%s4 + $0x38] sm:$0xff]
  %v1297 = vld [vmem:[%s4 + $0x40] sm:$0xff]
  %v1298 = vld [vmem:[%s4 + $0x48] sm:$0xff]
  %v1299 = vld [vmem:[%s4 + $0x50] sm:$0xff]
  %v1300 = vld [vmem:[%s4 + $0x58] sm:$0xff]
  %v1301 = vld [vmem:[%s4 + $0x60] sm:$0xff]
  %v1302 = vld [vmem:[%s4 + $0x68] sm:$0xff]
  %v1303 = vld [vmem:[%s4 + $0x70] sm:$0xff]
  %v1304 = vld [vmem:[%s4 + $0x78] sm:$0xff]
  %1321 = vrot.lane.b32.xlu0 %v1289, 120
  %v1322 = vpop.permute.xlu0 %1321
  %1323 = vrot.lane.b32.xlu0 %v1290, 120
  %v1324 = vpop.permute.xlu0 %1323
  %1325 = vrot.lane.b32.xlu0 %v1291, 120
  %v1326 = vpop.permute.xlu0 %1325
  %1327 = vrot.lane.b32.xlu0 %v1292, 120
  %v1328 = vpop.permute.xlu0 %1327
  %1329 = vrot.lane.b32.xlu0 %v1293, 120
  %v1330 = vpop.permute.xlu0 %1329
  %1331 = vrot.lane.b32.xlu0 %v1294, 120
  %v1332 = vpop.permute.xlu0 %1331
  %1333 = vrot.lane.b32.xlu0 %v1295, 120
  %v1334 = vpop.permute.xlu0 %1333
  %1335 = vrot.lane.b32.xlu0 %v1296, 120
  %v1336 = vpop.permute.xlu0 %1335
  %1337 = vrot.lane.b32.xlu0 %v1297, 120
  %v1338 = vpop.permute.xlu0 %1337
  %1339 = vrot.lane.b32.xlu0 %v1298, 120
  %v1340 = vpop.permute.xlu0 %1339
  %1341 = vrot.lane.b32.xlu0 %v1299, 120
  %v1342 = vpop.permute.xlu0 %1341
  %1343 = vrot.lane.b32.xlu0 %v1300, 120
  %v1344 = vpop.permute.xlu0 %1343
  %1345 = vrot.lane.b32.xlu0 %v1301, 120
  %v1346 = vpop.permute.xlu0 %1345
  %1347 = vrot.lane.b32.xlu0 %v1302, 120
  %v1348 = vpop.permute.xlu0 %1347
  %1349 = vrot.lane.b32.xlu0 %v1303, 120
  %v1350 = vpop.permute.xlu0 %1349
  %1351 = vrot.lane.b32.xlu0 %v1304, 120
  %v1352 = vpop.permute.xlu0 %1351
  %v1369 = vadd.f32 %v1258, %v1322
  %v1370 = vadd.f32 %v1260, %v1324
  %v1371 = vadd.f32 %v1262, %v1326
  %v1372 = vadd.f32 %v1264, %v1328
  %v1373 = vadd.f32 %v1266, %v1330
  %v1374 = vadd.f32 %v1268, %v1332
  %v1375 = vadd.f32 %v1270, %v1334
  %v1376 = vadd.f32 %v1272, %v1336
  %v1377 = vadd.f32 %v1274, %v1338
  %v1378 = vadd.f32 %v1276, %v1340
  %v1379 = vadd.f32 %v1278, %v1342
  %v1380 = vadd.f32 %v1280, %v1344
  %v1381 = vadd.f32 %v1282, %v1346
  %v1382 = vadd.f32 %v1284, %v1348
  %v1383 = vadd.f32 %v1286, %v1350
  %v1384 = vadd.f32 %v1288, %v1352
  %v1385 = vld [vmem:[%s5] sm:$0x1]
  %v1387 = vlaneseq
  %v1388 = vshrl.u32 %v1387, 7
  %v1389 = vsub.s32 0, %v1388
  %v1390 = vrot.slane %v1385, %v1389
  %1391 = vrot.lane.b32.xlu0 %v1390, 120
  %v1392 = vpop.permute.xlu0 %1391
  %v1394 = vadd.f32 %v1369, %v1392
  %v1395 = vadd.f32 %v1370, %v1392
  %v1396 = vadd.f32 %v1371, %v1392
  %v1397 = vadd.f32 %v1372, %v1392
  %v1398 = vadd.f32 %v1373, %v1392
  %v1399 = vadd.f32 %v1374, %v1392
  %v1400 = vadd.f32 %v1375, %v1392
  %v1401 = vadd.f32 %v1376, %v1392
  %v1402 = vadd.f32 %v1377, %v1392
  %v1403 = vadd.f32 %v1378, %v1392
  %v1404 = vadd.f32 %v1379, %v1392
  %v1405 = vadd.f32 %v1380, %v1392
  %v1406 = vadd.f32 %v1381, %v1392
  %v1407 = vadd.f32 %v1382, %v1392
  %v1408 = vadd.f32 %v1383, %v1392
  %v1409 = vadd.f32 %v1384, %v1392
  %vm1410 = vcmp.gt.f32.partialorder %v1394, 0.0
  %vm1411 = vcmp.gt.f32.partialorder %v1395, 0.0
  %vm1412 = vcmp.gt.f32.partialorder %v1396, 0.0
  %vm1413 = vcmp.gt.f32.partialorder %v1397, 0.0
  %vm1414 = vcmp.gt.f32.partialorder %v1398, 0.0
  %vm1415 = vcmp.gt.f32.partialorder %v1399, 0.0
  %vm1416 = vcmp.gt.f32.partialorder %v1400, 0.0
  %vm1417 = vcmp.gt.f32.partialorder %v1401, 0.0
  %vm1418 = vcmp.gt.f32.partialorder %v1402, 0.0
  %vm1419 = vcmp.gt.f32.partialorder %v1403, 0.0
  %vm1420 = vcmp.gt.f32.partialorder %v1404, 0.0
  %vm1421 = vcmp.gt.f32.partialorder %v1405, 0.0
  %vm1422 = vcmp.gt.f32.partialorder %v1406, 0.0
  %vm1423 = vcmp.gt.f32.partialorder %v1407, 0.0
  %vm1424 = vcmp.gt.f32.partialorder %v1408, 0.0
  %vm1425 = vcmp.gt.f32.partialorder %v1409, 0.0
  %v1426 = vmin.f32 %v1394, 0.0
  %v1427 = vmin.f32 %v1395, 0.0
  %v1428 = vmin.f32 %v1396, 0.0
  %v1429 = vmin.f32 %v1397, 0.0
  %v1430 = vmin.f32 %v1398, 0.0
  %v1431 = vmin.f32 %v1399, 0.0
  %v1432 = vmin.f32 %v1400, 0.0
  %v1433 = vmin.f32 %v1401, 0.0
  %v1434 = vmin.f32 %v1402, 0.0
  %v1435 = vmin.f32 %v1403, 0.0
  %v1436 = vmin.f32 %v1404, 0.0
  %v1437 = vmin.f32 %v1405, 0.0
  %v1438 = vmin.f32 %v1406, 0.0
  %v1439 = vmin.f32 %v1407, 0.0
  %v1440 = vmin.f32 %v1408, 0.0
  %v1441 = vmin.f32 %v1409, 0.0
  %v1442 = vmul.f32 %v1426, 1.442695
  %v1443 = vpow.pop %v1442
  %v1444 = vmul.f32 %v1427, 1.442695
  %v1445 = vpow.pop %v1444
  %v1446 = vmul.f32 %v1428, 1.442695
  %v1447 = vpow.pop %v1446
  %v1448 = vmul.f32 %v1429, 1.442695
  %v1449 = vpow.pop %v1448
  %v1450 = vmul.f32 %v1430, 1.442695
  %v1451 = vpow.pop %v1450
  %v1452 = vmul.f32 %v1431, 1.442695
  %v1453 = vpow.pop %v1452
  %v1454 = vmul.f32 %v1432, 1.442695
  %v1455 = vpow.pop %v1454
  %v1456 = vmul.f32 %v1433, 1.442695
  %v1457 = vpow.pop %v1456
  %v1458 = vmul.f32 %v1434, 1.442695
  %v1459 = vpow.pop %v1458
  %v1460 = vmul.f32 %v1435, 1.442695
  %v1461 = vpow.pop %v1460
  %v1462 = vmul.f32 %v1436, 1.442695
  %v1463 = vpow.pop %v1462
  %v1464 = vmul.f32 %v1437, 1.442695
  %v1465 = vpow.pop %v1464
  %v1466 = vmul.f32 %v1438, 1.442695
  %v1467 = vpow.pop %v1466
  %v1468 = vmul.f32 %v1439, 1.442695
  %v1469 = vpow.pop %v1468
  %v1470 = vmul.f32 %v1440, 1.442695
  %v1471 = vpow.pop %v1470
  %v1472 = vmul.f32 %v1441, 1.442695
  %v1473 = vpow.pop %v1472
  %v1474 = vsub.f32 %v1443, 1.0
  %v1475 = vsub.f32 %v1445, 1.0
  %v1476 = vsub.f32 %v1447, 1.0
  %v1477 = vsub.f32 %v1449, 1.0
  %v1478 = vsub.f32 %v1451, 1.0
  %v1479 = vsub.f32 %v1453, 1.0
  %v1480 = vsub.f32 %v1455, 1.0
  %v1481 = vsub.f32 %v1457, 1.0
  %v1482 = vsub.f32 %v1459, 1.0
  %v1483 = vsub.f32 %v1461, 1.0
  %v1484 = vsub.f32 %v1463, 1.0
  %v1485 = vsub.f32 %v1465, 1.0
  %v1486 = vsub.f32 %v1467, 1.0
  %v1487 = vsub.f32 %v1469, 1.0
  %v1488 = vsub.f32 %v1471, 1.0
  %v1489 = vsub.f32 %v1473, 1.0
  %v1490 = vsel %vm1410, %v1394, %v1474
  %v1491 = vsel %vm1411, %v1395, %v1475
  %v1492 = vsel %vm1412, %v1396, %v1476
  %v1493 = vsel %vm1413, %v1397, %v1477
  %v1494 = vsel %vm1414, %v1398, %v1478
  %v1495 = vsel %vm1415, %v1399, %v1479
  %v1496 = vsel %vm1416, %v1400, %v1480
  %v1497 = vsel %vm1417, %v1401, %v1481
  %v1498 = vsel %vm1418, %v1402, %v1482
  %v1499 = vsel %vm1419, %v1403, %v1483
  %v1500 = vsel %vm1420, %v1404, %v1484
  %v1501 = vsel %vm1421, %v1405, %v1485
  %v1502 = vsel %vm1422, %v1406, %v1486
  %v1503 = vsel %vm1423, %v1407, %v1487
  %v1504 = vsel %vm1424, %v1408, %v1488
  %v1505 = vsel %vm1425, %v1409, %v1489
  %1522 = vrot.lane.b32.xlu0 %v1490, 8
  %v1523 = vpop.permute.xlu0 %1522
  %1524 = vrot.lane.b32.xlu0 %v1491, 8
  %v1525 = vpop.permute.xlu0 %1524
  %1526 = vrot.lane.b32.xlu0 %v1492, 8
  %v1527 = vpop.permute.xlu0 %1526
  %1528 = vrot.lane.b32.xlu0 %v1493, 8
  %v1529 = vpop.permute.xlu0 %1528
  %1530 = vrot.lane.b32.xlu0 %v1494, 8
  %v1531 = vpop.permute.xlu0 %1530
  %1532 = vrot.lane.b32.xlu0 %v1495, 8
  %v1533 = vpop.permute.xlu0 %1532
  %1534 = vrot.lane.b32.xlu0 %v1496, 8
  %v1535 = vpop.permute.xlu0 %1534
  %1536 = vrot.lane.b32.xlu0 %v1497, 8
  %v1537 = vpop.permute.xlu0 %1536
  %1538 = vrot.lane.b32.xlu0 %v1498, 8
  %v1539 = vpop.permute.xlu0 %1538
  %1540 = vrot.lane.b32.xlu0 %v1499, 8
  %v1541 = vpop.permute.xlu0 %1540
  %1542 = vrot.lane.b32.xlu0 %v1500, 8
  %v1543 = vpop.permute.xlu0 %1542
  %1544 = vrot.lane.b32.xlu0 %v1501, 8
  %v1545 = vpop.permute.xlu0 %1544
  %1546 = vrot.lane.b32.xlu0 %v1502, 8
  %v1547 = vpop.permute.xlu0 %1546
  %1548 = vrot.lane.b32.xlu0 %v1503, 8
  %v1549 = vpop.permute.xlu0 %1548
  %1550 = vrot.lane.b32.xlu0 %v1504, 8
  %v1551 = vpop.permute.xlu0 %1550
  %1552 = vrot.lane.b32.xlu0 %v1505, 8
  %v1553 = vpop.permute.xlu0 %1552
  %vm1570 = vcmask 130112
  %1571 = vst.msk [vmem:[%s6] sm:$0xff] %vm1570, %v1523
  %1572 = vst.msk [vmem:[%s6 + $0x8] sm:$0xff] %vm1570, %v1525
  %1573 = vst.msk [vmem:[%s6 + $0x10] sm:$0xff] %vm1570, %v1527
  %1574 = vst.msk [vmem:[%s6 + $0x18] sm:$0xff] %vm1570, %v1529
  %1575 = vst.msk [vmem:[%s6 + $0x20] sm:$0xff] %vm1570, %v1531
  %1576 = vst.msk [vmem:[%s6 + $0x28] sm:$0xff] %vm1570, %v1533
  %1577 = vst.msk [vmem:[%s6 + $0x30] sm:$0xff] %vm1570, %v1535
  %1578 = vst.msk [vmem:[%s6 + $0x38] sm:$0xff] %vm1570, %v1537
  %1579 = vst.msk [vmem:[%s6 + $0x40] sm:$0xff] %vm1570, %v1539
  %1580 = vst.msk [vmem:[%s6 + $0x48] sm:$0xff] %vm1570, %v1541
  %1581 = vst.msk [vmem:[%s6 + $0x50] sm:$0xff] %vm1570, %v1543
  %1582 = vst.msk [vmem:[%s6 + $0x58] sm:$0xff] %vm1570, %v1545
  %1583 = vst.msk [vmem:[%s6 + $0x60] sm:$0xff] %vm1570, %v1547
  %1584 = vst.msk [vmem:[%s6 + $0x68] sm:$0xff] %vm1570, %v1549
  %1585 = vst.msk [vmem:[%s6 + $0x70] sm:$0xff] %vm1570, %v1551
  %1586 = vst.msk [vmem:[%s6 + $0x78] sm:$0xff] %vm1570, %v1553
  %1587 = vset.pattern.permute.xlu0 2
  %1588 = vperm.xlu0 %1587, %v26
  %v1589 = vpop.permute.xlu0 %1588
  %1591 = vset.pattern.permute.xlu0 2
  %1592 = vperm.xlu0 %1591, %v27
  %v1593 = vpop.permute.xlu0 %1592
  %1595 = vset.pattern.permute.xlu0 2
  %1596 = vperm.xlu0 %1595, %v28
  %v1597 = vpop.permute.xlu0 %1596
  %1599 = vset.pattern.permute.xlu0 2
  %1600 = vperm.xlu0 %1599, %v29
  %v1601 = vpop.permute.xlu0 %1600
  %1603 = vset.pattern.permute.xlu0 2
  %1604 = vperm.xlu0 %1603, %v30
  %v1605 = vpop.permute.xlu0 %1604
  %1607 = vset.pattern.permute.xlu0 2
  %1608 = vperm.xlu0 %1607, %v31
  %v1609 = vpop.permute.xlu0 %1608
  %1611 = vset.pattern.permute.xlu0 2
  %1612 = vperm.xlu0 %1611, %v32
  %v1613 = vpop.permute.xlu0 %1612
  %1615 = vset.pattern.permute.xlu0 2
  %1616 = vperm.xlu0 %1615, %v33
  %v1617 = vpop.permute.xlu0 %1616
  %1619 = vset.pattern.permute.xlu0 2
  %1620 = vperm.xlu0 %1619, %v34
  %v1621 = vpop.permute.xlu0 %1620
  %1623 = vset.pattern.permute.xlu0 2
  %1624 = vperm.xlu0 %1623, %v35
  %v1625 = vpop.permute.xlu0 %1624
  %1627 = vset.pattern.permute.xlu0 2
  %1628 = vperm.xlu0 %1627, %v36
  %v1629 = vpop.permute.xlu0 %1628
  %1631 = vset.pattern.permute.xlu0 2
  %1632 = vperm.xlu0 %1631, %v37
  %v1633 = vpop.permute.xlu0 %1632
  %1635 = vset.pattern.permute.xlu0 2
  %1636 = vperm.xlu0 %1635, %v38
  %v1637 = vpop.permute.xlu0 %1636
  %1639 = vset.pattern.permute.xlu0 2
  %1640 = vperm.xlu0 %1639, %v39
  %v1641 = vpop.permute.xlu0 %1640
  %1643 = vset.pattern.permute.xlu0 2
  %1644 = vperm.xlu0 %1643, %v40
  %v1645 = vpop.permute.xlu0 %1644
  %1647 = vset.pattern.permute.xlu0 2
  %1648 = vperm.xlu0 %1647, %v41
  %v1649 = vpop.permute.xlu0 %1648
  %v1651 = vlaneseq
  %v1652 = vshrl.u32 %v1651, 7
  %v1653 = vsub.s32 2, %v1652
  %v1654 = vrot.slane %v42, %v1653
  %v1655 = vadd.f32 %v1589, %v1654
  %v1656 = vadd.f32 %v1593, %v1654
  %v1657 = vadd.f32 %v1597, %v1654
  %v1658 = vadd.f32 %v1601, %v1654
  %v1659 = vadd.f32 %v1605, %v1654
  %v1660 = vadd.f32 %v1609, %v1654
  %v1661 = vadd.f32 %v1613, %v1654
  %v1662 = vadd.f32 %v1617, %v1654
  %v1663 = vadd.f32 %v1621, %v1654
  %v1664 = vadd.f32 %v1625, %v1654
  %v1665 = vadd.f32 %v1629, %v1654
  %v1666 = vadd.f32 %v1633, %v1654
  %v1667 = vadd.f32 %v1637, %v1654
  %v1668 = vadd.f32 %v1641, %v1654
  %v1669 = vadd.f32 %v1645, %v1654
  %v1670 = vadd.f32 %v1649, %v1654
  %vm1671 = vcmp.ge.f32.partialorder %v1655, 0.0
  %vm1672 = vcmp.ge.f32.partialorder %v1656, 0.0
  %vm1673 = vcmp.ge.f32.partialorder %v1657, 0.0
  %vm1674 = vcmp.ge.f32.partialorder %v1658, 0.0
  %vm1675 = vcmp.ge.f32.partialorder %v1659, 0.0
  %vm1676 = vcmp.ge.f32.partialorder %v1660, 0.0
  %vm1677 = vcmp.ge.f32.partialorder %v1661, 0.0
  %vm1678 = vcmp.ge.f32.partialorder %v1662, 0.0
  %vm1679 = vcmp.ge.f32.partialorder %v1663, 0.0
  %vm1680 = vcmp.ge.f32.partialorder %v1664, 0.0
  %vm1681 = vcmp.ge.f32.partialorder %v1665, 0.0
  %vm1682 = vcmp.ge.f32.partialorder %v1666, 0.0
  %vm1683 = vcmp.ge.f32.partialorder %v1667, 0.0
  %vm1684 = vcmp.ge.f32.partialorder %v1668, 0.0
  %vm1685 = vcmp.ge.f32.partialorder %v1669, 0.0
  %vm1686 = vcmp.ge.f32.partialorder %v1670, 0.0
  %v1687 = vmul.f32 %v1655, 0.2
  %v1688 = vmul.f32 %v1656, 0.2
  %v1689 = vmul.f32 %v1657, 0.2
  %v1690 = vmul.f32 %v1658, 0.2
  %v1691 = vmul.f32 %v1659, 0.2
  %v1692 = vmul.f32 %v1660, 0.2
  %v1693 = vmul.f32 %v1661, 0.2
  %v1694 = vmul.f32 %v1662, 0.2
  %v1695 = vmul.f32 %v1663, 0.2
  %v1696 = vmul.f32 %v1664, 0.2
  %v1697 = vmul.f32 %v1665, 0.2
  %v1698 = vmul.f32 %v1666, 0.2
  %v1699 = vmul.f32 %v1667, 0.2
  %v1700 = vmul.f32 %v1668, 0.2
  %v1701 = vmul.f32 %v1669, 0.2
  %v1702 = vmul.f32 %v1670, 0.2
  %v1703 = vsel %vm1671, %v1655, %v1687
  %v1704 = vsel %vm1672, %v1656, %v1688
  %v1705 = vsel %vm1673, %v1657, %v1689
  %v1706 = vsel %vm1674, %v1658, %v1690
  %v1707 = vsel %vm1675, %v1659, %v1691
  %v1708 = vsel %vm1676, %v1660, %v1692
  %v1709 = vsel %vm1677, %v1661, %v1693
  %v1710 = vsel %vm1678, %v1662, %v1694
  %v1711 = vsel %vm1679, %v1663, %v1695
  %v1712 = vsel %vm1680, %v1664, %v1696
  %v1713 = vsel %vm1681, %v1665, %v1697
  %v1714 = vsel %vm1682, %v1666, %v1698
  %v1715 = vsel %vm1683, %v1667, %v1699
  %v1716 = vsel %vm1684, %v1668, %v1700
  %v1717 = vsel %vm1685, %v1669, %v1701
  %v1718 = vsel %vm1686, %v1670, %v1702
  %v1719 = vsel %vm299, %v1703, -1e+09
  %v1720 = vsel %vm300, %v1704, -1e+09
  %v1721 = vsel %vm301, %v1705, -1e+09
  %v1722 = vsel %vm302, %v1706, -1e+09
  %v1723 = vsel %vm303, %v1707, -1e+09
  %v1724 = vsel %vm304, %v1708, -1e+09
  %v1725 = vsel %vm305, %v1709, -1e+09
  %v1726 = vsel %vm306, %v1710, -1e+09
  %v1727 = vsel %vm307, %v1711, -1e+09
  %v1728 = vsel %vm308, %v1712, -1e+09
  %v1729 = vsel %vm309, %v1713, -1e+09
  %v1730 = vsel %vm310, %v1714, -1e+09
  %v1731 = vsel %vm311, %v1715, -1e+09
  %v1732 = vsel %vm312, %v1716, -1e+09
  %v1733 = vsel %vm313, %v1717, -1e+09
  %v1734 = vsel %vm314, %v1718, -1e+09
  %1735 = vmax.xlane.f32.xlu0 %v1719
  %v1736 = vpop.xlane.xlu0 %1735
  %1737 = vmax.xlane.f32.xlu0 %v1720
  %v1738 = vpop.xlane.xlu0 %1737
  %1739 = vmax.xlane.f32.xlu0 %v1721
  %v1740 = vpop.xlane.xlu0 %1739
  %1741 = vmax.xlane.f32.xlu0 %v1722
  %v1742 = vpop.xlane.xlu0 %1741
  %1743 = vmax.xlane.f32.xlu0 %v1723
  %v1744 = vpop.xlane.xlu0 %1743
  %1745 = vmax.xlane.f32.xlu0 %v1724
  %v1746 = vpop.xlane.xlu0 %1745
  %1747 = vmax.xlane.f32.xlu0 %v1725
  %v1748 = vpop.xlane.xlu0 %1747
  %1749 = vmax.xlane.f32.xlu0 %v1726
  %v1750 = vpop.xlane.xlu0 %1749
  %1751 = vmax.xlane.f32.xlu0 %v1727
  %v1752 = vpop.xlane.xlu0 %1751
  %1753 = vmax.xlane.f32.xlu0 %v1728
  %v1754 = vpop.xlane.xlu0 %1753
  %1755 = vmax.xlane.f32.xlu0 %v1729
  %v1756 = vpop.xlane.xlu0 %1755
  %1757 = vmax.xlane.f32.xlu0 %v1730
  %v1758 = vpop.xlane.xlu0 %1757
  %1759 = vmax.xlane.f32.xlu0 %v1731
  %v1760 = vpop.xlane.xlu0 %1759
  %1761 = vmax.xlane.f32.xlu0 %v1732
  %v1762 = vpop.xlane.xlu0 %1761
  %1763 = vmax.xlane.f32.xlu0 %v1733
  %v1764 = vpop.xlane.xlu0 %1763
  %1765 = vmax.xlane.f32.xlu0 %v1734
  %v1766 = vpop.xlane.xlu0 %1765
  %v1767 = vsub.f32 %v1719, %v1736
  %v1768 = vsub.f32 %v1720, %v1738
  %v1769 = vsub.f32 %v1721, %v1740
  %v1770 = vsub.f32 %v1722, %v1742
  %v1771 = vsub.f32 %v1723, %v1744
  %v1772 = vsub.f32 %v1724, %v1746
  %v1773 = vsub.f32 %v1725, %v1748
  %v1774 = vsub.f32 %v1726, %v1750
  %v1775 = vsub.f32 %v1727, %v1752
  %v1776 = vsub.f32 %v1728, %v1754
  %v1777 = vsub.f32 %v1729, %v1756
  %v1778 = vsub.f32 %v1730, %v1758
  %v1779 = vsub.f32 %v1731, %v1760
  %v1780 = vsub.f32 %v1732, %v1762
  %v1781 = vsub.f32 %v1733, %v1764
  %v1782 = vsub.f32 %v1734, %v1766
  %v1783 = vmul.f32 %v1767, 1.442695
  %v1784 = vpow.pop %v1783
  %v1785 = vmul.f32 %v1768, 1.442695
  %v1786 = vpow.pop %v1785
  %v1787 = vmul.f32 %v1769, 1.442695
  %v1788 = vpow.pop %v1787
  %v1789 = vmul.f32 %v1770, 1.442695
  %v1790 = vpow.pop %v1789
  %v1791 = vmul.f32 %v1771, 1.442695
  %v1792 = vpow.pop %v1791
  %v1793 = vmul.f32 %v1772, 1.442695
  %v1794 = vpow.pop %v1793
  %v1795 = vmul.f32 %v1773, 1.442695
  %v1796 = vpow.pop %v1795
  %v1797 = vmul.f32 %v1774, 1.442695
  %v1798 = vpow.pop %v1797
  %v1799 = vmul.f32 %v1775, 1.442695
  %v1800 = vpow.pop %v1799
  %v1801 = vmul.f32 %v1776, 1.442695
  %v1802 = vpow.pop %v1801
  %v1803 = vmul.f32 %v1777, 1.442695
  %v1804 = vpow.pop %v1803
  %v1805 = vmul.f32 %v1778, 1.442695
  %v1806 = vpow.pop %v1805
  %v1807 = vmul.f32 %v1779, 1.442695
  %v1808 = vpow.pop %v1807
  %v1809 = vmul.f32 %v1780, 1.442695
  %v1810 = vpow.pop %v1809
  %v1811 = vmul.f32 %v1781, 1.442695
  %v1812 = vpow.pop %v1811
  %v1813 = vmul.f32 %v1782, 1.442695
  %v1814 = vpow.pop %v1813
  %1815 = vadd.xlane.f32.xlu0 %v1784
  %v1816 = vpop.xlane.xlu0 %1815
  %1817 = vadd.xlane.f32.xlu0 %v1786
  %v1818 = vpop.xlane.xlu0 %1817
  %1819 = vadd.xlane.f32.xlu0 %v1788
  %v1820 = vpop.xlane.xlu0 %1819
  %1821 = vadd.xlane.f32.xlu0 %v1790
  %v1822 = vpop.xlane.xlu0 %1821
  %1823 = vadd.xlane.f32.xlu0 %v1792
  %v1824 = vpop.xlane.xlu0 %1823
  %1825 = vadd.xlane.f32.xlu0 %v1794
  %v1826 = vpop.xlane.xlu0 %1825
  %1827 = vadd.xlane.f32.xlu0 %v1796
  %v1828 = vpop.xlane.xlu0 %1827
  %1829 = vadd.xlane.f32.xlu0 %v1798
  %v1830 = vpop.xlane.xlu0 %1829
  %1831 = vadd.xlane.f32.xlu0 %v1800
  %v1832 = vpop.xlane.xlu0 %1831
  %1833 = vadd.xlane.f32.xlu0 %v1802
  %v1834 = vpop.xlane.xlu0 %1833
  %1835 = vadd.xlane.f32.xlu0 %v1804
  %v1836 = vpop.xlane.xlu0 %1835
  %1837 = vadd.xlane.f32.xlu0 %v1806
  %v1838 = vpop.xlane.xlu0 %1837
  %1839 = vadd.xlane.f32.xlu0 %v1808
  %v1840 = vpop.xlane.xlu0 %1839
  %1841 = vadd.xlane.f32.xlu0 %v1810
  %v1842 = vpop.xlane.xlu0 %1841
  %1843 = vadd.xlane.f32.xlu0 %v1812
  %v1844 = vpop.xlane.xlu0 %1843
  %1845 = vadd.xlane.f32.xlu0 %v1814
  %v1846 = vpop.xlane.xlu0 %1845
  %v1847 = vpack.c.bf16 %v1786, %v1784
  %v1848 = vpack.c.bf16 %v1790, %v1788
  %v1849 = vpack.c.bf16 %v1794, %v1792
  %v1850 = vpack.c.bf16 %v1798, %v1796
  %v1851 = vpack.c.bf16 %v1802, %v1800
  %v1852 = vpack.c.bf16 %v1806, %v1804
  %v1853 = vpack.c.bf16 %v1810, %v1808
  %v1854 = vpack.c.bf16 %v1814, %v1812
  %v1855 = vld [vmem:[%s3] sm:$0xf]
  %v1856 = vld [vmem:[%s3 + $0x4] sm:$0xf]
  %v1857 = vld [vmem:[%s3 + $0x8] sm:$0xf]
  %v1858 = vld [vmem:[%s3 + $0xc] sm:$0xf]
  %v1859 = vld [vmem:[%s3 + $0x10] sm:$0xf]
  %v1860 = vld [vmem:[%s3 + $0x14] sm:$0xf]
  %v1861 = vld [vmem:[%s3 + $0x18] sm:$0xf]
  %v1862 = vld [vmem:[%s3 + $0x1c] sm:$0xf]
  %v1863 = vld [vmem:[%s3 + $0x20] sm:$0xf]
  %v1864 = vld [vmem:[%s3 + $0x24] sm:$0xf]
  %v1865 = vld [vmem:[%s3 + $0x28] sm:$0xf]
  %v1866 = vld [vmem:[%s3 + $0x2c] sm:$0xf]
  %v1867 = vld [vmem:[%s3 + $0x30] sm:$0xf]
  %v1868 = vld [vmem:[%s3 + $0x34] sm:$0xf]
  %v1869 = vld [vmem:[%s3 + $0x38] sm:$0xf]
  %v1870 = vld [vmem:[%s3 + $0x3c] sm:$0xf]
  %v1887 = vunpack.c.l.b16 %v1855
  %v1888 = vunpack.c.l.b16 %v1856
  %v1889 = vunpack.c.l.b16 %v1857
  %v1890 = vunpack.c.l.b16 %v1858
  %v1891 = vunpack.c.l.b16 %v1859
  %v1892 = vunpack.c.l.b16 %v1860
  %v1893 = vunpack.c.l.b16 %v1861
  %v1894 = vunpack.c.l.b16 %v1862
  %v1895 = vunpack.c.l.b16 %v1863
  %v1896 = vunpack.c.l.b16 %v1864
  %v1897 = vunpack.c.l.b16 %v1865
  %v1898 = vunpack.c.l.b16 %v1866
  %v1899 = vunpack.c.l.b16 %v1867
  %v1900 = vunpack.c.l.b16 %v1868
  %v1901 = vunpack.c.l.b16 %v1869
  %v1902 = vunpack.c.l.b16 %v1870
  %v1903 = vpack.c.b16 %v1888, %v1887
  %v1904 = vpack.c.b16 %v1890, %v1889
  %v1905 = vpack.c.b16 %v1892, %v1891
  %v1906 = vpack.c.b16 %v1894, %v1893
  %v1907 = vpack.c.b16 %v1896, %v1895
  %v1908 = vpack.c.b16 %v1898, %v1897
  %v1909 = vpack.c.b16 %v1900, %v1899
  %v1910 = vpack.c.b16 %v1902, %v1901
  %1911 = vrot.lane.b32.xlu0 %v1903, 112
  %v1912 = vpop.permute.xlu0 %1911
  %1913 = vrot.lane.b32.xlu0 %v1904, 112
  %v1914 = vpop.permute.xlu0 %1913
  %1915 = vrot.lane.b32.xlu0 %v1905, 112
  %v1916 = vpop.permute.xlu0 %1915
  %1917 = vrot.lane.b32.xlu0 %v1906, 112
  %v1918 = vpop.permute.xlu0 %1917
  %1919 = vrot.lane.b32.xlu0 %v1907, 112
  %v1920 = vpop.permute.xlu0 %1919
  %1921 = vrot.lane.b32.xlu0 %v1908, 112
  %v1922 = vpop.permute.xlu0 %1921
  %1923 = vrot.lane.b32.xlu0 %v1909, 112
  %v1924 = vpop.permute.xlu0 %1923
  %1925 = vrot.lane.b32.xlu0 %v1910, 112
  %v1926 = vpop.permute.xlu0 %1925
  %1935 = vmatprep.subr.bf16.mxu0 0
  %1936 = vmatpush1.bf16.msra.mxu0 %v1912
  %1937 = vmatprep.subr.bf16.mxu0 0
  %1938 = vmatpush1.bf16.msra.mxu0 %v1914
  %1939 = vmatprep.subr.bf16.mxu0 0
  %1940 = vmatpush1.bf16.msra.mxu0 %v1916
  %1941 = vmatprep.subr.bf16.mxu0 0
  %1942 = vmatpush1.bf16.msra.mxu0 %v1918
  %1943 = vmatprep.subr.bf16.mxu0 0
  %1944 = vmatpush1.bf16.msra.mxu0 %v1920
  %1945 = vmatprep.subr.bf16.mxu0 0
  %1946 = vmatpush1.bf16.msra.mxu0 %v1922
  %1947 = vmatprep.subr.bf16.mxu0 0
  %1948 = vmatpush1.bf16.msra.mxu0 %v1924
  %1949 = vmatprep.subr.bf16.mxu0 0
  %1950 = vmatpush1.bf16.msra.mxu0 %v1926
  %1951 = vmatprep.subr.bf16.mxu0 0
  %1952 = vmatpush1.bf16.msra.mxu0 0
  %1953 = vmatprep.subr.bf16.mxu0 0
  %1954 = vmatpush1.bf16.msra.mxu0 0
  %1955 = vmatprep.subr.bf16.mxu0 0
  %1956 = vmatpush1.bf16.msra.mxu0 0
  %1957 = vmatprep.subr.bf16.mxu0 0
  %1958 = vmatpush1.bf16.msra.mxu0 0
  %1959 = vmatprep.subr.bf16.mxu0 0
  %1960 = vmatpush1.bf16.msra.mxu0 0
  %1961 = vmatprep.subr.bf16.mxu0 0
  %1962 = vmatpush1.bf16.msra.mxu0 0
  %1963 = vmatprep.subr.bf16.mxu0 0
  %1964 = vmatpush1.bf16.msra.mxu0 0
  %1965 = vmatprep.subr.bf16.mxu0 0
  %1966 = vmatpush1.bf16.msra.mxu0 0
  %1967 = vmatprep.mubr.bf16.mxu0 0
  %1968 = vmatmul.mubr.bf16.gmra.mrb[0].mxu0 %v1847
  %v1969 = vpop.f32.mrb[0].mxu0
  %v1970 = vadd.f32 0.0, %v1969
  %v1971 = vpop.f32.mrb[0].mxu0
  %v1972 = vpop.f32.mrb[0].mxu0
  %v1973 = vadd.f32 0.0, %v1972
  %v1974 = vpop.f32.mrb[0].mxu0
  %1975 = vmatprep.mubr.bf16.mxu0 0
  %1976 = vmatmul.mubr.bf16.gmra.mrb[0].mxu0 %v1848
  %v1977 = vpop.f32.mrb[0].mxu0
  %v1978 = vadd.f32 0.0, %v1977
  %v1979 = vpop.f32.mrb[0].mxu0
  %v1980 = vpop.f32.mrb[0].mxu0
  %v1981 = vadd.f32 0.0, %v1980
  %v1982 = vpop.f32.mrb[0].mxu0
  %1983 = vmatprep.mubr.bf16.mxu0 0
  %1984 = vmatmul.mubr.bf16.gmra.mrb[0].mxu0 %v1849
  %v1985 = vpop.f32.mrb[0].mxu0
  %v1986 = vadd.f32 0.0, %v1985
  %v1987 = vpop.f32.mrb[0].mxu0
  %v1988 = vpop.f32.mrb[0].mxu0
  %v1989 = vadd.f32 0.0, %v1988
  %v1990 = vpop.f32.mrb[0].mxu0
  %1991 = vmatprep.mubr.bf16.mxu0 0
  %1992 = vmatmul.mubr.bf16.gmra.mrb[0].mxu0 %v1850
  %v1993 = vpop.f32.mrb[0].mxu0
  %v1994 = vadd.f32 0.0, %v1993
  %v1995 = vpop.f32.mrb[0].mxu0
  %v1996 = vpop.f32.mrb[0].mxu0
  %v1997 = vadd.f32 0.0, %v1996
  %v1998 = vpop.f32.mrb[0].mxu0
  %1999 = vmatprep.mubr.bf16.mxu0 0
  %2000 = vmatmul.mubr.bf16.gmra.mrb[0].mxu0 %v1851
  %v2001 = vpop.f32.mrb[0].mxu0
  %v2002 = vadd.f32 0.0, %v2001
  %v2003 = vpop.f32.mrb[0].mxu0
  %v2004 = vpop.f32.mrb[0].mxu0
  %v2005 = vadd.f32 0.0, %v2004
  %v2006 = vpop.f32.mrb[0].mxu0
  %2007 = vmatprep.mubr.bf16.mxu0 0
  %2008 = vmatmul.mubr.bf16.gmra.mrb[0].mxu0 %v1852
  %v2009 = vpop.f32.mrb[0].mxu0
  %v2010 = vadd.f32 0.0, %v2009
  %v2011 = vpop.f32.mrb[0].mxu0
  %v2012 = vpop.f32.mrb[0].mxu0
  %v2013 = vadd.f32 0.0, %v2012
  %v2014 = vpop.f32.mrb[0].mxu0
  %2015 = vmatprep.mubr.bf16.mxu0 0
  %2016 = vmatmul.mubr.bf16.gmra.mrb[0].mxu0 %v1853
  %v2017 = vpop.f32.mrb[0].mxu0
  %v2018 = vadd.f32 0.0, %v2017
  %v2019 = vpop.f32.mrb[0].mxu0
  %v2020 = vpop.f32.mrb[0].mxu0
  %v2021 = vadd.f32 0.0, %v2020
  %v2022 = vpop.f32.mrb[0].mxu0
  %2023 = vmatprep.mubr.bf16.mxu0 0
  %2024 = vmatmul.mubr.bf16.gmra.mrb[0].mxu0 %v1854
  %v2025 = vpop.f32.mrb[0].mxu0
  %v2026 = vadd.f32 0.0, %v2025
  %v2027 = vpop.f32.mrb[0].mxu0
  %v2028 = vpop.f32.mrb[0].mxu0
  %v2029 = vadd.f32 0.0, %v2028
  %v2030 = vpop.f32.mrb[0].mxu0
  %2031 = vdwg.mxu0
  %v2032 = vrcp.pop %v1816
  %v2033 = vmul.f32 %v1970, %v2032
  %v2034 = vrcp.pop %v1818
  %v2035 = vmul.f32 %v1973, %v2034
  %v2036 = vrcp.pop %v1820
  %v2037 = vmul.f32 %v1978, %v2036
  %v2038 = vrcp.pop %v1822
  %v2039 = vmul.f32 %v1981, %v2038
  %v2040 = vrcp.pop %v1824
  %v2041 = vmul.f32 %v1986, %v2040
  %v2042 = vrcp.pop %v1826
  %v2043 = vmul.f32 %v1989, %v2042
  %v2044 = vrcp.pop %v1828
  %v2045 = vmul.f32 %v1994, %v2044
  %v2046 = vrcp.pop %v1830
  %v2047 = vmul.f32 %v1997, %v2046
  %v2048 = vrcp.pop %v1832
  %v2049 = vmul.f32 %v2002, %v2048
  %v2050 = vrcp.pop %v1834
  %v2051 = vmul.f32 %v2005, %v2050
  %v2052 = vrcp.pop %v1836
  %v2053 = vmul.f32 %v2010, %v2052
  %v2054 = vrcp.pop %v1838
  %v2055 = vmul.f32 %v2013, %v2054
  %v2056 = vrcp.pop %v1840
  %v2057 = vmul.f32 %v2018, %v2056
  %v2058 = vrcp.pop %v1842
  %v2059 = vmul.f32 %v2021, %v2058
  %v2060 = vrcp.pop %v1844
  %v2061 = vmul.f32 %v2026, %v2060
  %v2062 = vrcp.pop %v1846
  %v2063 = vmul.f32 %v2029, %v2062
  %v2064 = vld [vmem:[%s4] sm:$0xff]
  %v2065 = vld [vmem:[%s4 + $0x8] sm:$0xff]
  %v2066 = vld [vmem:[%s4 + $0x10] sm:$0xff]
  %v2067 = vld [vmem:[%s4 + $0x18] sm:$0xff]
  %v2068 = vld [vmem:[%s4 + $0x20] sm:$0xff]
  %v2069 = vld [vmem:[%s4 + $0x28] sm:$0xff]
  %v2070 = vld [vmem:[%s4 + $0x30] sm:$0xff]
  %v2071 = vld [vmem:[%s4 + $0x38] sm:$0xff]
  %v2072 = vld [vmem:[%s4 + $0x40] sm:$0xff]
  %v2073 = vld [vmem:[%s4 + $0x48] sm:$0xff]
  %v2074 = vld [vmem:[%s4 + $0x50] sm:$0xff]
  %v2075 = vld [vmem:[%s4 + $0x58] sm:$0xff]
  %v2076 = vld [vmem:[%s4 + $0x60] sm:$0xff]
  %v2077 = vld [vmem:[%s4 + $0x68] sm:$0xff]
  %v2078 = vld [vmem:[%s4 + $0x70] sm:$0xff]
  %v2079 = vld [vmem:[%s4 + $0x78] sm:$0xff]
  %2096 = vrot.lane.b32.xlu0 %v2064, 112
  %v2097 = vpop.permute.xlu0 %2096
  %2098 = vrot.lane.b32.xlu0 %v2065, 112
  %v2099 = vpop.permute.xlu0 %2098
  %2100 = vrot.lane.b32.xlu0 %v2066, 112
  %v2101 = vpop.permute.xlu0 %2100
  %2102 = vrot.lane.b32.xlu0 %v2067, 112
  %v2103 = vpop.permute.xlu0 %2102
  %2104 = vrot.lane.b32.xlu0 %v2068, 112
  %v2105 = vpop.permute.xlu0 %2104
  %2106 = vrot.lane.b32.xlu0 %v2069, 112
  %v2107 = vpop.permute.xlu0 %2106
  %2108 = vrot.lane.b32.xlu0 %v2070, 112
  %v2109 = vpop.permute.xlu0 %2108
  %2110 = vrot.lane.b32.xlu0 %v2071, 112
  %v2111 = vpop.permute.xlu0 %2110
  %2112 = vrot.lane.b32.xlu0 %v2072, 112
  %v2113 = vpop.permute.xlu0 %2112
  %2114 = vrot.lane.b32.xlu0 %v2073, 112
  %v2115 = vpop.permute.xlu0 %2114
  %2116 = vrot.lane.b32.xlu0 %v2074, 112
  %v2117 = vpop.permute.xlu0 %2116
  %2118 = vrot.lane.b32.xlu0 %v2075, 112
  %v2119 = vpop.permute.xlu0 %2118
  %2120 = vrot.lane.b32.xlu0 %v2076, 112
  %v2121 = vpop.permute.xlu0 %2120
  %2122 = vrot.lane.b32.xlu0 %v2077, 112
  %v2123 = vpop.permute.xlu0 %2122
  %2124 = vrot.lane.b32.xlu0 %v2078, 112
  %v2125 = vpop.permute.xlu0 %2124
  %2126 = vrot.lane.b32.xlu0 %v2079, 112
  %v2127 = vpop.permute.xlu0 %2126
  %v2144 = vadd.f32 %v2033, %v2097
  %v2145 = vadd.f32 %v2035, %v2099
  %v2146 = vadd.f32 %v2037, %v2101
  %v2147 = vadd.f32 %v2039, %v2103
  %v2148 = vadd.f32 %v2041, %v2105
  %v2149 = vadd.f32 %v2043, %v2107
  %v2150 = vadd.f32 %v2045, %v2109
  %v2151 = vadd.f32 %v2047, %v2111
  %v2152 = vadd.f32 %v2049, %v2113
  %v2153 = vadd.f32 %v2051, %v2115
  %v2154 = vadd.f32 %v2053, %v2117
  %v2155 = vadd.f32 %v2055, %v2119
  %v2156 = vadd.f32 %v2057, %v2121
  %v2157 = vadd.f32 %v2059, %v2123
  %v2158 = vadd.f32 %v2061, %v2125
  %v2159 = vadd.f32 %v2063, %v2127
  %v2160 = vld [vmem:[%s5] sm:$0x1]
  %v2162 = vlaneseq
  %v2163 = vshrl.u32 %v2162, 7
  %v2164 = vsub.s32 0, %v2163
  %v2165 = vrot.slane %v2160, %v2164
  %2166 = vrot.lane.b32.xlu0 %v2165, 112
  %v2167 = vpop.permute.xlu0 %2166
  %v2169 = vadd.f32 %v2144, %v2167
  %v2170 = vadd.f32 %v2145, %v2167
  %v2171 = vadd.f32 %v2146, %v2167
  %v2172 = vadd.f32 %v2147, %v2167
  %v2173 = vadd.f32 %v2148, %v2167
  %v2174 = vadd.f32 %v2149, %v2167
  %v2175 = vadd.f32 %v2150, %v2167
  %v2176 = vadd.f32 %v2151, %v2167
  %v2177 = vadd.f32 %v2152, %v2167
  %v2178 = vadd.f32 %v2153, %v2167
  %v2179 = vadd.f32 %v2154, %v2167
  %v2180 = vadd.f32 %v2155, %v2167
  %v2181 = vadd.f32 %v2156, %v2167
  %v2182 = vadd.f32 %v2157, %v2167
  %v2183 = vadd.f32 %v2158, %v2167
  %v2184 = vadd.f32 %v2159, %v2167
  %vm2185 = vcmp.gt.f32.partialorder %v2169, 0.0
  %vm2186 = vcmp.gt.f32.partialorder %v2170, 0.0
  %vm2187 = vcmp.gt.f32.partialorder %v2171, 0.0
  %vm2188 = vcmp.gt.f32.partialorder %v2172, 0.0
  %vm2189 = vcmp.gt.f32.partialorder %v2173, 0.0
  %vm2190 = vcmp.gt.f32.partialorder %v2174, 0.0
  %vm2191 = vcmp.gt.f32.partialorder %v2175, 0.0
  %vm2192 = vcmp.gt.f32.partialorder %v2176, 0.0
  %vm2193 = vcmp.gt.f32.partialorder %v2177, 0.0
  %vm2194 = vcmp.gt.f32.partialorder %v2178, 0.0
  %vm2195 = vcmp.gt.f32.partialorder %v2179, 0.0
  %vm2196 = vcmp.gt.f32.partialorder %v2180, 0.0
  %vm2197 = vcmp.gt.f32.partialorder %v2181, 0.0
  %vm2198 = vcmp.gt.f32.partialorder %v2182, 0.0
  %vm2199 = vcmp.gt.f32.partialorder %v2183, 0.0
  %vm2200 = vcmp.gt.f32.partialorder %v2184, 0.0
  %v2201 = vmin.f32 %v2169, 0.0
  %v2202 = vmin.f32 %v2170, 0.0
  %v2203 = vmin.f32 %v2171, 0.0
  %v2204 = vmin.f32 %v2172, 0.0
  %v2205 = vmin.f32 %v2173, 0.0
  %v2206 = vmin.f32 %v2174, 0.0
  %v2207 = vmin.f32 %v2175, 0.0
  %v2208 = vmin.f32 %v2176, 0.0
  %v2209 = vmin.f32 %v2177, 0.0
  %v2210 = vmin.f32 %v2178, 0.0
  %v2211 = vmin.f32 %v2179, 0.0
  %v2212 = vmin.f32 %v2180, 0.0
  %v2213 = vmin.f32 %v2181, 0.0
  %v2214 = vmin.f32 %v2182, 0.0
  %v2215 = vmin.f32 %v2183, 0.0
  %v2216 = vmin.f32 %v2184, 0.0
  %v2217 = vmul.f32 %v2201, 1.442695
  %v2218 = vpow.pop %v2217
  %v2219 = vmul.f32 %v2202, 1.442695
  %v2220 = vpow.pop %v2219
  %v2221 = vmul.f32 %v2203, 1.442695
  %v2222 = vpow.pop %v2221
  %v2223 = vmul.f32 %v2204, 1.442695
  %v2224 = vpow.pop %v2223
  %v2225 = vmul.f32 %v2205, 1.442695
  %v2226 = vpow.pop %v2225
  %v2227 = vmul.f32 %v2206, 1.442695
  %v2228 = vpow.pop %v2227
  %v2229 = vmul.f32 %v2207, 1.442695
  %v2230 = vpow.pop %v2229
  %v2231 = vmul.f32 %v2208, 1.442695
  %v2232 = vpow.pop %v2231
  %v2233 = vmul.f32 %v2209, 1.442695
  %v2234 = vpow.pop %v2233
  %v2235 = vmul.f32 %v2210, 1.442695
  %v2236 = vpow.pop %v2235
  %v2237 = vmul.f32 %v2211, 1.442695
  %v2238 = vpow.pop %v2237
  %v2239 = vmul.f32 %v2212, 1.442695
  %v2240 = vpow.pop %v2239
  %v2241 = vmul.f32 %v2213, 1.442695
  %v2242 = vpow.pop %v2241
  %v2243 = vmul.f32 %v2214, 1.442695
  %v2244 = vpow.pop %v2243
  %v2245 = vmul.f32 %v2215, 1.442695
  %v2246 = vpow.pop %v2245
  %v2247 = vmul.f32 %v2216, 1.442695
  %v2248 = vpow.pop %v2247
  %v2249 = vsub.f32 %v2218, 1.0
  %v2250 = vsub.f32 %v2220, 1.0
  %v2251 = vsub.f32 %v2222, 1.0
  %v2252 = vsub.f32 %v2224, 1.0
  %v2253 = vsub.f32 %v2226, 1.0
  %v2254 = vsub.f32 %v2228, 1.0
  %v2255 = vsub.f32 %v2230, 1.0
  %v2256 = vsub.f32 %v2232, 1.0
  %v2257 = vsub.f32 %v2234, 1.0
  %v2258 = vsub.f32 %v2236, 1.0
  %v2259 = vsub.f32 %v2238, 1.0
  %v2260 = vsub.f32 %v2240, 1.0
  %v2261 = vsub.f32 %v2242, 1.0
  %v2262 = vsub.f32 %v2244, 1.0
  %v2263 = vsub.f32 %v2246, 1.0
  %v2264 = vsub.f32 %v2248, 1.0
  %v2265 = vsel %vm2185, %v2169, %v2249
  %v2266 = vsel %vm2186, %v2170, %v2250
  %v2267 = vsel %vm2187, %v2171, %v2251
  %v2268 = vsel %vm2188, %v2172, %v2252
  %v2269 = vsel %vm2189, %v2173, %v2253
  %v2270 = vsel %vm2190, %v2174, %v2254
  %v2271 = vsel %vm2191, %v2175, %v2255
  %v2272 = vsel %vm2192, %v2176, %v2256
  %v2273 = vsel %vm2193, %v2177, %v2257
  %v2274 = vsel %vm2194, %v2178, %v2258
  %v2275 = vsel %vm2195, %v2179, %v2259
  %v2276 = vsel %vm2196, %v2180, %v2260
  %v2277 = vsel %vm2197, %v2181, %v2261
  %v2278 = vsel %vm2198, %v2182, %v2262
  %v2279 = vsel %vm2199, %v2183, %v2263
  %v2280 = vsel %vm2200, %v2184, %v2264
  %2297 = vrot.lane.b32.xlu0 %v2265, 16
  %v2298 = vpop.permute.xlu0 %2297
  %2299 = vrot.lane.b32.xlu0 %v2266, 16
  %v2300 = vpop.permute.xlu0 %2299
  %2301 = vrot.lane.b32.xlu0 %v2267, 16
  %v2302 = vpop.permute.xlu0 %2301
  %2303 = vrot.lane.b32.xlu0 %v2268, 16
  %v2304 = vpop.permute.xlu0 %2303
  %2305 = vrot.lane.b32.xlu0 %v2269, 16
  %v2306 = vpop.permute.xlu0 %2305
  %2307 = vrot.lane.b32.xlu0 %v2270, 16
  %v2308 = vpop.permute.xlu0 %2307
  %2309 = vrot.lane.b32.xlu0 %v2271, 16
  %v2310 = vpop.permute.xlu0 %2309
  %2311 = vrot.lane.b32.xlu0 %v2272, 16
  %v2312 = vpop.permute.xlu0 %2311
  %2313 = vrot.lane.b32.xlu0 %v2273, 16
  %v2314 = vpop.permute.xlu0 %2313
  %2315 = vrot.lane.b32.xlu0 %v2274, 16
  %v2316 = vpop.permute.xlu0 %2315
  %2317 = vrot.lane.b32.xlu0 %v2275, 16
  %v2318 = vpop.permute.xlu0 %2317
  %2319 = vrot.lane.b32.xlu0 %v2276, 16
  %v2320 = vpop.permute.xlu0 %2319
  %2321 = vrot.lane.b32.xlu0 %v2277, 16
  %v2322 = vpop.permute.xlu0 %2321
  %2323 = vrot.lane.b32.xlu0 %v2278, 16
  %v2324 = vpop.permute.xlu0 %2323
  %2325 = vrot.lane.b32.xlu0 %v2279, 16
  %v2326 = vpop.permute.xlu0 %2325
  %2327 = vrot.lane.b32.xlu0 %v2280, 16
  %v2328 = vpop.permute.xlu0 %2327
  %vm2345 = vcmask 195712
  %2346 = vst.msk [vmem:[%s6] sm:$0xff] %vm2345, %v2298
  %2347 = vst.msk [vmem:[%s6 + $0x8] sm:$0xff] %vm2345, %v2300
  %2348 = vst.msk [vmem:[%s6 + $0x10] sm:$0xff] %vm2345, %v2302
  %2349 = vst.msk [vmem:[%s6 + $0x18] sm:$0xff] %vm2345, %v2304
  %2350 = vst.msk [vmem:[%s6 + $0x20] sm:$0xff] %vm2345, %v2306
  %2351 = vst.msk [vmem:[%s6 + $0x28] sm:$0xff] %vm2345, %v2308
  %2352 = vst.msk [vmem:[%s6 + $0x30] sm:$0xff] %vm2345, %v2310
  %2353 = vst.msk [vmem:[%s6 + $0x38] sm:$0xff] %vm2345, %v2312
  %2354 = vst.msk [vmem:[%s6 + $0x40] sm:$0xff] %vm2345, %v2314
  %2355 = vst.msk [vmem:[%s6 + $0x48] sm:$0xff] %vm2345, %v2316
  %2356 = vst.msk [vmem:[%s6 + $0x50] sm:$0xff] %vm2345, %v2318
  %2357 = vst.msk [vmem:[%s6 + $0x58] sm:$0xff] %vm2345, %v2320
  %2358 = vst.msk [vmem:[%s6 + $0x60] sm:$0xff] %vm2345, %v2322
  %2359 = vst.msk [vmem:[%s6 + $0x68] sm:$0xff] %vm2345, %v2324
  %2360 = vst.msk [vmem:[%s6 + $0x70] sm:$0xff] %vm2345, %v2326
  %2361 = vst.msk [vmem:[%s6 + $0x78] sm:$0xff] %vm2345, %v2328
  %2362 = vset.pattern.permute.xlu0 3
  %2363 = vperm.xlu0 %2362, %v26
  %v2364 = vpop.permute.xlu0 %2363
  %2366 = vset.pattern.permute.xlu0 3
  %2367 = vperm.xlu0 %2366, %v27
  %v2368 = vpop.permute.xlu0 %2367
  %2370 = vset.pattern.permute.xlu0 3
  %2371 = vperm.xlu0 %2370, %v28
  %v2372 = vpop.permute.xlu0 %2371
  %2374 = vset.pattern.permute.xlu0 3
  %2375 = vperm.xlu0 %2374, %v29
  %v2376 = vpop.permute.xlu0 %2375
  %2378 = vset.pattern.permute.xlu0 3
  %2379 = vperm.xlu0 %2378, %v30
  %v2380 = vpop.permute.xlu0 %2379
  %2382 = vset.pattern.permute.xlu0 3
  %2383 = vperm.xlu0 %2382, %v31
  %v2384 = vpop.permute.xlu0 %2383
  %2386 = vset.pattern.permute.xlu0 3
  %2387 = vperm.xlu0 %2386, %v32
  %v2388 = vpop.permute.xlu0 %2387
  %2390 = vset.pattern.permute.xlu0 3
  %2391 = vperm.xlu0 %2390, %v33
  %v2392 = vpop.permute.xlu0 %2391
  %2394 = vset.pattern.permute.xlu0 3
  %2395 = vperm.xlu0 %2394, %v34
  %v2396 = vpop.permute.xlu0 %2395
  %2398 = vset.pattern.permute.xlu0 3
  %2399 = vperm.xlu0 %2398, %v35
  %v2400 = vpop.permute.xlu0 %2399
  %2402 = vset.pattern.permute.xlu0 3
  %2403 = vperm.xlu0 %2402, %v36
  %v2404 = vpop.permute.xlu0 %2403
  %2406 = vset.pattern.permute.xlu0 3
  %2407 = vperm.xlu0 %2406, %v37
  %v2408 = vpop.permute.xlu0 %2407
  %2410 = vset.pattern.permute.xlu0 3
  %2411 = vperm.xlu0 %2410, %v38
  %v2412 = vpop.permute.xlu0 %2411
  %2414 = vset.pattern.permute.xlu0 3
  %2415 = vperm.xlu0 %2414, %v39
  %v2416 = vpop.permute.xlu0 %2415
  %2418 = vset.pattern.permute.xlu0 3
  %2419 = vperm.xlu0 %2418, %v40
  %v2420 = vpop.permute.xlu0 %2419
  %2422 = vset.pattern.permute.xlu0 3
  %2423 = vperm.xlu0 %2422, %v41
  %v2424 = vpop.permute.xlu0 %2423
  %v2426 = vlaneseq
  %v2427 = vshrl.u32 %v2426, 7
  %v2428 = vsub.s32 3, %v2427
  %v2429 = vrot.slane %v42, %v2428
  %v2430 = vadd.f32 %v2364, %v2429
  %v2431 = vadd.f32 %v2368, %v2429
  %v2432 = vadd.f32 %v2372, %v2429
  %v2433 = vadd.f32 %v2376, %v2429
  %v2434 = vadd.f32 %v2380, %v2429
  %v2435 = vadd.f32 %v2384, %v2429
  %v2436 = vadd.f32 %v2388, %v2429
  %v2437 = vadd.f32 %v2392, %v2429
  %v2438 = vadd.f32 %v2396, %v2429
  %v2439 = vadd.f32 %v2400, %v2429
  %v2440 = vadd.f32 %v2404, %v2429
  %v2441 = vadd.f32 %v2408, %v2429
  %v2442 = vadd.f32 %v2412, %v2429
  %v2443 = vadd.f32 %v2416, %v2429
  %v2444 = vadd.f32 %v2420, %v2429
  %v2445 = vadd.f32 %v2424, %v2429
  %vm2446 = vcmp.ge.f32.partialorder %v2430, 0.0
  %vm2447 = vcmp.ge.f32.partialorder %v2431, 0.0
  %vm2448 = vcmp.ge.f32.partialorder %v2432, 0.0
  %vm2449 = vcmp.ge.f32.partialorder %v2433, 0.0
  %vm2450 = vcmp.ge.f32.partialorder %v2434, 0.0
  %vm2451 = vcmp.ge.f32.partialorder %v2435, 0.0
  %vm2452 = vcmp.ge.f32.partialorder %v2436, 0.0
  %vm2453 = vcmp.ge.f32.partialorder %v2437, 0.0
  %vm2454 = vcmp.ge.f32.partialorder %v2438, 0.0
  %vm2455 = vcmp.ge.f32.partialorder %v2439, 0.0
  %vm2456 = vcmp.ge.f32.partialorder %v2440, 0.0
  %vm2457 = vcmp.ge.f32.partialorder %v2441, 0.0
  %vm2458 = vcmp.ge.f32.partialorder %v2442, 0.0
  %vm2459 = vcmp.ge.f32.partialorder %v2443, 0.0
  %vm2460 = vcmp.ge.f32.partialorder %v2444, 0.0
  %vm2461 = vcmp.ge.f32.partialorder %v2445, 0.0
  %v2462 = vmul.f32 %v2430, 0.2
  %v2463 = vmul.f32 %v2431, 0.2
  %v2464 = vmul.f32 %v2432, 0.2
  %v2465 = vmul.f32 %v2433, 0.2
  %v2466 = vmul.f32 %v2434, 0.2
  %v2467 = vmul.f32 %v2435, 0.2
  %v2468 = vmul.f32 %v2436, 0.2
  %v2469 = vmul.f32 %v2437, 0.2
  %v2470 = vmul.f32 %v2438, 0.2
  %v2471 = vmul.f32 %v2439, 0.2
  %v2472 = vmul.f32 %v2440, 0.2
  %v2473 = vmul.f32 %v2441, 0.2
  %v2474 = vmul.f32 %v2442, 0.2
  %v2475 = vmul.f32 %v2443, 0.2
  %v2476 = vmul.f32 %v2444, 0.2
  %v2477 = vmul.f32 %v2445, 0.2
  %v2478 = vsel %vm2446, %v2430, %v2462
  %v2479 = vsel %vm2447, %v2431, %v2463
  %v2480 = vsel %vm2448, %v2432, %v2464
  %v2481 = vsel %vm2449, %v2433, %v2465
  %v2482 = vsel %vm2450, %v2434, %v2466
  %v2483 = vsel %vm2451, %v2435, %v2467
  %v2484 = vsel %vm2452, %v2436, %v2468
  %v2485 = vsel %vm2453, %v2437, %v2469
  %v2486 = vsel %vm2454, %v2438, %v2470
  %v2487 = vsel %vm2455, %v2439, %v2471
  %v2488 = vsel %vm2456, %v2440, %v2472
  %v2489 = vsel %vm2457, %v2441, %v2473
  %v2490 = vsel %vm2458, %v2442, %v2474
  %v2491 = vsel %vm2459, %v2443, %v2475
  %v2492 = vsel %vm2460, %v2444, %v2476
  %v2493 = vsel %vm2461, %v2445, %v2477
  %v2494 = vsel %vm299, %v2478, -1e+09
  %v2495 = vsel %vm300, %v2479, -1e+09
  %v2496 = vsel %vm301, %v2480, -1e+09
  %v2497 = vsel %vm302, %v2481, -1e+09
  %v2498 = vsel %vm303, %v2482, -1e+09
  %v2499 = vsel %vm304, %v2483, -1e+09
  %v2500 = vsel %vm305, %v2484, -1e+09
  %v2501 = vsel %vm306, %v2485, -1e+09
  %v2502 = vsel %vm307, %v2486, -1e+09
  %v2503 = vsel %vm308, %v2487, -1e+09
  %v2504 = vsel %vm309, %v2488, -1e+09
  %v2505 = vsel %vm310, %v2489, -1e+09
  %v2506 = vsel %vm311, %v2490, -1e+09
  %v2507 = vsel %vm312, %v2491, -1e+09
  %v2508 = vsel %vm313, %v2492, -1e+09
  %v2509 = vsel %vm314, %v2493, -1e+09
  %2510 = vmax.xlane.f32.xlu0 %v2494
  %v2511 = vpop.xlane.xlu0 %2510
  %2512 = vmax.xlane.f32.xlu0 %v2495
  %v2513 = vpop.xlane.xlu0 %2512
  %2514 = vmax.xlane.f32.xlu0 %v2496
  %v2515 = vpop.xlane.xlu0 %2514
  %2516 = vmax.xlane.f32.xlu0 %v2497
  %v2517 = vpop.xlane.xlu0 %2516
  %2518 = vmax.xlane.f32.xlu0 %v2498
  %v2519 = vpop.xlane.xlu0 %2518
  %2520 = vmax.xlane.f32.xlu0 %v2499
  %v2521 = vpop.xlane.xlu0 %2520
  %2522 = vmax.xlane.f32.xlu0 %v2500
  %v2523 = vpop.xlane.xlu0 %2522
  %2524 = vmax.xlane.f32.xlu0 %v2501
  %v2525 = vpop.xlane.xlu0 %2524
  %2526 = vmax.xlane.f32.xlu0 %v2502
  %v2527 = vpop.xlane.xlu0 %2526
  %2528 = vmax.xlane.f32.xlu0 %v2503
  %v2529 = vpop.xlane.xlu0 %2528
  %2530 = vmax.xlane.f32.xlu0 %v2504
  %v2531 = vpop.xlane.xlu0 %2530
  %2532 = vmax.xlane.f32.xlu0 %v2505
  %v2533 = vpop.xlane.xlu0 %2532
  %2534 = vmax.xlane.f32.xlu0 %v2506
  %v2535 = vpop.xlane.xlu0 %2534
  %2536 = vmax.xlane.f32.xlu0 %v2507
  %v2537 = vpop.xlane.xlu0 %2536
  %2538 = vmax.xlane.f32.xlu0 %v2508
  %v2539 = vpop.xlane.xlu0 %2538
  %2540 = vmax.xlane.f32.xlu0 %v2509
  %v2541 = vpop.xlane.xlu0 %2540
  %v2542 = vsub.f32 %v2494, %v2511
  %v2543 = vsub.f32 %v2495, %v2513
  %v2544 = vsub.f32 %v2496, %v2515
  %v2545 = vsub.f32 %v2497, %v2517
  %v2546 = vsub.f32 %v2498, %v2519
  %v2547 = vsub.f32 %v2499, %v2521
  %v2548 = vsub.f32 %v2500, %v2523
  %v2549 = vsub.f32 %v2501, %v2525
  %v2550 = vsub.f32 %v2502, %v2527
  %v2551 = vsub.f32 %v2503, %v2529
  %v2552 = vsub.f32 %v2504, %v2531
  %v2553 = vsub.f32 %v2505, %v2533
  %v2554 = vsub.f32 %v2506, %v2535
  %v2555 = vsub.f32 %v2507, %v2537
  %v2556 = vsub.f32 %v2508, %v2539
  %v2557 = vsub.f32 %v2509, %v2541
  %v2558 = vmul.f32 %v2542, 1.442695
  %v2559 = vpow.pop %v2558
  %v2560 = vmul.f32 %v2543, 1.442695
  %v2561 = vpow.pop %v2560
  %v2562 = vmul.f32 %v2544, 1.442695
  %v2563 = vpow.pop %v2562
  %v2564 = vmul.f32 %v2545, 1.442695
  %v2565 = vpow.pop %v2564
  %v2566 = vmul.f32 %v2546, 1.442695
  %v2567 = vpow.pop %v2566
  %v2568 = vmul.f32 %v2547, 1.442695
  %v2569 = vpow.pop %v2568
  %v2570 = vmul.f32 %v2548, 1.442695
  %v2571 = vpow.pop %v2570
  %v2572 = vmul.f32 %v2549, 1.442695
  %v2573 = vpow.pop %v2572
  %v2574 = vmul.f32 %v2550, 1.442695
  %v2575 = vpow.pop %v2574
  %v2576 = vmul.f32 %v2551, 1.442695
  %v2577 = vpow.pop %v2576
  %v2578 = vmul.f32 %v2552, 1.442695
  %v2579 = vpow.pop %v2578
  %v2580 = vmul.f32 %v2553, 1.442695
  %v2581 = vpow.pop %v2580
  %v2582 = vmul.f32 %v2554, 1.442695
  %v2583 = vpow.pop %v2582
  %v2584 = vmul.f32 %v2555, 1.442695
  %v2585 = vpow.pop %v2584
  %v2586 = vmul.f32 %v2556, 1.442695
  %v2587 = vpow.pop %v2586
  %v2588 = vmul.f32 %v2557, 1.442695
  %v2589 = vpow.pop %v2588
  %2590 = vadd.xlane.f32.xlu0 %v2559
  %v2591 = vpop.xlane.xlu0 %2590
  %2592 = vadd.xlane.f32.xlu0 %v2561
  %v2593 = vpop.xlane.xlu0 %2592
  %2594 = vadd.xlane.f32.xlu0 %v2563
  %v2595 = vpop.xlane.xlu0 %2594
  %2596 = vadd.xlane.f32.xlu0 %v2565
  %v2597 = vpop.xlane.xlu0 %2596
  %2598 = vadd.xlane.f32.xlu0 %v2567
  %v2599 = vpop.xlane.xlu0 %2598
  %2600 = vadd.xlane.f32.xlu0 %v2569
  %v2601 = vpop.xlane.xlu0 %2600
  %2602 = vadd.xlane.f32.xlu0 %v2571
  %v2603 = vpop.xlane.xlu0 %2602
  %2604 = vadd.xlane.f32.xlu0 %v2573
  %v2605 = vpop.xlane.xlu0 %2604
  %2606 = vadd.xlane.f32.xlu0 %v2575
  %v2607 = vpop.xlane.xlu0 %2606
  %2608 = vadd.xlane.f32.xlu0 %v2577
  %v2609 = vpop.xlane.xlu0 %2608
  %2610 = vadd.xlane.f32.xlu0 %v2579
  %v2611 = vpop.xlane.xlu0 %2610
  %2612 = vadd.xlane.f32.xlu0 %v2581
  %v2613 = vpop.xlane.xlu0 %2612
  %2614 = vadd.xlane.f32.xlu0 %v2583
  %v2615 = vpop.xlane.xlu0 %2614
  %2616 = vadd.xlane.f32.xlu0 %v2585
  %v2617 = vpop.xlane.xlu0 %2616
  %2618 = vadd.xlane.f32.xlu0 %v2587
  %v2619 = vpop.xlane.xlu0 %2618
  %2620 = vadd.xlane.f32.xlu0 %v2589
  %v2621 = vpop.xlane.xlu0 %2620
  %v2622 = vpack.c.bf16 %v2561, %v2559
  %v2623 = vpack.c.bf16 %v2565, %v2563
  %v2624 = vpack.c.bf16 %v2569, %v2567
  %v2625 = vpack.c.bf16 %v2573, %v2571
  %v2626 = vpack.c.bf16 %v2577, %v2575
  %v2627 = vpack.c.bf16 %v2581, %v2579
  %v2628 = vpack.c.bf16 %v2585, %v2583
  %v2629 = vpack.c.bf16 %v2589, %v2587
  %v2630 = vld [vmem:[%s3] sm:$0xf]
  %v2631 = vld [vmem:[%s3 + $0x4] sm:$0xf]
  %v2632 = vld [vmem:[%s3 + $0x8] sm:$0xf]
  %v2633 = vld [vmem:[%s3 + $0xc] sm:$0xf]
  %v2634 = vld [vmem:[%s3 + $0x10] sm:$0xf]
  %v2635 = vld [vmem:[%s3 + $0x14] sm:$0xf]
  %v2636 = vld [vmem:[%s3 + $0x18] sm:$0xf]
  %v2637 = vld [vmem:[%s3 + $0x1c] sm:$0xf]
  %v2638 = vld [vmem:[%s3 + $0x20] sm:$0xf]
  %v2639 = vld [vmem:[%s3 + $0x24] sm:$0xf]
  %v2640 = vld [vmem:[%s3 + $0x28] sm:$0xf]
  %v2641 = vld [vmem:[%s3 + $0x2c] sm:$0xf]
  %v2642 = vld [vmem:[%s3 + $0x30] sm:$0xf]
  %v2643 = vld [vmem:[%s3 + $0x34] sm:$0xf]
  %v2644 = vld [vmem:[%s3 + $0x38] sm:$0xf]
  %v2645 = vld [vmem:[%s3 + $0x3c] sm:$0xf]
  %v2662 = vunpack.c.l.b16 %v2630
  %v2663 = vunpack.c.l.b16 %v2631
  %v2664 = vunpack.c.l.b16 %v2632
  %v2665 = vunpack.c.l.b16 %v2633
  %v2666 = vunpack.c.l.b16 %v2634
  %v2667 = vunpack.c.l.b16 %v2635
  %v2668 = vunpack.c.l.b16 %v2636
  %v2669 = vunpack.c.l.b16 %v2637
  %v2670 = vunpack.c.l.b16 %v2638
  %v2671 = vunpack.c.l.b16 %v2639
  %v2672 = vunpack.c.l.b16 %v2640
  %v2673 = vunpack.c.l.b16 %v2641
  %v2674 = vunpack.c.l.b16 %v2642
  %v2675 = vunpack.c.l.b16 %v2643
  %v2676 = vunpack.c.l.b16 %v2644
  %v2677 = vunpack.c.l.b16 %v2645
  %v2678 = vpack.c.b16 %v2663, %v2662
  %v2679 = vpack.c.b16 %v2665, %v2664
  %v2680 = vpack.c.b16 %v2667, %v2666
  %v2681 = vpack.c.b16 %v2669, %v2668
  %v2682 = vpack.c.b16 %v2671, %v2670
  %v2683 = vpack.c.b16 %v2673, %v2672
  %v2684 = vpack.c.b16 %v2675, %v2674
  %v2685 = vpack.c.b16 %v2677, %v2676
  %2686 = vrot.lane.b32.xlu0 %v2678, 104
  %v2687 = vpop.permute.xlu0 %2686
  %2688 = vrot.lane.b32.xlu0 %v2679, 104
  %v2689 = vpop.permute.xlu0 %2688
  %2690 = vrot.lane.b32.xlu0 %v2680, 104
  %v2691 = vpop.permute.xlu0 %2690
  %2692 = vrot.lane.b32.xlu0 %v2681, 104
  %v2693 = vpop.permute.xlu0 %2692
  %2694 = vrot.lane.b32.xlu0 %v2682, 104
  %v2695 = vpop.permute.xlu0 %2694
  %2696 = vrot.lane.b32.xlu0 %v2683, 104
  %v2697 = vpop.permute.xlu0 %2696
  %2698 = vrot.lane.b32.xlu0 %v2684, 104
  %v2699 = vpop.permute.xlu0 %2698
  %2700 = vrot.lane.b32.xlu0 %v2685, 104
  %v2701 = vpop.permute.xlu0 %2700
  %2710 = vmatprep.subr.bf16.mxu0 0
  %2711 = vmatpush1.bf16.msra.mxu0 %v2687
  %2712 = vmatprep.subr.bf16.mxu0 0
  %2713 = vmatpush1.bf16.msra.mxu0 %v2689
  %2714 = vmatprep.subr.bf16.mxu0 0
  %2715 = vmatpush1.bf16.msra.mxu0 %v2691
  %2716 = vmatprep.subr.bf16.mxu0 0
  %2717 = vmatpush1.bf16.msra.mxu0 %v2693
  %2718 = vmatprep.subr.bf16.mxu0 0
  %2719 = vmatpush1.bf16.msra.mxu0 %v2695
  %2720 = vmatprep.subr.bf16.mxu0 0
  %2721 = vmatpush1.bf16.msra.mxu0 %v2697
  %2722 = vmatprep.subr.bf16.mxu0 0
  %2723 = vmatpush1.bf16.msra.mxu0 %v2699
  %2724 = vmatprep.subr.bf16.mxu0 0
  %2725 = vmatpush1.bf16.msra.mxu0 %v2701
  %2726 = vmatprep.subr.bf16.mxu0 0
  %2727 = vmatpush1.bf16.msra.mxu0 0
  %2728 = vmatprep.subr.bf16.mxu0 0
  %2729 = vmatpush1.bf16.msra.mxu0 0
  %2730 = vmatprep.subr.bf16.mxu0 0
  %2731 = vmatpush1.bf16.msra.mxu0 0
  %2732 = vmatprep.subr.bf16.mxu0 0
  %2733 = vmatpush1.bf16.msra.mxu0 0
  %2734 = vmatprep.subr.bf16.mxu0 0
  %2735 = vmatpush1.bf16.msra.mxu0 0
  %2736 = vmatprep.subr.bf16.mxu0 0
  %2737 = vmatpush1.bf16.msra.mxu0 0
  %2738 = vmatprep.subr.bf16.mxu0 0
  %2739 = vmatpush1.bf16.msra.mxu0 0
  %2740 = vmatprep.subr.bf16.mxu0 0
  %2741 = vmatpush1.bf16.msra.mxu0 0
  %2742 = vmatprep.mubr.bf16.mxu0 0
  %2743 = vmatmul.mubr.bf16.gmra.mrb[0].mxu0 %v2622
  %v2744 = vpop.f32.mrb[0].mxu0
  %v2745 = vadd.f32 0.0, %v2744
  %v2746 = vpop.f32.mrb[0].mxu0
  %v2747 = vpop.f32.mrb[0].mxu0
  %v2748 = vadd.f32 0.0, %v2747
  %v2749 = vpop.f32.mrb[0].mxu0
  %2750 = vmatprep.mubr.bf16.mxu0 0
  %2751 = vmatmul.mubr.bf16.gmra.mrb[0].mxu0 %v2623
  %v2752 = vpop.f32.mrb[0].mxu0
  %v2753 = vadd.f32 0.0, %v2752
  %v2754 = vpop.f32.mrb[0].mxu0
  %v2755 = vpop.f32.mrb[0].mxu0
  %v2756 = vadd.f32 0.0, %v2755
  %v2757 = vpop.f32.mrb[0].mxu0
  %2758 = vmatprep.mubr.bf16.mxu0 0
  %2759 = vmatmul.mubr.bf16.gmra.mrb[0].mxu0 %v2624
  %v2760 = vpop.f32.mrb[0].mxu0
  %v2761 = vadd.f32 0.0, %v2760
  %v2762 = vpop.f32.mrb[0].mxu0
  %v2763 = vpop.f32.mrb[0].mxu0
  %v2764 = vadd.f32 0.0, %v2763
  %v2765 = vpop.f32.mrb[0].mxu0
  %2766 = vmatprep.mubr.bf16.mxu0 0
  %2767 = vmatmul.mubr.bf16.gmra.mrb[0].mxu0 %v2625
  %v2768 = vpop.f32.mrb[0].mxu0
  %v2769 = vadd.f32 0.0, %v2768
  %v2770 = vpop.f32.mrb[0].mxu0
  %v2771 = vpop.f32.mrb[0].mxu0
  %v2772 = vadd.f32 0.0, %v2771
  %v2773 = vpop.f32.mrb[0].mxu0
  %2774 = vmatprep.mubr.bf16.mxu0 0
  %2775 = vmatmul.mubr.bf16.gmra.mrb[0].mxu0 %v2626
  %v2776 = vpop.f32.mrb[0].mxu0
  %v2777 = vadd.f32 0.0, %v2776
  %v2778 = vpop.f32.mrb[0].mxu0
  %v2779 = vpop.f32.mrb[0].mxu0
  %v2780 = vadd.f32 0.0, %v2779
  %v2781 = vpop.f32.mrb[0].mxu0
  %2782 = vmatprep.mubr.bf16.mxu0 0
  %2783 = vmatmul.mubr.bf16.gmra.mrb[0].mxu0 %v2627
  %v2784 = vpop.f32.mrb[0].mxu0
  %v2785 = vadd.f32 0.0, %v2784
  %v2786 = vpop.f32.mrb[0].mxu0
  %v2787 = vpop.f32.mrb[0].mxu0
  %v2788 = vadd.f32 0.0, %v2787
  %v2789 = vpop.f32.mrb[0].mxu0
  %2790 = vmatprep.mubr.bf16.mxu0 0
  %2791 = vmatmul.mubr.bf16.gmra.mrb[0].mxu0 %v2628
  %v2792 = vpop.f32.mrb[0].mxu0
  %v2793 = vadd.f32 0.0, %v2792
  %v2794 = vpop.f32.mrb[0].mxu0
  %v2795 = vpop.f32.mrb[0].mxu0
  %v2796 = vadd.f32 0.0, %v2795
  %v2797 = vpop.f32.mrb[0].mxu0
  %2798 = vmatprep.mubr.bf16.mxu0 0
  %2799 = vmatmul.mubr.bf16.gmra.mrb[0].mxu0 %v2629
  %v2800 = vpop.f32.mrb[0].mxu0
  %v2801 = vadd.f32 0.0, %v2800
  %v2802 = vpop.f32.mrb[0].mxu0
  %v2803 = vpop.f32.mrb[0].mxu0
  %v2804 = vadd.f32 0.0, %v2803
  %v2805 = vpop.f32.mrb[0].mxu0
  %2806 = vdwg.mxu0
  %v2807 = vrcp.pop %v2591
  %v2808 = vmul.f32 %v2745, %v2807
  %v2809 = vrcp.pop %v2593
  %v2810 = vmul.f32 %v2748, %v2809
  %v2811 = vrcp.pop %v2595
  %v2812 = vmul.f32 %v2753, %v2811
  %v2813 = vrcp.pop %v2597
  %v2814 = vmul.f32 %v2756, %v2813
  %v2815 = vrcp.pop %v2599
  %v2816 = vmul.f32 %v2761, %v2815
  %v2817 = vrcp.pop %v2601
  %v2818 = vmul.f32 %v2764, %v2817
  %v2819 = vrcp.pop %v2603
  %v2820 = vmul.f32 %v2769, %v2819
  %v2821 = vrcp.pop %v2605
  %v2822 = vmul.f32 %v2772, %v2821
  %v2823 = vrcp.pop %v2607
  %v2824 = vmul.f32 %v2777, %v2823
  %v2825 = vrcp.pop %v2609
  %v2826 = vmul.f32 %v2780, %v2825
  %v2827 = vrcp.pop %v2611
  %v2828 = vmul.f32 %v2785, %v2827
  %v2829 = vrcp.pop %v2613
  %v2830 = vmul.f32 %v2788, %v2829
  %v2831 = vrcp.pop %v2615
  %v2832 = vmul.f32 %v2793, %v2831
  %v2833 = vrcp.pop %v2617
  %v2834 = vmul.f32 %v2796, %v2833
  %v2835 = vrcp.pop %v2619
  %v2836 = vmul.f32 %v2801, %v2835
  %v2837 = vrcp.pop %v2621
  %v2838 = vmul.f32 %v2804, %v2837
  %v2839 = vld [vmem:[%s4] sm:$0xff]
  %v2840 = vld [vmem:[%s4 + $0x8] sm:$0xff]
  %v2841 = vld [vmem:[%s4 + $0x10] sm:$0xff]
  %v2842 = vld [vmem:[%s4 + $0x18] sm:$0xff]
  %v2843 = vld [vmem:[%s4 + $0x20] sm:$0xff]
  %v2844 = vld [vmem:[%s4 + $0x28] sm:$0xff]
  %v2845 = vld [vmem:[%s4 + $0x30] sm:$0xff]
  %v2846 = vld [vmem:[%s4 + $0x38] sm:$0xff]
  %v2847 = vld [vmem:[%s4 + $0x40] sm:$0xff]
  %v2848 = vld [vmem:[%s4 + $0x48] sm:$0xff]
  %v2849 = vld [vmem:[%s4 + $0x50] sm:$0xff]
  %v2850 = vld [vmem:[%s4 + $0x58] sm:$0xff]
  %v2851 = vld [vmem:[%s4 + $0x60] sm:$0xff]
  %v2852 = vld [vmem:[%s4 + $0x68] sm:$0xff]
  %v2853 = vld [vmem:[%s4 + $0x70] sm:$0xff]
  %v2854 = vld [vmem:[%s4 + $0x78] sm:$0xff]
  %2871 = vrot.lane.b32.xlu0 %v2839, 104
  %v2872 = vpop.permute.xlu0 %2871
  %2873 = vrot.lane.b32.xlu0 %v2840, 104
  %v2874 = vpop.permute.xlu0 %2873
  %2875 = vrot.lane.b32.xlu0 %v2841, 104
  %v2876 = vpop.permute.xlu0 %2875
  %2877 = vrot.lane.b32.xlu0 %v2842, 104
  %v2878 = vpop.permute.xlu0 %2877
  %2879 = vrot.lane.b32.xlu0 %v2843, 104
  %v2880 = vpop.permute.xlu0 %2879
  %2881 = vrot.lane.b32.xlu0 %v2844, 104
  %v2882 = vpop.permute.xlu0 %2881
  %2883 = vrot.lane.b32.xlu0 %v2845, 104
  %v2884 = vpop.permute.xlu0 %2883
  %2885 = vrot.lane.b32.xlu0 %v2846, 104
  %v2886 = vpop.permute.xlu0 %2885
  %2887 = vrot.lane.b32.xlu0 %v2847, 104
  %v2888 = vpop.permute.xlu0 %2887
  %2889 = vrot.lane.b32.xlu0 %v2848, 104
  %v2890 = vpop.permute.xlu0 %2889
  %2891 = vrot.lane.b32.xlu0 %v2849, 104
  %v2892 = vpop.permute.xlu0 %2891
  %2893 = vrot.lane.b32.xlu0 %v2850, 104
  %v2894 = vpop.permute.xlu0 %2893
  %2895 = vrot.lane.b32.xlu0 %v2851, 104
  %v2896 = vpop.permute.xlu0 %2895
  %2897 = vrot.lane.b32.xlu0 %v2852, 104
  %v2898 = vpop.permute.xlu0 %2897
  %2899 = vrot.lane.b32.xlu0 %v2853, 104
  %v2900 = vpop.permute.xlu0 %2899
  %2901 = vrot.lane.b32.xlu0 %v2854, 104
  %v2902 = vpop.permute.xlu0 %2901
  %v2919 = vadd.f32 %v2808, %v2872
  %v2920 = vadd.f32 %v2810, %v2874
  %v2921 = vadd.f32 %v2812, %v2876
  %v2922 = vadd.f32 %v2814, %v2878
  %v2923 = vadd.f32 %v2816, %v2880
  %v2924 = vadd.f32 %v2818, %v2882
  %v2925 = vadd.f32 %v2820, %v2884
  %v2926 = vadd.f32 %v2822, %v2886
  %v2927 = vadd.f32 %v2824, %v2888
  %v2928 = vadd.f32 %v2826, %v2890
  %v2929 = vadd.f32 %v2828, %v2892
  %v2930 = vadd.f32 %v2830, %v2894
  %v2931 = vadd.f32 %v2832, %v2896
  %v2932 = vadd.f32 %v2834, %v2898
  %v2933 = vadd.f32 %v2836, %v2900
  %v2934 = vadd.f32 %v2838, %v2902
  %v2935 = vld [vmem:[%s5] sm:$0x1]
  %v2937 = vlaneseq
  %v2938 = vshrl.u32 %v2937, 7
  %v2939 = vsub.s32 0, %v2938
  %v2940 = vrot.slane %v2935, %v2939
  %2941 = vrot.lane.b32.xlu0 %v2940, 104
  %v2942 = vpop.permute.xlu0 %2941
  %v2944 = vadd.f32 %v2919, %v2942
  %v2945 = vadd.f32 %v2920, %v2942
  %v2946 = vadd.f32 %v2921, %v2942
  %v2947 = vadd.f32 %v2922, %v2942
  %v2948 = vadd.f32 %v2923, %v2942
  %v2949 = vadd.f32 %v2924, %v2942
  %v2950 = vadd.f32 %v2925, %v2942
  %v2951 = vadd.f32 %v2926, %v2942
  %v2952 = vadd.f32 %v2927, %v2942
  %v2953 = vadd.f32 %v2928, %v2942
  %v2954 = vadd.f32 %v2929, %v2942
  %v2955 = vadd.f32 %v2930, %v2942
  %v2956 = vadd.f32 %v2931, %v2942
  %v2957 = vadd.f32 %v2932, %v2942
  %v2958 = vadd.f32 %v2933, %v2942
  %v2959 = vadd.f32 %v2934, %v2942
  %vm2960 = vcmp.gt.f32.partialorder %v2944, 0.0
  %vm2961 = vcmp.gt.f32.partialorder %v2945, 0.0
  %vm2962 = vcmp.gt.f32.partialorder %v2946, 0.0
  %vm2963 = vcmp.gt.f32.partialorder %v2947, 0.0
  %vm2964 = vcmp.gt.f32.partialorder %v2948, 0.0
  %vm2965 = vcmp.gt.f32.partialorder %v2949, 0.0
  %vm2966 = vcmp.gt.f32.partialorder %v2950, 0.0
  %vm2967 = vcmp.gt.f32.partialorder %v2951, 0.0
  %vm2968 = vcmp.gt.f32.partialorder %v2952, 0.0
  %vm2969 = vcmp.gt.f32.partialorder %v2953, 0.0
  %vm2970 = vcmp.gt.f32.partialorder %v2954, 0.0
  %vm2971 = vcmp.gt.f32.partialorder %v2955, 0.0
  %vm2972 = vcmp.gt.f32.partialorder %v2956, 0.0
  %vm2973 = vcmp.gt.f32.partialorder %v2957, 0.0
  %vm2974 = vcmp.gt.f32.partialorder %v2958, 0.0
  %vm2975 = vcmp.gt.f32.partialorder %v2959, 0.0
  %v2976 = vmin.f32 %v2944, 0.0
  %v2977 = vmin.f32 %v2945, 0.0
  %v2978 = vmin.f32 %v2946, 0.0
  %v2979 = vmin.f32 %v2947, 0.0
  %v2980 = vmin.f32 %v2948, 0.0
  %v2981 = vmin.f32 %v2949, 0.0
  %v2982 = vmin.f32 %v2950, 0.0
  %v2983 = vmin.f32 %v2951, 0.0
  %v2984 = vmin.f32 %v2952, 0.0
  %v2985 = vmin.f32 %v2953, 0.0
  %v2986 = vmin.f32 %v2954, 0.0
  %v2987 = vmin.f32 %v2955, 0.0
  %v2988 = vmin.f32 %v2956, 0.0
  %v2989 = vmin.f32 %v2957, 0.0
  %v2990 = vmin.f32 %v2958, 0.0
  %v2991 = vmin.f32 %v2959, 0.0
  %v2992 = vmul.f32 %v2976, 1.442695
  %v2993 = vpow.pop %v2992
  %v2994 = vmul.f32 %v2977, 1.442695
  %v2995 = vpow.pop %v2994
  %v2996 = vmul.f32 %v2978, 1.442695
  %v2997 = vpow.pop %v2996
  %v2998 = vmul.f32 %v2979, 1.442695
  %v2999 = vpow.pop %v2998
  %v3000 = vmul.f32 %v2980, 1.442695
  %v3001 = vpow.pop %v3000
  %v3002 = vmul.f32 %v2981, 1.442695
  %v3003 = vpow.pop %v3002
  %v3004 = vmul.f32 %v2982, 1.442695
  %v3005 = vpow.pop %v3004
  %v3006 = vmul.f32 %v2983, 1.442695
  %v3007 = vpow.pop %v3006
  %v3008 = vmul.f32 %v2984, 1.442695
  %v3009 = vpow.pop %v3008
  %v3010 = vmul.f32 %v2985, 1.442695
  %v3011 = vpow.pop %v3010
  %v3012 = vmul.f32 %v2986, 1.442695
  %v3013 = vpow.pop %v3012
  %v3014 = vmul.f32 %v2987, 1.442695
  %v3015 = vpow.pop %v3014
  %v3016 = vmul.f32 %v2988, 1.442695
  %v3017 = vpow.pop %v3016
  %v3018 = vmul.f32 %v2989, 1.442695
  %v3019 = vpow.pop %v3018
  %v3020 = vmul.f32 %v2990, 1.442695
  %v3021 = vpow.pop %v3020
  %v3022 = vmul.f32 %v2991, 1.442695
  %v3023 = vpow.pop %v3022
  %v3024 = vsub.f32 %v2993, 1.0
  %v3025 = vsub.f32 %v2995, 1.0
  %v3026 = vsub.f32 %v2997, 1.0
  %v3027 = vsub.f32 %v2999, 1.0
  %v3028 = vsub.f32 %v3001, 1.0
  %v3029 = vsub.f32 %v3003, 1.0
  %v3030 = vsub.f32 %v3005, 1.0
  %v3031 = vsub.f32 %v3007, 1.0
  %v3032 = vsub.f32 %v3009, 1.0
  %v3033 = vsub.f32 %v3011, 1.0
  %v3034 = vsub.f32 %v3013, 1.0
  %v3035 = vsub.f32 %v3015, 1.0
  %v3036 = vsub.f32 %v3017, 1.0
  %v3037 = vsub.f32 %v3019, 1.0
  %v3038 = vsub.f32 %v3021, 1.0
  %v3039 = vsub.f32 %v3023, 1.0
  %v3040 = vsel %vm2960, %v2944, %v3024
  %v3041 = vsel %vm2961, %v2945, %v3025
  %v3042 = vsel %vm2962, %v2946, %v3026
  %v3043 = vsel %vm2963, %v2947, %v3027
  %v3044 = vsel %vm2964, %v2948, %v3028
  %v3045 = vsel %vm2965, %v2949, %v3029
  %v3046 = vsel %vm2966, %v2950, %v3030
  %v3047 = vsel %vm2967, %v2951, %v3031
  %v3048 = vsel %vm2968, %v2952, %v3032
  %v3049 = vsel %vm2969, %v2953, %v3033
  %v3050 = vsel %vm2970, %v2954, %v3034
  %v3051 = vsel %vm2971, %v2955, %v3035
  %v3052 = vsel %vm2972, %v2956, %v3036
  %v3053 = vsel %vm2973, %v2957, %v3037
  %v3054 = vsel %vm2974, %v2958, %v3038
  %v3055 = vsel %vm2975, %v2959, %v3039
  %3072 = vrot.lane.b32.xlu0 %v3040, 24
  %v3073 = vpop.permute.xlu0 %3072
  %3074 = vrot.lane.b32.xlu0 %v3041, 24
  %v3075 = vpop.permute.xlu0 %3074
  %3076 = vrot.lane.b32.xlu0 %v3042, 24
  %v3077 = vpop.permute.xlu0 %3076
  %3078 = vrot.lane.b32.xlu0 %v3043, 24
  %v3079 = vpop.permute.xlu0 %3078
  %3080 = vrot.lane.b32.xlu0 %v3044, 24
  %v3081 = vpop.permute.xlu0 %3080
  %3082 = vrot.lane.b32.xlu0 %v3045, 24
  %v3083 = vpop.permute.xlu0 %3082
  %3084 = vrot.lane.b32.xlu0 %v3046, 24
  %v3085 = vpop.permute.xlu0 %3084
  %3086 = vrot.lane.b32.xlu0 %v3047, 24
  %v3087 = vpop.permute.xlu0 %3086
  %3088 = vrot.lane.b32.xlu0 %v3048, 24
  %v3089 = vpop.permute.xlu0 %3088
  %3090 = vrot.lane.b32.xlu0 %v3049, 24
  %v3091 = vpop.permute.xlu0 %3090
  %3092 = vrot.lane.b32.xlu0 %v3050, 24
  %v3093 = vpop.permute.xlu0 %3092
  %3094 = vrot.lane.b32.xlu0 %v3051, 24
  %v3095 = vpop.permute.xlu0 %3094
  %3096 = vrot.lane.b32.xlu0 %v3052, 24
  %v3097 = vpop.permute.xlu0 %3096
  %3098 = vrot.lane.b32.xlu0 %v3053, 24
  %v3099 = vpop.permute.xlu0 %3098
  %3100 = vrot.lane.b32.xlu0 %v3054, 24
  %v3101 = vpop.permute.xlu0 %3100
  %3102 = vrot.lane.b32.xlu0 %v3055, 24
  %v3103 = vpop.permute.xlu0 %3102
  %vm3120 = vcmask 261312
  %3121 = vst.msk [vmem:[%s6] sm:$0xff] %vm3120, %v3073
  %3122 = vst.msk [vmem:[%s6 + $0x8] sm:$0xff] %vm3120, %v3075
  %3123 = vst.msk [vmem:[%s6 + $0x10] sm:$0xff] %vm3120, %v3077
  %3124 = vst.msk [vmem:[%s6 + $0x18] sm:$0xff] %vm3120, %v3079
  %3125 = vst.msk [vmem:[%s6 + $0x20] sm:$0xff] %vm3120, %v3081
  %3126 = vst.msk [vmem:[%s6 + $0x28] sm:$0xff] %vm3120, %v3083
  %3127 = vst.msk [vmem:[%s6 + $0x30] sm:$0xff] %vm3120, %v3085
  %3128 = vst.msk [vmem:[%s6 + $0x38] sm:$0xff] %vm3120, %v3087
  %3129 = vst.msk [vmem:[%s6 + $0x40] sm:$0xff] %vm3120, %v3089
  %3130 = vst.msk [vmem:[%s6 + $0x48] sm:$0xff] %vm3120, %v3091
  %3131 = vst.msk [vmem:[%s6 + $0x50] sm:$0xff] %vm3120, %v3093
  %3132 = vst.msk [vmem:[%s6 + $0x58] sm:$0xff] %vm3120, %v3095
  %3133 = vst.msk [vmem:[%s6 + $0x60] sm:$0xff] %vm3120, %v3097
  %3134 = vst.msk [vmem:[%s6 + $0x68] sm:$0xff] %vm3120, %v3099
  %3135 = vst.msk [vmem:[%s6 + $0x70] sm:$0xff] %vm3120, %v3101
  %3136 = vst.msk [vmem:[%s6 + $0x78] sm:$0xff] %vm3120, %v3103
  // Predicated region
  $region26: #{gat_layer_forward.3} parent=0 // pred_check
    _
  $region27: #{gat_layer_forward.3} parent=0 // pred_check_branch
    %3138 = sbr.rel (0) target = $region29
  $region28: #{gat_layer_forward.3} parent=0 // pred_region
    _
  $region29: #{gat_layer_forward.3} parent=0 // pred_fallthru
    _
  // Predicated region
  $region30: #{gat_layer_forward.3} parent=0 // pred_check
    _
  $region31: #{gat_layer_forward.3} parent=0 // pred_check_branch
    %3140 = sbr.rel (0) target = $region33
  $region32: #{gat_layer_forward.3} parent=0 // pred_region
    _
  $region33: #{gat_layer_forward.3} parent=0 // pred_fallthru
    _

</llo_original>
